<compile_context>
chip_gen: v7x
topology: tpu7x:2x2x1
jax: 0.10.0
libtpu: 0.0.40
codegen_flags: <defaults>
</compile_context>

<pallas_src>
import jax
import jax.numpy as jnp
from jax.experimental import pallas as pl
from jax.experimental.pallas import tpu as pltpu

NEG_SLOPE = 0.01            # nn.LeakyReLU default
BN_EPS = 1e-5               # nn.BatchNorm2d default
LANES = 128                 # TPU lane width: channels padded to a multiple of this
STATS_TM = 256              # rows per grid step of the BN-stats reduction kernel
VMEM_LIMIT = 32 * 1024 * 1024


def _round_up(x, m):
    return (x + m - 1) // m * m


# ----------------------------------------------------------------------------
# Kernel 1: tiled per-channel sum / sum-of-squares (BatchNorm batch stats).
# grid=(M/TM,), reduction axis "arbitrary"; (2, C) accumulator in VMEM scratch.
# ----------------------------------------------------------------------------
def _bn_stats_kernel(x_ref, o_ref, acc_ref):
    @pl.when(pl.program_id(0) == 0)
    def _():
        acc_ref[...] = jnp.zeros_like(acc_ref)

    x = x_ref[...]
    s = jnp.sum(x, axis=0, keepdims=True)
    sq = jnp.sum(x * x, axis=0, keepdims=True)
    acc_ref[...] += jnp.concatenate([s, sq], axis=0)
    o_ref[...] = acc_ref[...]


def bn_batch_stats(x_nhwc):
    """Per-channel (mean, rsqrt(var + eps)) over N*H*W (train-mode BatchNorm)."""
    n, h, w, c = x_nhwc.shape
    m = n * h * w
    xf = x_nhwc.reshape(m, c)
    mp = _round_up(m, STATS_TM)
    if mp != m:
        xf = jnp.pad(xf, ((0, mp - m), (0, 0)))      # zero rows: no effect on sums

    sums = pl.pallas_call(
        _bn_stats_kernel,
        out_shape=jax.ShapeDtypeStruct((2, c), jnp.float32),
        grid_spec=pltpu.PrefetchScalarGridSpec(
            num_scalar_prefetch=0,
            grid=(mp // STATS_TM,),
            in_specs=[pl.BlockSpec((STATS_TM, c), lambda i: (i, 0))],
            out_specs=pl.BlockSpec((2, c), lambda i: (0, 0)),
            scratch_shapes=[pltpu.VMEM((2, c), jnp.float32)],
        ),
        compiler_params=pltpu.CompilerParams(
            dimension_semantics=("arbitrary",),
            vmem_limit_bytes=VMEM_LIMIT),
    )(xf)

    mean = sums[0:1, :] / m
    var = sums[1:2, :] / m - mean * mean             # biased batch var (PyTorch train)
    inv = jax.lax.rsqrt(var + BN_EPS)
    return mean, inv


# ----------------------------------------------------------------------------
# Kernel 2: fused  LeakyReLU(BN(x)) -> 3x3 conv (pad=1, stride=1)
#                  [+ 1x1-conv shortcut] [+ residual]     over one output row.
# grid = (N, H); the 3 padded input rows (halo) arrive as 3 row-offset views of
# the same spatially padded HBM array; weights/stats/bias are VMEM-resident.
# ----------------------------------------------------------------------------
def _make_fused_conv_kernel(h_img, w_img, has_shortcut, has_residual):
    def kernel(*refs):
        x0_ref, x1_ref, x2_ref = refs[0:3]
        mean_ref, inv_ref, gamma_ref, beta_ref, w_ref, b_ref = refs[3:9]
        pos = 9
        if has_shortcut:
            xs_ref, scw_ref, scb_ref = refs[pos:pos + 3]
            pos += 3
        if has_residual:
            res_ref = refs[pos]
            pos += 1
        o_ref = refs[pos]

        h = pl.program_id(1)
        scale = inv_ref[...] * gamma_ref[...]              # (1, Ci)
        shift = beta_ref[...] - mean_ref[...] * scale      # (1, Ci)

        rows = []
        for dy, xr in enumerate((x0_ref, x1_ref, x2_ref)):
            a = xr[...] * scale + shift                    # BN apply, (W+2, Ci)
            a = jnp.where(a >= 0.0, a, NEG_SLOPE * a)      # LeakyReLU
            # Zero the conv's zero-padding positions (spatial pad was applied to
            # the *raw* input before BN, so the border must be masked back to 0).
            hp = h + dy                                    # padded-row index
            row_ok = jnp.logical_and(hp >= 1, hp <= h_img)
            col = jax.lax.broadcasted_iota(jnp.int32, a.shape, 0)
            col_ok = jnp.logical_and(col >= 1, col <= w_img)
            rows.append(jnp.where(jnp.logical_and(row_ok, col_ok), a, 0.0))

        # (W, 9*Ci) patch slab -> one wide MXU matmul (K = 9*Ci, N = Co).
        patches = jnp.concatenate(
            [rows[dy][dx:dx + w_img, :] for dy in range(3) for dx in range(3)],
            axis=-1)
        acc = jnp.dot(patches, w_ref[...], preferred_element_type=jnp.float32)
        acc = acc + b_ref[...]
        if has_shortcut:
            acc = acc + jnp.dot(xs_ref[...], scw_ref[...],
                                preferred_element_type=jnp.float32) + scb_ref[...]
        if has_residual:
            acc = acc + res_ref[...]
        o_ref[...] = acc.astype(o_ref.dtype)

    return kernel


def fused_bn_lrelu_conv3x3(x, mean, inv, gamma, beta, w_flat, bias,
                           shortcut=None, residual=None):
    """conv3x3(LeakyReLU(BN(x))) + bias [+ 1x1 shortcut(xs)] [+ residual]."""
    n, h, w, ci = x.shape
    co = w_flat.shape[-1]
    xp = jnp.pad(x, ((0, 0), (1, 1), (1, 1), (0, 0)))      # spatial zero pad only

    def row_spec(dy):
        def imap(nn, hh):
            return (nn, hh + dy, 0, 0)
        return pl.BlockSpec((None, None, w + 2, ci), imap)

    def vec_spec(c):
        return pl.BlockSpec((1, c), lambda nn, hh: (0, 0))

    in_specs = [row_spec(0), row_spec(1), row_spec(2),
                vec_spec(ci), vec_spec(ci), vec_spec(ci), vec_spec(ci),
                pl.BlockSpec((9 * ci, co), lambda nn, hh: (0, 0)),   # resident W
                vec_spec(co)]
    inputs = [xp, xp, xp,
              mean.reshape(1, ci), inv.reshape(1, ci),
              gamma.reshape(1, ci), beta.reshape(1, ci),
              w_flat, bias.reshape(1, co)]

    if shortcut is not None:
        xs, scw, scb = shortcut
        cs = scw.shape[0]
        in_specs += [pl.BlockSpec((None, None, w, cs), lambda nn, hh: (nn, hh, 0, 0)),
                     pl.BlockSpec((cs, co), lambda nn, hh: (0, 0)),
                     vec_spec(co)]
        inputs += [xs, scw, scb.reshape(1, co)]
    if residual is not None:
        in_specs += [pl.BlockSpec((None, None, w, co), lambda nn, hh: (nn, hh, 0, 0))]
        inputs += [residual]

    kernel = _make_fused_conv_kernel(h, w, shortcut is not None, residual is not None)

    return pl.pallas_call(
        kernel,
        out_shape=jax.ShapeDtypeStruct((n, h, w, co), jnp.float32),
        grid_spec=pltpu.PrefetchScalarGridSpec(
            num_scalar_prefetch=0,
            grid=(n, h),
            in_specs=in_specs,
            out_specs=pl.BlockSpec((None, None, w, co),
                                   lambda nn, hh: (nn, hh, 0, 0)),
        ),
        compiler_params=pltpu.CompilerParams(
            dimension_semantics=("parallel", "parallel"),
            vmem_limit_bytes=VMEM_LIMIT),
    )(*inputs)


# ----------------------------------------------------------------------------
# Parameter padding glue (channels -> multiple of 128; padded slots stay 0).
# ----------------------------------------------------------------------------
def _pad_vec(v, n):
    return jnp.pad(v, (0, n - v.shape[0])).reshape(1, n).astype(jnp.float32)


def _pad_w3x3(w, ci_p, co_p):            # (3, 3, ci, co) -> (9*ci_p, co_p)
    kh, kw, ci, co = w.shape
    wp = jnp.pad(w, ((0, 0), (0, 0), (0, ci_p - ci), (0, co_p - co)))
    return wp.reshape(kh * kw * ci_p, co_p).astype(jnp.float32)


def _pad_w1x1(w, ci_p, co_p):            # (1, 1, ci, co) -> (ci_p, co_p)
    _, _, ci, co = w.shape
    wp = jnp.pad(w, ((0, 0), (0, 0), (0, ci_p - ci), (0, co_p - co)))
    return wp.reshape(ci_p, co_p).astype(jnp.float32)


# ----------------------------------------------------------------------------
# PreActBNResBlock4 forward (strides=1, first=False, in_ch != out_ch).
# ----------------------------------------------------------------------------
def preact_bn_resblock4_forward(x_nchw, params):
    n, cin, h, w = x_nchw.shape
    cout = params["conv1_1_b"].shape[0]
    cpi = _round_up(cin, LANES)
    cpo = _round_up(cout, LANES)

    # NHWC, channel-padded to the lane width (padded channels remain exactly 0
    # through every stage: zero weight columns / zero bias / zero beta).
    x = jnp.transpose(x_nchw, (0, 2, 3, 1)).astype(jnp.float32)
    x = jnp.pad(x, ((0, 0), (0, 0), (0, 0), (0, cpi - cin)))

    # ---- block1: BN -> LReLU -> conv3x3 -> BN -> LReLU -> conv3x3 ----------
    m1, inv1 = bn_batch_stats(x)
    y1 = fused_bn_lrelu_conv3x3(
        x, m1, inv1,
        _pad_vec(params["bn1_1_g"], cpi), _pad_vec(params["bn1_1_b"], cpi),
        _pad_w3x3(params["conv1_1_w"], cpi, cpo), _pad_vec(params["conv1_1_b"], cpo))

    m2, inv2 = bn_batch_stats(y1)
    # x2 = conv1_2(LReLU(BN(y1))) + bias + shortcut(x)  (1x1 conv fused in-kernel)
    x2 = fused_bn_lrelu_conv3x3(
        y1, m2, inv2,
        _pad_vec(params["bn1_2_g"], cpo), _pad_vec(params["bn1_2_b"], cpo),
        _pad_w3x3(params["conv1_2_w"], cpo, cpo), _pad_vec(params["conv1_2_b"], cpo),
        shortcut=(x, _pad_w1x1(params["sc_w"], cpi, cpo),
                  _pad_vec(params["sc_b"], cpo)))

    # ---- block2: BN -> LReLU -> conv3x3 -> BN -> LReLU -> conv3x3, + x2 ----
    m3, inv3 = bn_batch_stats(x2)
    y2 = fused_bn_lrelu_conv3x3(
        x2, m3, inv3,
        _pad_vec(params["bn2_1_g"], cpo), _pad_vec(params["bn2_1_b"], cpo),
        _pad_w3x3(params["conv2_1_w"], cpo, cpo), _pad_vec(params["conv2_1_b"], cpo))

    m4, inv4 = bn_batch_stats(y2)
    out = fused_bn_lrelu_conv3x3(
        y2, m4, inv4,
        _pad_vec(params["bn2_2_g"], cpo), _pad_vec(params["bn2_2_b"], cpo),
        _pad_w3x3(params["conv2_2_w"], cpo, cpo), _pad_vec(params["conv2_2_b"], cpo),
        residual=x2)

    out = out[..., :cout]
    return jnp.transpose(out, (0, 3, 1, 2))


# ----------------------------------------------------------------------------
# Deterministic synthetic parameters (shapes from __init__; HWIO conv weights).
# ----------------------------------------------------------------------------
def make_params(key, in_ch, out_ch):
    ks = jax.random.split(key, 14)

    def conv_w(k, kh, kw, ci, co):
        return 0.1 * jax.random.normal(k, (kh, kw, ci, co), jnp.float32)

    def bias(k, co):
        return 0.05 * jax.random.normal(k, (co,), jnp.float32)

    def bn_g(k, c):
        return 1.0 + 0.1 * jax.random.normal(k, (c,), jnp.float32)

    def bn_b(k, c):
        return 0.1 * jax.random.normal(k, (c,), jnp.float32)

    return {
        "bn1_1_g": bn_g(ks[10], in_ch), "bn1_1_b": bn_b(ks[11], in_ch),
        "conv1_1_w": conv_w(ks[0], 3, 3, in_ch, out_ch), "conv1_1_b": bias(ks[1], out_ch),
        "bn1_2_g": bn_g(ks[12], out_ch), "bn1_2_b": bn_b(ks[13], out_ch),
        "conv1_2_w": conv_w(ks[2], 3, 3, out_ch, out_ch), "conv1_2_b": bias(ks[3], out_ch),
        "sc_w": conv_w(ks[4], 1, 1, in_ch, out_ch), "sc_b": bias(ks[5], out_ch),
        "bn2_1_g": bn_g(ks[6], out_ch), "bn2_1_b": bn_b(ks[7], out_ch),
        "conv2_1_w": conv_w(ks[6], 3, 3, out_ch, out_ch), "conv2_1_b": bias(ks[7], out_ch),
        "bn2_2_g": bn_g(ks[8], out_ch), "bn2_2_b": bn_b(ks[9], out_ch),
        "conv2_2_w": conv_w(ks[8], 3, 3, out_ch, out_ch), "conv2_2_b": bias(ks[9], out_ch),
    }


# ----------------------------------------------------------------------------
# Pure-JAX reference (train-mode BN, LeakyReLU(0.01), 3x3/1x1 convs), NCHW.
# ----------------------------------------------------------------------------
def _reference_forward(x, p):
    def bn(t, g, b):
        mu = jnp.mean(t, axis=(0, 2, 3), keepdims=True)
        var = jnp.var(t, axis=(0, 2, 3), keepdims=True)
        return ((t - mu) * jax.lax.rsqrt(var + BN_EPS)
                * g.reshape(1, -1, 1, 1) + b.reshape(1, -1, 1, 1))

    def lrelu(t):
        return jnp.where(t >= 0, t, NEG_SLOPE * t)

    def conv(t, w, b, pad):
        y = jax.lax.conv_general_dilated(
            t, w, window_strides=(1, 1), padding=pad,
            dimension_numbers=("NCHW", "HWIO", "NCHW"))
        return y + b.reshape(1, -1, 1, 1)

    a = conv(lrelu(bn(x, p["bn1_1_g"], p["bn1_1_b"])),
             p["conv1_1_w"], p["conv1_1_b"], "SAME")
    out1 = conv(lrelu(bn(a, p["bn1_2_g"], p["bn1_2_b"])),
                p["conv1_2_w"], p["conv1_2_b"], "SAME")
    res1 = conv(x, p["sc_w"], p["sc_b"], "VALID")
    x2 = out1 + res1
    a = conv(lrelu(bn(x2, p["bn2_1_g"], p["bn2_1_b"])),
             p["conv2_1_w"], p["conv2_1_b"], "SAME")
    out2 = conv(lrelu(bn(a, p["bn2_2_g"], p["bn2_2_b"])),
                p["conv2_2_w"], p["conv2_2_b"], "SAME")
    return out2 + x2


if __name__ == "__main__":
    key = jax.random.PRNGKey(0)
    k_param, k_x = jax.random.split(key)

    in_ch, out_ch = 4, 8
    n, h, w = 2, 16, 16

    params = make_params(k_param, in_ch, out_ch)
    x = jax.random.normal(k_x, (n, in_ch, h, w), jnp.float32)   # NCHW, like PyTorch

    fwd = jax.jit(preact_bn_resblock4_forward)
    out = jax.block_until_ready(fwd(x, params))

    assert out.shape == (n, out_ch, h, w), out.shape
    assert bool(jnp.all(jnp.isfinite(out)))

    # Cross-check against the pure-JAX reference (loose tolerance: both paths use
    # the TPU's default reduced-precision f32 matmul/conv).
    ref = _reference_forward(x, params)
    assert bool(jnp.allclose(out, ref, atol=5e-2, rtol=5e-2)), \
        float(jnp.max(jnp.abs(out - ref)))

    print("KERNEL_OK")
</pallas_src>

<mosaic_0001>
module attributes {stable_mosaic.version = 11 : i64} {
  func.func @_bn_stats_kernel(%arg0: i32, %arg1: memref<256x128xf32, #tpu.memory_space<vmem>>, %arg2: memref<2x128xf32, #tpu.memory_space<vmem>>, %arg3: memref<2x128xf32, #tpu.memory_space<vmem>>) attributes {dimension_semantics = [#tpu.dimension_semantics<arbitrary>], iteration_bounds = array<i64: 2>, scalar_prefetch = 0 : i64, scratch_operands = 1 : i64, tpu.core_type = #tpu.core_type<tc>, window_params = [{transform_indices = @transform_0, window_bounds = array<i64: 256, 128>}, {pipeline_mode = #tpu.pipeline_mode<synchronous>, transform_indices = @transform_1, window_bounds = array<i64: 2, 128>}]} {
    %c0_i32 = arith.constant 0 : i32
    %0 = arith.cmpi eq, %arg0, %c0_i32 : i32
    %1 = arith.extui %0 : i1 to i32
    %c0_i32_0 = arith.constant 0 : i32
    %2 = arith.cmpi ne, %1, %c0_i32_0 : i32
    scf.if %2 {
      %cst_11 = arith.constant 0.000000e+00 : f32
      %15 = vector.broadcast %cst_11 : f32 to vector<2x128xf32>
      %c0_12 = arith.constant 0 : index
      %c0_13 = arith.constant 0 : index
      %16 = vector.load %arg3[%c0_12, %c0_13] : memref<2x128xf32, #tpu.memory_space<vmem>>, vector<2x128xf32>
      tpu.vector_store %arg3[%c0_12, %c0_13], %15 {strides = array<i32>} : memref<2x128xf32, #tpu.memory_space<vmem>>, vector<2x128xf32>,
    } else {
    }
    %c0 = arith.constant 0 : index
    %c0_1 = arith.constant 0 : index
    %3 = vector.load %arg1[%c0, %c0_1] : memref<256x128xf32, #tpu.memory_space<vmem>>, vector<256x128xf32>
    %cst = arith.constant dense<0.000000e+00> : vector<128xf32>
    %4 = vector.multi_reduction <add>, %3, %cst [0] : vector<256x128xf32> to vector<128xf32>
    %5 = vector.shape_cast %4 : vector<128xf32> to vector<1x128xf32>
    %6 = arith.mulf %3, %3 : vector<256x128xf32>
    %cst_2 = arith.constant dense<0.000000e+00> : vector<128xf32>
    %7 = vector.multi_reduction <add>, %6, %cst_2 [0] : vector<256x128xf32> to vector<128xf32>
    %8 = vector.shape_cast %7 : vector<128xf32> to vector<1x128xf32>
    %c0_3 = arith.constant 0 : index
    %c0_4 = arith.constant 0 : index
    %9 = vector.load %arg3[%c0_3, %c0_4] : memref<2x128xf32, #tpu.memory_space<vmem>>, vector<2x128xf32>
    %10 = tpu.concatenate %5, %8 in 0 : vector<1x128xf32>, vector<1x128xf32> -> vector<2x128xf32>
    %11 = arith.addf %9, %10 : vector<2x128xf32>
    %c0_5 = arith.constant 0 : index
    %c0_6 = arith.constant 0 : index
    %12 = vector.load %arg3[%c0_5, %c0_6] : memref<2x128xf32, #tpu.memory_space<vmem>>, vector<2x128xf32>
    tpu.vector_store %arg3[%c0_5, %c0_6], %11 {strides = array<i32>} : memref<2x128xf32, #tpu.memory_space<vmem>>, vector<2x128xf32>,
    %c0_7 = arith.constant 0 : index
    %c0_8 = arith.constant 0 : index
    %13 = vector.load %arg3[%c0_7, %c0_8] : memref<2x128xf32, #tpu.memory_space<vmem>>, vector<2x128xf32>
    %c0_9 = arith.constant 0 : index
    %c0_10 = arith.constant 0 : index
    %14 = vector.load %arg2[%c0_9, %c0_10] : memref<2x128xf32, #tpu.memory_space<vmem>>, vector<2x128xf32>
    tpu.vector_store %arg2[%c0_9, %c0_10], %13 {strides = array<i32>} : memref<2x128xf32, #tpu.memory_space<vmem>>, vector<2x128xf32>,
    return
  }
  func.func @transform_0(%arg0: i32) -> (i32, i32) {
    %c0_i32 = arith.constant 0 : i32
    %c0_i32_0 = arith.constant 0 : i32
    return %arg0, %c0_i32 : i32, i32
  }
  func.func @transform_1(%arg0: i32) -> (i32, i32) {
    %c0_i32 = arith.constant 0 : i32
    %c0_i32_0 = arith.constant 0 : i32
    %c0_i32_1 = arith.constant 0 : i32
    return %c0_i32, %c0_i32_0 : i32, i32
  }
}

module attributes {stable_mosaic.version = 11 : i64} {
  func.func @kernel(%arg0: i32, %arg1: i32, %arg2: memref<1x1x18x128xf32, #tpu.memory_space<vmem>>, %arg3: memref<1x1x18x128xf32, #tpu.memory_space<vmem>>, %arg4: memref<1x1x18x128xf32, #tpu.memory_space<vmem>>, %arg5: memref<1x128xf32, #tpu.memory_space<vmem>>, %arg6: memref<1x128xf32, #tpu.memory_space<vmem>>, %arg7: memref<1x128xf32, #tpu.memory_space<vmem>>, %arg8: memref<1x128xf32, #tpu.memory_space<vmem>>, %arg9: memref<1152x128xf32, #tpu.memory_space<vmem>>, %arg10: memref<1x128xf32, #tpu.memory_space<vmem>>, %arg11: memref<1x1x16x128xf32, #tpu.memory_space<vmem>>) attributes {dimension_semantics = [#tpu.dimension_semantics<parallel>, #tpu.dimension_semantics<parallel>], iteration_bounds = array<i64: 2, 16>, scalar_prefetch = 0 : i64, scratch_operands = 0 : i64, tpu.core_type = #tpu.core_type<tc>, window_params = [{transform_indices = @transform_0, window_bounds = array<i64: 1, 1, 18, 128>}, {transform_indices = @transform_1, window_bounds = array<i64: 1, 1, 18, 128>}, {transform_indices = @transform_2, window_bounds = array<i64: 1, 1, 18, 128>}, {pipeline_mode = #tpu.pipeline_mode<synchronous>, transform_indices = @transform_3, window_bounds = array<i64: 1, 128>}, {pipeline_mode = #tpu.pipeline_mode<synchronous>, transform_indices = @transform_4, window_bounds = array<i64: 1, 128>}, {pipeline_mode = #tpu.pipeline_mode<synchronous>, transform_indices = @transform_5, window_bounds = array<i64: 1, 128>}, {pipeline_mode = #tpu.pipeline_mode<synchronous>, transform_indices = @transform_6, window_bounds = array<i64: 1, 128>}, {pipeline_mode = #tpu.pipeline_mode<synchronous>, transform_indices = @transform_7, window_bounds = array<i64: 1152, 128>}, {pipeline_mode = #tpu.pipeline_mode<synchronous>, transform_indices = @transform_8, window_bounds = array<i64: 1, 128>}, {transform_indices = @transform_9, window_bounds = array<i64: 1, 1, 16, 128>}]} {
    %c0 = arith.constant 0 : index
    %c0_0 = arith.constant 0 : index
    %0 = vector.load %arg6[%c0, %c0_0] : memref<1x128xf32, #tpu.memory_space<vmem>>, vector<1x128xf32>
    %c0_1 = arith.constant 0 : index
    %c0_2 = arith.constant 0 : index
    %1 = vector.load %arg7[%c0_1, %c0_2] : memref<1x128xf32, #tpu.memory_space<vmem>>, vector<1x128xf32>
    %2 = arith.mulf %0, %1 : vector<1x128xf32>
    %c0_3 = arith.constant 0 : index
    %c0_4 = arith.constant 0 : index
    %3 = vector.load %arg8[%c0_3, %c0_4] : memref<1x128xf32, #tpu.memory_space<vmem>>, vector<1x128xf32>
    %c0_5 = arith.constant 0 : index
    %c0_6 = arith.constant 0 : index
    %4 = vector.load %arg5[%c0_5, %c0_6] : memref<1x128xf32, #tpu.memory_space<vmem>>, vector<1x128xf32>
    %5 = arith.mulf %4, %2 : vector<1x128xf32>
    %6 = arith.subf %3, %5 : vector<1x128xf32>
    %c0_7 = arith.constant 0 : index
    %c0_8 = arith.constant 0 : index
    %c0_9 = arith.constant 0 : index
    %c0_10 = arith.constant 0 : index
    %7 = vector.load %arg2[%c0_7, %c0_8, %c0_9, %c0_10] : memref<1x1x18x128xf32, #tpu.memory_space<vmem>>, vector<1x1x18x128xf32>
    %8 = vector.shape_cast %7 : vector<1x1x18x128xf32> to vector<18x128xf32>
    %9 = vector.broadcast %2 : vector<1x128xf32> to vector<18x128xf32>
    %10 = arith.mulf %8, %9 : vector<18x128xf32>
    %11 = vector.broadcast %6 : vector<1x128xf32> to vector<18x128xf32>
    %12 = arith.addf %10, %11 : vector<18x128xf32>
    %cst = arith.constant 0.000000e+00 : f32
    %13 = vector.broadcast %cst : f32 to vector<18x128xf32>
    %14 = arith.cmpf oge, %12, %13 : vector<18x128xf32>
    %cst_11 = arith.constant 0.00999999977 : f32
    %15 = vector.broadcast %cst_11 : f32 to vector<18x128xf32>
    %16 = arith.mulf %15, %12 : vector<18x128xf32>
    %17 = arith.select %14, %12, %16 : vector<18x128xi1>, vector<18x128xf32>
    %c0_i32 = arith.constant 0 : i32
    %18 = arith.addi %arg1, %c0_i32 : i32
    %c1_i32 = arith.constant 1 : i32
    %19 = arith.cmpi sge, %18, %c1_i32 : i32
    %c16_i32 = arith.constant 16 : i32
    %20 = arith.cmpi sle, %18, %c16_i32 : i32
    %21 = arith.andi %19, %20 : i1
    %22 = tpu.iota {dimensions = array<i32: 0>} : vector<18x128xi32>
    %c1_i32_12 = arith.constant 1 : i32
    %23 = vector.broadcast %c1_i32_12 : i32 to vector<18x128xi32>
    %24 = arith.cmpi sge, %22, %23 : vector<18x128xi32>
    %c16_i32_13 = arith.constant 16 : i32
    %25 = vector.broadcast %c16_i32_13 : i32 to vector<18x128xi32>
    %26 = arith.cmpi sle, %22, %25 : vector<18x128xi32>
    %27 = arith.andi %24, %26 : vector<18x128xi1>
    %28 = vector.broadcast %21 : i1 to vector<18x128xi1>
    %29 = arith.andi %28, %27 : vector<18x128xi1>
    %cst_14 = arith.constant 0.000000e+00 : f32
    %30 = vector.broadcast %cst_14 : f32 to vector<18x128xf32>
    %31 = arith.select %29, %17, %30 : vector<18x128xi1>, vector<18x128xf32>
    %c0_15 = arith.constant 0 : index
    %c0_16 = arith.constant 0 : index
    %c0_17 = arith.constant 0 : index
    %c0_18 = arith.constant 0 : index
    %32 = vector.load %arg3[%c0_15, %c0_16, %c0_17, %c0_18] : memref<1x1x18x128xf32, #tpu.memory_space<vmem>>, vector<1x1x18x128xf32>
    %33 = vector.shape_cast %32 : vector<1x1x18x128xf32> to vector<18x128xf32>
    %34 = vector.broadcast %2 : vector<1x128xf32> to vector<18x128xf32>
    %35 = arith.mulf %33, %34 : vector<18x128xf32>
    %36 = vector.broadcast %6 : vector<1x128xf32> to vector<18x128xf32>
    %37 = arith.addf %35, %36 : vector<18x128xf32>
    %cst_19 = arith.constant 0.000000e+00 : f32
    %38 = vector.broadcast %cst_19 : f32 to vector<18x128xf32>
    %39 = arith.cmpf oge, %37, %38 : vector<18x128xf32>
    %cst_20 = arith.constant 0.00999999977 : f32
    %40 = vector.broadcast %cst_20 : f32 to vector<18x128xf32>
    %41 = arith.mulf %40, %37 : vector<18x128xf32>
    %42 = arith.select %39, %37, %41 : vector<18x128xi1>, vector<18x128xf32>
    %c1_i32_21 = arith.constant 1 : i32
    %43 = arith.addi %arg1, %c1_i32_21 : i32
    %c1_i32_22 = arith.constant 1 : i32
    %44 = arith.cmpi sge, %43, %c1_i32_22 : i32
    %c16_i32_23 = arith.constant 16 : i32
    %45 = arith.cmpi sle, %43, %c16_i32_23 : i32
    %46 = arith.andi %44, %45 : i1
    %47 = tpu.iota {dimensions = array<i32: 0>} : vector<18x128xi32>
    %c1_i32_24 = arith.constant 1 : i32
    %48 = vector.broadcast %c1_i32_24 : i32 to vector<18x128xi32>
    %49 = arith.cmpi sge, %47, %48 : vector<18x128xi32>
    %c16_i32_25 = arith.constant 16 : i32
    %50 = vector.broadcast %c16_i32_25 : i32 to vector<18x128xi32>
    %51 = arith.cmpi sle, %47, %50 : vector<18x128xi32>
    %52 = arith.andi %49, %51 : vector<18x128xi1>
    %53 = vector.broadcast %46 : i1 to vector<18x128xi1>
    %54 = arith.andi %53, %52 : vector<18x128xi1>
    %cst_26 = arith.constant 0.000000e+00 : f32
    %55 = vector.broadcast %cst_26 : f32 to vector<18x128xf32>
    %56 = arith.select %54, %42, %55 : vector<18x128xi1>, vector<18x128xf32>
    %c0_27 = arith.constant 0 : index
    %c0_28 = arith.constant 0 : index
    %c0_29 = arith.constant 0 : index
    %c0_30 = arith.constant 0 : index
    %57 = vector.load %arg4[%c0_27, %c0_28, %c0_29, %c0_30] : memref<1x1x18x128xf32, #tpu.memory_space<vmem>>, vector<1x1x18x128xf32>
    %58 = vector.shape_cast %57 : vector<1x1x18x128xf32> to vector<18x128xf32>
    %59 = vector.broadcast %2 : vector<1x128xf32> to vector<18x128xf32>
    %60 = arith.mulf %58, %59 : vector<18x128xf32>
    %61 = vector.broadcast %6 : vector<1x128xf32> to vector<18x128xf32>
    %62 = arith.addf %60, %61 : vector<18x128xf32>
    %cst_31 = arith.constant 0.000000e+00 : f32
    %63 = vector.broadcast %cst_31 : f32 to vector<18x128xf32>
    %64 = arith.cmpf oge, %62, %63 : vector<18x128xf32>
    %cst_32 = arith.constant 0.00999999977 : f32
    %65 = vector.broadcast %cst_32 : f32 to vector<18x128xf32>
    %66 = arith.mulf %65, %62 : vector<18x128xf32>
    %67 = arith.select %64, %62, %66 : vector<18x128xi1>, vector<18x128xf32>
    %c2_i32 = arith.constant 2 : i32
    %68 = arith.addi %arg1, %c2_i32 : i32
    %c1_i32_33 = arith.constant 1 : i32
    %69 = arith.cmpi sge, %68, %c1_i32_33 : i32
    %c16_i32_34 = arith.constant 16 : i32
    %70 = arith.cmpi sle, %68, %c16_i32_34 : i32
    %71 = arith.andi %69, %70 : i1
    %72 = tpu.iota {dimensions = array<i32: 0>} : vector<18x128xi32>
    %c1_i32_35 = arith.constant 1 : i32
    %73 = vector.broadcast %c1_i32_35 : i32 to vector<18x128xi32>
    %74 = arith.cmpi sge, %72, %73 : vector<18x128xi32>
    %c16_i32_36 = arith.constant 16 : i32
    %75 = vector.broadcast %c16_i32_36 : i32 to vector<18x128xi32>
    %76 = arith.cmpi sle, %72, %75 : vector<18x128xi32>
    %77 = arith.andi %74, %76 : vector<18x128xi1>
    %78 = vector.broadcast %71 : i1 to vector<18x128xi1>
    %79 = arith.andi %78, %77 : vector<18x128xi1>
    %cst_37 = arith.constant 0.000000e+00 : f32
    %80 = vector.broadcast %cst_37 : f32 to vector<18x128xf32>
    %81 = arith.select %79, %67, %80 : vector<18x128xi1>, vector<18x128xf32>
    %82 = vector.extract_strided_slice %31 {offsets = [0, 0], sizes = [16, 128], strides = [1, 1]} : vector<18x128xf32> to vector<16x128xf32>
    %83 = vector.extract_strided_slice %31 {offsets = [1, 0], sizes = [16, 128], strides = [1, 1]} : vector<18x128xf32> to vector<16x128xf32>
    %84 = vector.extract_strided_slice %31 {offsets = [2, 0], sizes = [16, 128], strides = [1, 1]} : vector<18x128xf32> to vector<16x128xf32>
    %85 = vector.extract_strided_slice %56 {offsets = [0, 0], sizes = [16, 128], strides = [1, 1]} : vector<18x128xf32> to vector<16x128xf32>
    %86 = vector.extract_strided_slice %56 {offsets = [1, 0], sizes = [16, 128], strides = [1, 1]} : vector<18x128xf32> to vector<16x128xf32>
    %87 = vector.extract_strided_slice %56 {offsets = [2, 0], sizes = [16, 128], strides = [1, 1]} : vector<18x128xf32> to vector<16x128xf32>
    %88 = vector.extract_strided_slice %81 {offsets = [0, 0], sizes = [16, 128], strides = [1, 1]} : vector<18x128xf32> to vector<16x128xf32>
    %89 = vector.extract_strided_slice %81 {offsets = [1, 0], sizes = [16, 128], strides = [1, 1]} : vector<18x128xf32> to vector<16x128xf32>
    %90 = vector.extract_strided_slice %81 {offsets = [2, 0], sizes = [16, 128], strides = [1, 1]} : vector<18x128xf32> to vector<16x128xf32>
    %91 = tpu.concatenate %82, %83, %84, %85, %86, %87, %88, %89, %90 in 1 : vector<16x128xf32>, vector<16x128xf32>, vector<16x128xf32>, vector<16x128xf32>, vector<16x128xf32>, vector<16x128xf32>, vector<16x128xf32>, vector<16x128xf32>, vector<16x128xf32> -> vector<16x1152xf32>
    %c0_38 = arith.constant 0 : index
    %c0_39 = arith.constant 0 : index
    %92 = vector.load %arg9[%c0_38, %c0_39] : memref<1152x128xf32, #tpu.memory_space<vmem>>, vector<1152x128xf32>
    %cst_40 = arith.constant dense<0.000000e+00> : vector<16x128xf32>
    %93 = tpu.matmul %91, %92, %cst_40 {dimension_numbers = #tpu.dot_dimension_numbers<[1], [0], [0], [1], [0, 0, 1, 1], [], []>} : vector<16x1152xf32>, vector<1152x128xf32>, vector<16x128xf32> -> vector<16x128xf32>
    %c0_41 = arith.constant 0 : index
    %c0_42 = arith.constant 0 : index
    %94 = vector.load %arg10[%c0_41, %c0_42] : memref<1x128xf32, #tpu.memory_space<vmem>>, vector<1x128xf32>
    %95 = vector.broadcast %94 : vector<1x128xf32> to vector<16x128xf32>
    %96 = arith.addf %93, %95 : vector<16x128xf32>
    %c0_43 = arith.constant 0 : index
    %c0_44 = arith.constant 0 : index
    %c0_45 = arith.constant 0 : index
    %c0_46 = arith.constant 0 : index
    %97 = vector.load %arg11[%c0_43, %c0_44, %c0_45, %c0_46] : memref<1x1x16x128xf32, #tpu.memory_space<vmem>>, vector<1x1x16x128xf32>
    %98 = vector.shape_cast %97 : vector<1x1x16x128xf32> to vector<16x128xf32>
    %99 = vector.shape_cast %96 : vector<16x128xf32> to vector<1x1x16x128xf32>
    tpu.vector_store %arg11[%c0_43, %c0_44, %c0_45, %c0_46], %99 {strides = array<i32>} : memref<1x1x16x128xf32, #tpu.memory_space<vmem>>, vector<1x1x16x128xf32>,
    return
  }
  func.func @transform_0(%arg0: i32, %arg1: i32) -> (i32, i32, i32, i32) {
    %c0_i32 = arith.constant 0 : i32
    %0 = arith.addi %arg1, %c0_i32 : i32
    %c0_i32_0 = arith.constant 0 : i32
    %c0_i32_1 = arith.constant 0 : i32
    %c0_i32_2 = arith.constant 0 : i32
    return %arg0, %0, %c0_i32_0, %c0_i32_1 : i32, i32, i32, i32
  }
  func.func @transform_1(%arg0: i32, %arg1: i32) -> (i32, i32, i32, i32) {
    %c1_i32 = arith.constant 1 : i32
    %0 = arith.addi %arg1, %c1_i32 : i32
    %c0_i32 = arith.constant 0 : i32
    %c0_i32_0 = arith.constant 0 : i32
    %c0_i32_1 = arith.constant 0 : i32
    return %arg0, %0, %c0_i32, %c0_i32_0 : i32, i32, i32, i32
  }
  func.func @transform_2(%arg0: i32, %arg1: i32) -> (i32, i32, i32, i32) {
    %c2_i32 = arith.constant 2 : i32
    %0 = arith.addi %arg1, %c2_i32 : i32
    %c0_i32 = arith.constant 0 : i32
    %c0_i32_0 = arith.constant 0 : i32
    %c0_i32_1 = arith.constant 0 : i32
    return %arg0, %0, %c0_i32, %c0_i32_0 : i32, i32, i32, i32
  }
  func.func @transform_3(%arg0: i32, %arg1: i32) -> (i32, i32) {
    %c0_i32 = arith.constant 0 : i32
    %c0_i32_0 = arith.constant 0 : i32
    %c0_i32_1 = arith.constant 0 : i32
    return %c0_i32, %c0_i32_0 : i32, i32
  }
  func.func @transform_4(%arg0: i32, %arg1: i32) -> (i32, i32) {
    %c0_i32 = arith.constant 0 : i32
    %c0_i32_0 = arith.constant 0 : i32
    %c0_i32_1 = arith.constant 0 : i32
    return %c0_i32, %c0_i32_0 : i32, i32
  }
  func.func @transform_5(%arg0: i32, %arg1: i32) -> (i32, i32) {
    %c0_i32 = arith.constant 0 : i32
    %c0_i32_0 = arith.constant 0 : i32
    %c0_i32_1 = arith.constant 0 : i32
    return %c0_i32, %c0_i32_0 : i32, i32
  }
  func.func @transform_6(%arg0: i32, %arg1: i32) -> (i32, i32) {
    %c0_i32 = arith.constant 0 : i32
    %c0_i32_0 = arith.constant 0 : i32
    %c0_i32_1 = arith.constant 0 : i32
    return %c0_i32, %c0_i32_0 : i32, i32
  }
  func.func @transform_7(%arg0: i32, %arg1: i32) -> (i32, i32) {
    %c0_i32 = arith.constant 0 : i32
    %c0_i32_0 = arith.constant 0 : i32
    %c0_i32_1 = arith.constant 0 : i32
    return %c0_i32, %c0_i32_0 : i32, i32
  }
  func.func @transform_8(%arg0: i32, %arg1: i32) -> (i32, i32) {
    %c0_i32 = arith.constant 0 : i32
    %c0_i32_0 = arith.constant 0 : i32
    %c0_i32_1 = arith.constant 0 : i32
    return %c0_i32, %c0_i32_0 : i32, i32
  }
  func.func @transform_9(%arg0: i32, %arg1: i32) -> (i32, i32, i32, i32) {
    %c0_i32 = arith.constant 0 : i32
    %c0_i32_0 = arith.constant 0 : i32
    %c0_i32_1 = arith.constant 0 : i32
    return %arg0, %arg1, %c0_i32, %c0_i32_0 : i32, i32, i32, i32
  }
}

module attributes {stable_mosaic.version = 11 : i64} {
  func.func @kernel(%arg0: i32, %arg1: i32, %arg2: memref<1x1x18x128xf32, #tpu.memory_space<vmem>>, %arg3: memref<1x1x18x128xf32, #tpu.memory_space<vmem>>, %arg4: memref<1x1x18x128xf32, #tpu.memory_space<vmem>>, %arg5: memref<1x128xf32, #tpu.memory_space<vmem>>, %arg6: memref<1x128xf32, #tpu.memory_space<vmem>>, %arg7: memref<1x128xf32, #tpu.memory_space<vmem>>, %arg8: memref<1x128xf32, #tpu.memory_space<vmem>>, %arg9: memref<1152x128xf32, #tpu.memory_space<vmem>>, %arg10: memref<1x128xf32, #tpu.memory_space<vmem>>, %arg11: memref<1x1x16x128xf32, #tpu.memory_space<vmem>>, %arg12: memref<128x128xf32, #tpu.memory_space<vmem>>, %arg13: memref<1x128xf32, #tpu.memory_space<vmem>>, %arg14: memref<1x1x16x128xf32, #tpu.memory_space<vmem>>) attributes {dimension_semantics = [#tpu.dimension_semantics<parallel>, #tpu.dimension_semantics<parallel>], iteration_bounds = array<i64: 2, 16>, scalar_prefetch = 0 : i64, scratch_operands = 0 : i64, tpu.core_type = #tpu.core_type<tc>, window_params = [{transform_indices = @transform_0, window_bounds = array<i64: 1, 1, 18, 128>}, {transform_indices = @transform_1, window_bounds = array<i64: 1, 1, 18, 128>}, {transform_indices = @transform_2, window_bounds = array<i64: 1, 1, 18, 128>}, {pipeline_mode = #tpu.pipeline_mode<synchronous>, transform_indices = @transform_3, window_bounds = array<i64: 1, 128>}, {pipeline_mode = #tpu.pipeline_mode<synchronous>, transform_indices = @transform_4, window_bounds = array<i64: 1, 128>}, {pipeline_mode = #tpu.pipeline_mode<synchronous>, transform_indices = @transform_5, window_bounds = array<i64: 1, 128>}, {pipeline_mode = #tpu.pipeline_mode<synchronous>, transform_indices = @transform_6, window_bounds = array<i64: 1, 128>}, {pipeline_mode = #tpu.pipeline_mode<synchronous>, transform_indices = @transform_7, window_bounds = array<i64: 1152, 128>}, {pipeline_mode = #tpu.pipeline_mode<synchronous>, transform_indices = @transform_8, window_bounds = array<i64: 1, 128>}, {transform_indices = @transform_9, window_bounds = array<i64: 1, 1, 16, 128>}, {pipeline_mode = #tpu.pipeline_mode<synchronous>, transform_indices = @transform_10, window_bounds = array<i64: 128, 128>}, {pipeline_mode = #tpu.pipeline_mode<synchronous>, transform_indices = @transform_11, window_bounds = array<i64: 1, 128>}, {transform_indices = @transform_12, window_bounds = array<i64: 1, 1, 16, 128>}]} {
    %c0 = arith.constant 0 : index
    %c0_0 = arith.constant 0 : index
    %0 = vector.load %arg6[%c0, %c0_0] : memref<1x128xf32, #tpu.memory_space<vmem>>, vector<1x128xf32>
    %c0_1 = arith.constant 0 : index
    %c0_2 = arith.constant 0 : index
    %1 = vector.load %arg7[%c0_1, %c0_2] : memref<1x128xf32, #tpu.memory_space<vmem>>, vector<1x128xf32>
    %2 = arith.mulf %0, %1 : vector<1x128xf32>
    %c0_3 = arith.constant 0 : index
    %c0_4 = arith.constant 0 : index
    %3 = vector.load %arg8[%c0_3, %c0_4] : memref<1x128xf32, #tpu.memory_space<vmem>>, vector<1x128xf32>
    %c0_5 = arith.constant 0 : index
    %c0_6 = arith.constant 0 : index
    %4 = vector.load %arg5[%c0_5, %c0_6] : memref<1x128xf32, #tpu.memory_space<vmem>>, vector<1x128xf32>
    %5 = arith.mulf %4, %2 : vector<1x128xf32>
    %6 = arith.subf %3, %5 : vector<1x128xf32>
    %c0_7 = arith.constant 0 : index
    %c0_8 = arith.constant 0 : index
    %c0_9 = arith.constant 0 : index
    %c0_10 = arith.constant 0 : index
    %7 = vector.load %arg2[%c0_7, %c0_8, %c0_9, %c0_10] : memref<1x1x18x128xf32, #tpu.memory_space<vmem>>, vector<1x1x18x128xf32>
    %8 = vector.shape_cast %7 : vector<1x1x18x128xf32> to vector<18x128xf32>
    %9 = vector.broadcast %2 : vector<1x128xf32> to vector<18x128xf32>
    %10 = arith.mulf %8, %9 : vector<18x128xf32>
    %11 = vector.broadcast %6 : vector<1x128xf32> to vector<18x128xf32>
    %12 = arith.addf %10, %11 : vector<18x128xf32>
    %cst = arith.constant 0.000000e+00 : f32
    %13 = vector.broadcast %cst : f32 to vector<18x128xf32>
    %14 = arith.cmpf oge, %12, %13 : vector<18x128xf32>
    %cst_11 = arith.constant 0.00999999977 : f32
    %15 = vector.broadcast %cst_11 : f32 to vector<18x128xf32>
    %16 = arith.mulf %15, %12 : vector<18x128xf32>
    %17 = arith.select %14, %12, %16 : vector<18x128xi1>, vector<18x128xf32>
    %c0_i32 = arith.constant 0 : i32
    %18 = arith.addi %arg1, %c0_i32 : i32
    %c1_i32 = arith.constant 1 : i32
    %19 = arith.cmpi sge, %18, %c1_i32 : i32
    %c16_i32 = arith.constant 16 : i32
    %20 = arith.cmpi sle, %18, %c16_i32 : i32
    %21 = arith.andi %19, %20 : i1
    %22 = tpu.iota {dimensions = array<i32: 0>} : vector<18x128xi32>
    %c1_i32_12 = arith.constant 1 : i32
    %23 = vector.broadcast %c1_i32_12 : i32 to vector<18x128xi32>
    %24 = arith.cmpi sge, %22, %23 : vector<18x128xi32>
    %c16_i32_13 = arith.constant 16 : i32
    %25 = vector.broadcast %c16_i32_13 : i32 to vector<18x128xi32>
    %26 = arith.cmpi sle, %22, %25 : vector<18x128xi32>
    %27 = arith.andi %24, %26 : vector<18x128xi1>
    %28 = vector.broadcast %21 : i1 to vector<18x128xi1>
    %29 = arith.andi %28, %27 : vector<18x128xi1>
    %cst_14 = arith.constant 0.000000e+00 : f32
    %30 = vector.broadcast %cst_14 : f32 to vector<18x128xf32>
    %31 = arith.select %29, %17, %30 : vector<18x128xi1>, vector<18x128xf32>
    %c0_15 = arith.constant 0 : index
    %c0_16 = arith.constant 0 : index
    %c0_17 = arith.constant 0 : index
    %c0_18 = arith.constant 0 : index
    %32 = vector.load %arg3[%c0_15, %c0_16, %c0_17, %c0_18] : memref<1x1x18x128xf32, #tpu.memory_space<vmem>>, vector<1x1x18x128xf32>
    %33 = vector.shape_cast %32 : vector<1x1x18x128xf32> to vector<18x128xf32>
    %34 = vector.broadcast %2 : vector<1x128xf32> to vector<18x128xf32>
    %35 = arith.mulf %33, %34 : vector<18x128xf32>
    %36 = vector.broadcast %6 : vector<1x128xf32> to vector<18x128xf32>
    %37 = arith.addf %35, %36 : vector<18x128xf32>
    %cst_19 = arith.constant 0.000000e+00 : f32
    %38 = vector.broadcast %cst_19 : f32 to vector<18x128xf32>
    %39 = arith.cmpf oge, %37, %38 : vector<18x128xf32>
    %cst_20 = arith.constant 0.00999999977 : f32
    %40 = vector.broadcast %cst_20 : f32 to vector<18x128xf32>
    %41 = arith.mulf %40, %37 : vector<18x128xf32>
    %42 = arith.select %39, %37, %41 : vector<18x128xi1>, vector<18x128xf32>
    %c1_i32_21 = arith.constant 1 : i32
    %43 = arith.addi %arg1, %c1_i32_21 : i32
    %c1_i32_22 = arith.constant 1 : i32
    %44 = arith.cmpi sge, %43, %c1_i32_22 : i32
    %c16_i32_23 = arith.constant 16 : i32
    %45 = arith.cmpi sle, %43, %c16_i32_23 : i32
    %46 = arith.andi %44, %45 : i1
    %47 = tpu.iota {dimensions = array<i32: 0>} : vector<18x128xi32>
    %c1_i32_24 = arith.constant 1 : i32
    %48 = vector.broadcast %c1_i32_24 : i32 to vector<18x128xi32>
    %49 = arith.cmpi sge, %47, %48 : vector<18x128xi32>
    %c16_i32_25 = arith.constant 16 : i32
    %50 = vector.broadcast %c16_i32_25 : i32 to vector<18x128xi32>
    %51 = arith.cmpi sle, %47, %50 : vector<18x128xi32>
    %52 = arith.andi %49, %51 : vector<18x128xi1>
    %53 = vector.broadcast %46 : i1 to vector<18x128xi1>
    %54 = arith.andi %53, %52 : vector<18x128xi1>
    %cst_26 = arith.constant 0.000000e+00 : f32
    %55 = vector.broadcast %cst_26 : f32 to vector<18x128xf32>
    %56 = arith.select %54, %42, %55 : vector<18x128xi1>, vector<18x128xf32>
    %c0_27 = arith.constant 0 : index
    %c0_28 = arith.constant 0 : index
    %c0_29 = arith.constant 0 : index
    %c0_30 = arith.constant 0 : index
    %57 = vector.load %arg4[%c0_27, %c0_28, %c0_29, %c0_30] : memref<1x1x18x128xf32, #tpu.memory_space<vmem>>, vector<1x1x18x128xf32>
    %58 = vector.shape_cast %57 : vector<1x1x18x128xf32> to vector<18x128xf32>
    %59 = vector.broadcast %2 : vector<1x128xf32> to vector<18x128xf32>
    %60 = arith.mulf %58, %59 : vector<18x128xf32>
    %61 = vector.broadcast %6 : vector<1x128xf32> to vector<18x128xf32>
    %62 = arith.addf %60, %61 : vector<18x128xf32>
    %cst_31 = arith.constant 0.000000e+00 : f32
    %63 = vector.broadcast %cst_31 : f32 to vector<18x128xf32>
    %64 = arith.cmpf oge, %62, %63 : vector<18x128xf32>
    %cst_32 = arith.constant 0.00999999977 : f32
    %65 = vector.broadcast %cst_32 : f32 to vector<18x128xf32>
    %66 = arith.mulf %65, %62 : vector<18x128xf32>
    %67 = arith.select %64, %62, %66 : vector<18x128xi1>, vector<18x128xf32>
    %c2_i32 = arith.constant 2 : i32
    %68 = arith.addi %arg1, %c2_i32 : i32
    %c1_i32_33 = arith.constant 1 : i32
    %69 = arith.cmpi sge, %68, %c1_i32_33 : i32
    %c16_i32_34 = arith.constant 16 : i32
    %70 = arith.cmpi sle, %68, %c16_i32_34 : i32
    %71 = arith.andi %69, %70 : i1
    %72 = tpu.iota {dimensions = array<i32: 0>} : vector<18x128xi32>
    %c1_i32_35 = arith.constant 1 : i32
    %73 = vector.broadcast %c1_i32_35 : i32 to vector<18x128xi32>
    %74 = arith.cmpi sge, %72, %73 : vector<18x128xi32>
    %c16_i32_36 = arith.constant 16 : i32
    %75 = vector.broadcast %c16_i32_36 : i32 to vector<18x128xi32>
    %76 = arith.cmpi sle, %72, %75 : vector<18x128xi32>
    %77 = arith.andi %74, %76 : vector<18x128xi1>
    %78 = vector.broadcast %71 : i1 to vector<18x128xi1>
    %79 = arith.andi %78, %77 : vector<18x128xi1>
    %cst_37 = arith.constant 0.000000e+00 : f32
    %80 = vector.broadcast %cst_37 : f32 to vector<18x128xf32>
    %81 = arith.select %79, %67, %80 : vector<18x128xi1>, vector<18x128xf32>
    %82 = vector.extract_strided_slice %31 {offsets = [0, 0], sizes = [16, 128], strides = [1, 1]} : vector<18x128xf32> to vector<16x128xf32>
    %83 = vector.extract_strided_slice %31 {offsets = [1, 0], sizes = [16, 128], strides = [1, 1]} : vector<18x128xf32> to vector<16x128xf32>
    %84 = vector.extract_strided_slice %31 {offsets = [2, 0], sizes = [16, 128], strides = [1, 1]} : vector<18x128xf32> to vector<16x128xf32>
    %85 = vector.extract_strided_slice %56 {offsets = [0, 0], sizes = [16, 128], strides = [1, 1]} : vector<18x128xf32> to vector<16x128xf32>
    %86 = vector.extract_strided_slice %56 {offsets = [1, 0], sizes = [16, 128], strides = [1, 1]} : vector<18x128xf32> to vector<16x128xf32>
    %87 = vector.extract_strided_slice %56 {offsets = [2, 0], sizes = [16, 128], strides = [1, 1]} : vector<18x128xf32> to vector<16x128xf32>
    %88 = vector.extract_strided_slice %81 {offsets = [0, 0], sizes = [16, 128], strides = [1, 1]} : vector<18x128xf32> to vector<16x128xf32>
    %89 = vector.extract_strided_slice %81 {offsets = [1, 0], sizes = [16, 128], strides = [1, 1]} : vector<18x128xf32> to vector<16x128xf32>
    %90 = vector.extract_strided_slice %81 {offsets = [2, 0], sizes = [16, 128], strides = [1, 1]} : vector<18x128xf32> to vector<16x128xf32>
    %91 = tpu.concatenate %82, %83, %84, %85, %86, %87, %88, %89, %90 in 1 : vector<16x128xf32>, vector<16x128xf32>, vector<16x128xf32>, vector<16x128xf32>, vector<16x128xf32>, vector<16x128xf32>, vector<16x128xf32>, vector<16x128xf32>, vector<16x128xf32> -> vector<16x1152xf32>
    %c0_38 = arith.constant 0 : index
    %c0_39 = arith.constant 0 : index
    %92 = vector.load %arg9[%c0_38, %c0_39] : memref<1152x128xf32, #tpu.memory_space<vmem>>, vector<1152x128xf32>
    %cst_40 = arith.constant dense<0.000000e+00> : vector<16x128xf32>
    %93 = tpu.matmul %91, %92, %cst_40 {dimension_numbers = #tpu.dot_dimension_numbers<[1], [0], [0], [1], [0, 0, 1, 1], [], []>} : vector<16x1152xf32>, vector<1152x128xf32>, vector<16x128xf32> -> vector<16x128xf32>
    %c0_41 = arith.constant 0 : index
    %c0_42 = arith.constant 0 : index
    %94 = vector.load %arg10[%c0_41, %c0_42] : memref<1x128xf32, #tpu.memory_space<vmem>>, vector<1x128xf32>
    %95 = vector.broadcast %94 : vector<1x128xf32> to vector<16x128xf32>
    %96 = arith.addf %93, %95 : vector<16x128xf32>
    %c0_43 = arith.constant 0 : index
    %c0_44 = arith.constant 0 : index
    %c0_45 = arith.constant 0 : index
    %c0_46 = arith.constant 0 : index
    %97 = vector.load %arg11[%c0_43, %c0_44, %c0_45, %c0_46] : memref<1x1x16x128xf32, #tpu.memory_space<vmem>>, vector<1x1x16x128xf32>
    %98 = vector.shape_cast %97 : vector<1x1x16x128xf32> to vector<16x128xf32>
    %c0_47 = arith.constant 0 : index
    %c0_48 = arith.constant 0 : index
    %99 = vector.load %arg12[%c0_47, %c0_48] : memref<128x128xf32, #tpu.memory_space<vmem>>, vector<128x128xf32>
    %cst_49 = arith.constant dense<0.000000e+00> : vector<16x128xf32>
    %100 = tpu.matmul %98, %99, %cst_49 {dimension_numbers = #tpu.dot_dimension_numbers<[1], [0], [0], [1], [0, 0, 1, 1], [], []>} : vector<16x128xf32>, vector<128x128xf32>, vector<16x128xf32> -> vector<16x128xf32>
    %101 = arith.addf %96, %100 : vector<16x128xf32>
    %c0_50 = arith.constant 0 : index
    %c0_51 = arith.constant 0 : index
    %102 = vector.load %arg13[%c0_50, %c0_51] : memref<1x128xf32, #tpu.memory_space<vmem>>, vector<1x128xf32>
    %103 = vector.broadcast %102 : vector<1x128xf32> to vector<16x128xf32>
    %104 = arith.addf %101, %103 : vector<16x128xf32>
    %c0_52 = arith.constant 0 : index
    %c0_53 = arith.constant 0 : index
    %c0_54 = arith.constant 0 : index
    %c0_55 = arith.constant 0 : index
    %105 = vector.load %arg14[%c0_52, %c0_53, %c0_54, %c0_55] : memref<1x1x16x128xf32, #tpu.memory_space<vmem>>, vector<1x1x16x128xf32>
    %106 = vector.shape_cast %105 : vector<1x1x16x128xf32> to vector<16x128xf32>
    %107 = vector.shape_cast %104 : vector<16x128xf32> to vector<1x1x16x128xf32>
    tpu.vector_store %arg14[%c0_52, %c0_53, %c0_54, %c0_55], %107 {strides = array<i32>} : memref<1x1x16x128xf32, #tpu.memory_space<vmem>>, vector<1x1x16x128xf32>,
    return
  }
  func.func @transform_0(%arg0: i32, %arg1: i32) -> (i32, i32, i32, i32) {
    %c0_i32 = arith.constant 0 : i32
    %0 = arith.addi %arg1, %c0_i32 : i32
    %c0_i32_0 = arith.constant 0 : i32
    %c0_i32_1 = arith.constant 0 : i32
    %c0_i32_2 = arith.constant 0 : i32
    return %arg0, %0, %c0_i32_0, %c0_i32_1 : i32, i32, i32, i32
  }
  func.func @transform_1(%arg0: i32, %arg1: i32) -> (i32, i32, i32, i32) {
    %c1_i32 = arith.constant 1 : i32
    %0 = arith.addi %arg1, %c1_i32 : i32
    %c0_i32 = arith.constant 0 : i32
    %c0_i32_0 = arith.constant 0 : i32
    %c0_i32_1 = arith.constant 0 : i32
    return %arg0, %0, %c0_i32, %c0_i32_0 : i32, i32, i32, i32
  }
  func.func @transform_2(%arg0: i32, %arg1: i32) -> (i32, i32, i32, i32) {
    %c2_i32 = arith.constant 2 : i32
    %0 = arith.addi %arg1, %c2_i32 : i32
    %c0_i32 = arith.constant 0 : i32
    %c0_i32_0 = arith.constant 0 : i32
    %c0_i32_1 = arith.constant 0 : i32
    return %arg0, %0, %c0_i32, %c0_i32_0 : i32, i32, i32, i32
  }
  func.func @transform_3(%arg0: i32, %arg1: i32) -> (i32, i32) {
    %c0_i32 = arith.constant 0 : i32
    %c0_i32_0 = arith.constant 0 : i32
    %c0_i32_1 = arith.constant 0 : i32
    return %c0_i32, %c0_i32_0 : i32, i32
  }
  func.func @transform_4(%arg0: i32, %arg1: i32) -> (i32, i32) {
    %c0_i32 = arith.constant 0 : i32
    %c0_i32_0 = arith.constant 0 : i32
    %c0_i32_1 = arith.constant 0 : i32
    return %c0_i32, %c0_i32_0 : i32, i32
  }
  func.func @transform_5(%arg0: i32, %arg1: i32) -> (i32, i32) {
    %c0_i32 = arith.constant 0 : i32
    %c0_i32_0 = arith.constant 0 : i32
    %c0_i32_1 = arith.constant 0 : i32
    return %c0_i32, %c0_i32_0 : i32, i32
  }
  func.func @transform_6(%arg0: i32, %arg1: i32) -> (i32, i32) {
    %c0_i32 = arith.constant 0 : i32
    %c0_i32_0 = arith.constant 0 : i32
    %c0_i32_1 = arith.constant 0 : i32
    return %c0_i32, %c0_i32_0 : i32, i32
  }
  func.func @transform_7(%arg0: i32, %arg1: i32) -> (i32, i32) {
    %c0_i32 = arith.constant 0 : i32
    %c0_i32_0 = arith.constant 0 : i32
    %c0_i32_1 = arith.constant 0 : i32
    return %c0_i32, %c0_i32_0 : i32, i32
  }
  func.func @transform_8(%arg0: i32, %arg1: i32) -> (i32, i32) {
    %c0_i32 = arith.constant 0 : i32
    %c0_i32_0 = arith.constant 0 : i32
    %c0_i32_1 = arith.constant 0 : i32
    return %c0_i32, %c0_i32_0 : i32, i32
  }
  func.func @transform_9(%arg0: i32, %arg1: i32) -> (i32, i32, i32, i32) {
    %c0_i32 = arith.constant 0 : i32
    %c0_i32_0 = arith.constant 0 : i32
    %c0_i32_1 = arith.constant 0 : i32
    return %arg0, %arg1, %c0_i32, %c0_i32_0 : i32, i32, i32, i32
  }
  func.func @transform_10(%arg0: i32, %arg1: i32) -> (i32, i32) {
    %c0_i32 = arith.constant 0 : i32
    %c0_i32_0 = arith.constant 0 : i32
    %c0_i32_1 = arith.constant 0 : i32
    return %c0_i32, %c0_i32_0 : i32, i32
  }
  func.func @transform_11(%arg0: i32, %arg1: i32) -> (i32, i32) {
    %c0_i32 = arith.constant 0 : i32
    %c0_i32_0 = arith.constant 0 : i32
    %c0_i32_1 = arith.constant 0 : i32
    return %c0_i32, %c0_i32_0 : i32, i32
  }
  func.func @transform_12(%arg0: i32, %arg1: i32) -> (i32, i32, i32, i32) {
    %c0_i32 = arith.constant 0 : i32
    %c0_i32_0 = arith.constant 0 : i32
    %c0_i32_1 = arith.constant 0 : i32
    return %arg0, %arg1, %c0_i32, %c0_i32_0 : i32, i32, i32, i32
  }
}

module attributes {stable_mosaic.version = 11 : i64} {
  func.func @kernel(%arg0: i32, %arg1: i32, %arg2: memref<1x1x18x128xf32, #tpu.memory_space<vmem>>, %arg3: memref<1x1x18x128xf32, #tpu.memory_space<vmem>>, %arg4: memref<1x1x18x128xf32, #tpu.memory_space<vmem>>, %arg5: memref<1x128xf32, #tpu.memory_space<vmem>>, %arg6: memref<1x128xf32, #tpu.memory_space<vmem>>, %arg7: memref<1x128xf32, #tpu.memory_space<vmem>>, %arg8: memref<1x128xf32, #tpu.memory_space<vmem>>, %arg9: memref<1152x128xf32, #tpu.memory_space<vmem>>, %arg10: memref<1x128xf32, #tpu.memory_space<vmem>>, %arg11: memref<1x1x16x128xf32, #tpu.memory_space<vmem>>, %arg12: memref<1x1x16x128xf32, #tpu.memory_space<vmem>>) attributes {dimension_semantics = [#tpu.dimension_semantics<parallel>, #tpu.dimension_semantics<parallel>], iteration_bounds = array<i64: 2, 16>, scalar_prefetch = 0 : i64, scratch_operands = 0 : i64, tpu.core_type = #tpu.core_type<tc>, window_params = [{transform_indices = @transform_0, window_bounds = array<i64: 1, 1, 18, 128>}, {transform_indices = @transform_1, window_bounds = array<i64: 1, 1, 18, 128>}, {transform_indices = @transform_2, window_bounds = array<i64: 1, 1, 18, 128>}, {pipeline_mode = #tpu.pipeline_mode<synchronous>, transform_indices = @transform_3, window_bounds = array<i64: 1, 128>}, {pipeline_mode = #tpu.pipeline_mode<synchronous>, transform_indices = @transform_4, window_bounds = array<i64: 1, 128>}, {pipeline_mode = #tpu.pipeline_mode<synchronous>, transform_indices = @transform_5, window_bounds = array<i64: 1, 128>}, {pipeline_mode = #tpu.pipeline_mode<synchronous>, transform_indices = @transform_6, window_bounds = array<i64: 1, 128>}, {pipeline_mode = #tpu.pipeline_mode<synchronous>, transform_indices = @transform_7, window_bounds = array<i64: 1152, 128>}, {pipeline_mode = #tpu.pipeline_mode<synchronous>, transform_indices = @transform_8, window_bounds = array<i64: 1, 128>}, {transform_indices = @transform_9, window_bounds = array<i64: 1, 1, 16, 128>}, {transform_indices = @transform_10, window_bounds = array<i64: 1, 1, 16, 128>}]} {
    %c0 = arith.constant 0 : index
    %c0_0 = arith.constant 0 : index
    %0 = vector.load %arg6[%c0, %c0_0] : memref<1x128xf32, #tpu.memory_space<vmem>>, vector<1x128xf32>
    %c0_1 = arith.constant 0 : index
    %c0_2 = arith.constant 0 : index
    %1 = vector.load %arg7[%c0_1, %c0_2] : memref<1x128xf32, #tpu.memory_space<vmem>>, vector<1x128xf32>
    %2 = arith.mulf %0, %1 : vector<1x128xf32>
    %c0_3 = arith.constant 0 : index
    %c0_4 = arith.constant 0 : index
    %3 = vector.load %arg8[%c0_3, %c0_4] : memref<1x128xf32, #tpu.memory_space<vmem>>, vector<1x128xf32>
    %c0_5 = arith.constant 0 : index
    %c0_6 = arith.constant 0 : index
    %4 = vector.load %arg5[%c0_5, %c0_6] : memref<1x128xf32, #tpu.memory_space<vmem>>, vector<1x128xf32>
    %5 = arith.mulf %4, %2 : vector<1x128xf32>
    %6 = arith.subf %3, %5 : vector<1x128xf32>
    %c0_7 = arith.constant 0 : index
    %c0_8 = arith.constant 0 : index
    %c0_9 = arith.constant 0 : index
    %c0_10 = arith.constant 0 : index
    %7 = vector.load %arg2[%c0_7, %c0_8, %c0_9, %c0_10] : memref<1x1x18x128xf32, #tpu.memory_space<vmem>>, vector<1x1x18x128xf32>
    %8 = vector.shape_cast %7 : vector<1x1x18x128xf32> to vector<18x128xf32>
    %9 = vector.broadcast %2 : vector<1x128xf32> to vector<18x128xf32>
    %10 = arith.mulf %8, %9 : vector<18x128xf32>
    %11 = vector.broadcast %6 : vector<1x128xf32> to vector<18x128xf32>
    %12 = arith.addf %10, %11 : vector<18x128xf32>
    %cst = arith.constant 0.000000e+00 : f32
    %13 = vector.broadcast %cst : f32 to vector<18x128xf32>
    %14 = arith.cmpf oge, %12, %13 : vector<18x128xf32>
    %cst_11 = arith.constant 0.00999999977 : f32
    %15 = vector.broadcast %cst_11 : f32 to vector<18x128xf32>
    %16 = arith.mulf %15, %12 : vector<18x128xf32>
    %17 = arith.select %14, %12, %16 : vector<18x128xi1>, vector<18x128xf32>
    %c0_i32 = arith.constant 0 : i32
    %18 = arith.addi %arg1, %c0_i32 : i32
    %c1_i32 = arith.constant 1 : i32
    %19 = arith.cmpi sge, %18, %c1_i32 : i32
    %c16_i32 = arith.constant 16 : i32
    %20 = arith.cmpi sle, %18, %c16_i32 : i32
    %21 = arith.andi %19, %20 : i1
    %22 = tpu.iota {dimensions = array<i32: 0>} : vector<18x128xi32>
    %c1_i32_12 = arith.constant 1 : i32
    %23 = vector.broadcast %c1_i32_12 : i32 to vector<18x128xi32>
    %24 = arith.cmpi sge, %22, %23 : vector<18x128xi32>
    %c16_i32_13 = arith.constant 16 : i32
    %25 = vector.broadcast %c16_i32_13 : i32 to vector<18x128xi32>
    %26 = arith.cmpi sle, %22, %25 : vector<18x128xi32>
    %27 = arith.andi %24, %26 : vector<18x128xi1>
    %28 = vector.broadcast %21 : i1 to vector<18x128xi1>
    %29 = arith.andi %28, %27 : vector<18x128xi1>
    %cst_14 = arith.constant 0.000000e+00 : f32
    %30 = vector.broadcast %cst_14 : f32 to vector<18x128xf32>
    %31 = arith.select %29, %17, %30 : vector<18x128xi1>, vector<18x128xf32>
    %c0_15 = arith.constant 0 : index
    %c0_16 = arith.constant 0 : index
    %c0_17 = arith.constant 0 : index
    %c0_18 = arith.constant 0 : index
    %32 = vector.load %arg3[%c0_15, %c0_16, %c0_17, %c0_18] : memref<1x1x18x128xf32, #tpu.memory_space<vmem>>, vector<1x1x18x128xf32>
    %33 = vector.shape_cast %32 : vector<1x1x18x128xf32> to vector<18x128xf32>
    %34 = vector.broadcast %2 : vector<1x128xf32> to vector<18x128xf32>
    %35 = arith.mulf %33, %34 : vector<18x128xf32>
    %36 = vector.broadcast %6 : vector<1x128xf32> to vector<18x128xf32>
    %37 = arith.addf %35, %36 : vector<18x128xf32>
    %cst_19 = arith.constant 0.000000e+00 : f32
    %38 = vector.broadcast %cst_19 : f32 to vector<18x128xf32>
    %39 = arith.cmpf oge, %37, %38 : vector<18x128xf32>
    %cst_20 = arith.constant 0.00999999977 : f32
    %40 = vector.broadcast %cst_20 : f32 to vector<18x128xf32>
    %41 = arith.mulf %40, %37 : vector<18x128xf32>
    %42 = arith.select %39, %37, %41 : vector<18x128xi1>, vector<18x128xf32>
    %c1_i32_21 = arith.constant 1 : i32
    %43 = arith.addi %arg1, %c1_i32_21 : i32
    %c1_i32_22 = arith.constant 1 : i32
    %44 = arith.cmpi sge, %43, %c1_i32_22 : i32
    %c16_i32_23 = arith.constant 16 : i32
    %45 = arith.cmpi sle, %43, %c16_i32_23 : i32
    %46 = arith.andi %44, %45 : i1
    %47 = tpu.iota {dimensions = array<i32: 0>} : vector<18x128xi32>
    %c1_i32_24 = arith.constant 1 : i32
    %48 = vector.broadcast %c1_i32_24 : i32 to vector<18x128xi32>
    %49 = arith.cmpi sge, %47, %48 : vector<18x128xi32>
    %c16_i32_25 = arith.constant 16 : i32
    %50 = vector.broadcast %c16_i32_25 : i32 to vector<18x128xi32>
    %51 = arith.cmpi sle, %47, %50 : vector<18x128xi32>
    %52 = arith.andi %49, %51 : vector<18x128xi1>
    %53 = vector.broadcast %46 : i1 to vector<18x128xi1>
    %54 = arith.andi %53, %52 : vector<18x128xi1>
    %cst_26 = arith.constant 0.000000e+00 : f32
    %55 = vector.broadcast %cst_26 : f32 to vector<18x128xf32>
    %56 = arith.select %54, %42, %55 : vector<18x128xi1>, vector<18x128xf32>
    %c0_27 = arith.constant 0 : index
    %c0_28 = arith.constant 0 : index
    %c0_29 = arith.constant 0 : index
    %c0_30 = arith.constant 0 : index
    %57 = vector.load %arg4[%c0_27, %c0_28, %c0_29, %c0_30] : memref<1x1x18x128xf32, #tpu.memory_space<vmem>>, vector<1x1x18x128xf32>
    %58 = vector.shape_cast %57 : vector<1x1x18x128xf32> to vector<18x128xf32>
    %59 = vector.broadcast %2 : vector<1x128xf32> to vector<18x128xf32>
    %60 = arith.mulf %58, %59 : vector<18x128xf32>
    %61 = vector.broadcast %6 : vector<1x128xf32> to vector<18x128xf32>
    %62 = arith.addf %60, %61 : vector<18x128xf32>
    %cst_31 = arith.constant 0.000000e+00 : f32
    %63 = vector.broadcast %cst_31 : f32 to vector<18x128xf32>
    %64 = arith.cmpf oge, %62, %63 : vector<18x128xf32>
    %cst_32 = arith.constant 0.00999999977 : f32
    %65 = vector.broadcast %cst_32 : f32 to vector<18x128xf32>
    %66 = arith.mulf %65, %62 : vector<18x128xf32>
    %67 = arith.select %64, %62, %66 : vector<18x128xi1>, vector<18x128xf32>
    %c2_i32 = arith.constant 2 : i32
    %68 = arith.addi %arg1, %c2_i32 : i32
    %c1_i32_33 = arith.constant 1 : i32
    %69 = arith.cmpi sge, %68, %c1_i32_33 : i32
    %c16_i32_34 = arith.constant 16 : i32
    %70 = arith.cmpi sle, %68, %c16_i32_34 : i32
    %71 = arith.andi %69, %70 : i1
    %72 = tpu.iota {dimensions = array<i32: 0>} : vector<18x128xi32>
    %c1_i32_35 = arith.constant 1 : i32
    %73 = vector.broadcast %c1_i32_35 : i32 to vector<18x128xi32>
    %74 = arith.cmpi sge, %72, %73 : vector<18x128xi32>
    %c16_i32_36 = arith.constant 16 : i32
    %75 = vector.broadcast %c16_i32_36 : i32 to vector<18x128xi32>
    %76 = arith.cmpi sle, %72, %75 : vector<18x128xi32>
    %77 = arith.andi %74, %76 : vector<18x128xi1>
    %78 = vector.broadcast %71 : i1 to vector<18x128xi1>
    %79 = arith.andi %78, %77 : vector<18x128xi1>
    %cst_37 = arith.constant 0.000000e+00 : f32
    %80 = vector.broadcast %cst_37 : f32 to vector<18x128xf32>
    %81 = arith.select %79, %67, %80 : vector<18x128xi1>, vector<18x128xf32>
    %82 = vector.extract_strided_slice %31 {offsets = [0, 0], sizes = [16, 128], strides = [1, 1]} : vector<18x128xf32> to vector<16x128xf32>
    %83 = vector.extract_strided_slice %31 {offsets = [1, 0], sizes = [16, 128], strides = [1, 1]} : vector<18x128xf32> to vector<16x128xf32>
    %84 = vector.extract_strided_slice %31 {offsets = [2, 0], sizes = [16, 128], strides = [1, 1]} : vector<18x128xf32> to vector<16x128xf32>
    %85 = vector.extract_strided_slice %56 {offsets = [0, 0], sizes = [16, 128], strides = [1, 1]} : vector<18x128xf32> to vector<16x128xf32>
    %86 = vector.extract_strided_slice %56 {offsets = [1, 0], sizes = [16, 128], strides = [1, 1]} : vector<18x128xf32> to vector<16x128xf32>
    %87 = vector.extract_strided_slice %56 {offsets = [2, 0], sizes = [16, 128], strides = [1, 1]} : vector<18x128xf32> to vector<16x128xf32>
    %88 = vector.extract_strided_slice %81 {offsets = [0, 0], sizes = [16, 128], strides = [1, 1]} : vector<18x128xf32> to vector<16x128xf32>
    %89 = vector.extract_strided_slice %81 {offsets = [1, 0], sizes = [16, 128], strides = [1, 1]} : vector<18x128xf32> to vector<16x128xf32>
    %90 = vector.extract_strided_slice %81 {offsets = [2, 0], sizes = [16, 128], strides = [1, 1]} : vector<18x128xf32> to vector<16x128xf32>
    %91 = tpu.concatenate %82, %83, %84, %85, %86, %87, %88, %89, %90 in 1 : vector<16x128xf32>, vector<16x128xf32>, vector<16x128xf32>, vector<16x128xf32>, vector<16x128xf32>, vector<16x128xf32>, vector<16x128xf32>, vector<16x128xf32>, vector<16x128xf32> -> vector<16x1152xf32>
    %c0_38 = arith.constant 0 : index
    %c0_39 = arith.constant 0 : index
    %92 = vector.load %arg9[%c0_38, %c0_39] : memref<1152x128xf32, #tpu.memory_space<vmem>>, vector<1152x128xf32>
    %cst_40 = arith.constant dense<0.000000e+00> : vector<16x128xf32>
    %93 = tpu.matmul %91, %92, %cst_40 {dimension_numbers = #tpu.dot_dimension_numbers<[1], [0], [0], [1], [0, 0, 1, 1], [], []>} : vector<16x1152xf32>, vector<1152x128xf32>, vector<16x128xf32> -> vector<16x128xf32>
    %c0_41 = arith.constant 0 : index
    %c0_42 = arith.constant 0 : index
    %94 = vector.load %arg10[%c0_41, %c0_42] : memref<1x128xf32, #tpu.memory_space<vmem>>, vector<1x128xf32>
    %95 = vector.broadcast %94 : vector<1x128xf32> to vector<16x128xf32>
    %96 = arith.addf %93, %95 : vector<16x128xf32>
    %c0_43 = arith.constant 0 : index
    %c0_44 = arith.constant 0 : index
    %c0_45 = arith.constant 0 : index
    %c0_46 = arith.constant 0 : index
    %97 = vector.load %arg11[%c0_43, %c0_44, %c0_45, %c0_46] : memref<1x1x16x128xf32, #tpu.memory_space<vmem>>, vector<1x1x16x128xf32>
    %98 = vector.shape_cast %97 : vector<1x1x16x128xf32> to vector<16x128xf32>
    %99 = arith.addf %96, %98 : vector<16x128xf32>
    %c0_47 = arith.constant 0 : index
    %c0_48 = arith.constant 0 : index
    %c0_49 = arith.constant 0 : index
    %c0_50 = arith.constant 0 : index
    %100 = vector.load %arg12[%c0_47, %c0_48, %c0_49, %c0_50] : memref<1x1x16x128xf32, #tpu.memory_space<vmem>>, vector<1x1x16x128xf32>
    %101 = vector.shape_cast %100 : vector<1x1x16x128xf32> to vector<16x128xf32>
    %102 = vector.shape_cast %99 : vector<16x128xf32> to vector<1x1x16x128xf32>
    tpu.vector_store %arg12[%c0_47, %c0_48, %c0_49, %c0_50], %102 {strides = array<i32>} : memref<1x1x16x128xf32, #tpu.memory_space<vmem>>, vector<1x1x16x128xf32>,
    return
  }
  func.func @transform_0(%arg0: i32, %arg1: i32) -> (i32, i32, i32, i32) {
    %c0_i32 = arith.constant 0 : i32
    %0 = arith.addi %arg1, %c0_i32 : i32
    %c0_i32_0 = arith.constant 0 : i32
    %c0_i32_1 = arith.constant 0 : i32
    %c0_i32_2 = arith.constant 0 : i32
    return %arg0, %0, %c0_i32_0, %c0_i32_1 : i32, i32, i32, i32
  }
  func.func @transform_1(%arg0: i32, %arg1: i32) -> (i32, i32, i32, i32) {
    %c1_i32 = arith.constant 1 : i32
    %0 = arith.addi %arg1, %c1_i32 : i32
    %c0_i32 = arith.constant 0 : i32
    %c0_i32_0 = arith.constant 0 : i32
    %c0_i32_1 = arith.constant 0 : i32
    return %arg0, %0, %c0_i32, %c0_i32_0 : i32, i32, i32, i32
  }
  func.func @transform_2(%arg0: i32, %arg1: i32) -> (i32, i32, i32, i32) {
    %c2_i32 = arith.constant 2 : i32
    %0 = arith.addi %arg1, %c2_i32 : i32
    %c0_i32 = arith.constant 0 : i32
    %c0_i32_0 = arith.constant 0 : i32
    %c0_i32_1 = arith.constant 0 : i32
    return %arg0, %0, %c0_i32, %c0_i32_0 : i32, i32, i32, i32
  }
  func.func @transform_3(%arg0: i32, %arg1: i32) -> (i32, i32) {
    %c0_i32 = arith.constant 0 : i32
    %c0_i32_0 = arith.constant 0 : i32
    %c0_i32_1 = arith.constant 0 : i32
    return %c0_i32, %c0_i32_0 : i32, i32
  }
  func.func @transform_4(%arg0: i32, %arg1: i32) -> (i32, i32) {
    %c0_i32 = arith.constant 0 : i32
    %c0_i32_0 = arith.constant 0 : i32
    %c0_i32_1 = arith.constant 0 : i32
    return %c0_i32, %c0_i32_0 : i32, i32
  }
  func.func @transform_5(%arg0: i32, %arg1: i32) -> (i32, i32) {
    %c0_i32 = arith.constant 0 : i32
    %c0_i32_0 = arith.constant 0 : i32
    %c0_i32_1 = arith.constant 0 : i32
    return %c0_i32, %c0_i32_0 : i32, i32
  }
  func.func @transform_6(%arg0: i32, %arg1: i32) -> (i32, i32) {
    %c0_i32 = arith.constant 0 : i32
    %c0_i32_0 = arith.constant 0 : i32
    %c0_i32_1 = arith.constant 0 : i32
    return %c0_i32, %c0_i32_0 : i32, i32
  }
  func.func @transform_7(%arg0: i32, %arg1: i32) -> (i32, i32) {
    %c0_i32 = arith.constant 0 : i32
    %c0_i32_0 = arith.constant 0 : i32
    %c0_i32_1 = arith.constant 0 : i32
    return %c0_i32, %c0_i32_0 : i32, i32
  }
  func.func @transform_8(%arg0: i32, %arg1: i32) -> (i32, i32) {
    %c0_i32 = arith.constant 0 : i32
    %c0_i32_0 = arith.constant 0 : i32
    %c0_i32_1 = arith.constant 0 : i32
    return %c0_i32, %c0_i32_0 : i32, i32
  }
  func.func @transform_9(%arg0: i32, %arg1: i32) -> (i32, i32, i32, i32) {
    %c0_i32 = arith.constant 0 : i32
    %c0_i32_0 = arith.constant 0 : i32
    %c0_i32_1 = arith.constant 0 : i32
    return %arg0, %arg1, %c0_i32, %c0_i32_0 : i32, i32, i32, i32
  }
  func.func @transform_10(%arg0: i32, %arg1: i32) -> (i32, i32, i32, i32) {
    %c0_i32 = arith.constant 0 : i32
    %c0_i32_0 = arith.constant 0 : i32
    %c0_i32_1 = arith.constant 0 : i32
    return %arg0, %arg1, %c0_i32, %c0_i32_0 : i32, i32, i32, i32
  }
}

</mosaic_0001>

<llo_original>
// kernel: preact_bn_resblock4_forward.8
$region0: #{preact_bn_resblock4_forward.8}
  #allocation0 [shape = 'u32[]', space=smem, size = 0x4, offset = 0x4, fixed_abs, tag = 'smem constant byte address 0x4 - core index']
  #allocation1 [shape = 'u32[144,128]{1,0:T(1,128)}', space=vmem, size = 0x12000, scoped, tag = 'internal scratch']
  #allocation2 [shape = 'f32[2,128]{1,0:T(2,128)}', space=vmem, size = 0x400, scoped, tag = 'scratch operand']
  %s0 = inlined_call_operand.vmem [shape: f32[512,128], index: 0, kind: input, shape index: {}]
  %s1 = inlined_call_operand.vmem [shape: f32[2,128], index: 1, kind: output, shape index: {}]
  %s2 = sld [smem:[#allocation0]]
  $region41: #{preact_bn_resblock4_forward.8} parent=0
    _
  %s4 = ssub.s32 1, %s2
  %s5 = scalar_select 0, %s4, %s2
  loop: start=0, step=1, limit=4
  $region2: #{preact_bn_resblock4_forward.8} parent=0 // loop_pre_header
    _
  $region3: #{preact_bn_resblock4_forward.8} parent=0 // loop_header
    %s7 = sphi 0, %s11
    %p8 = scmp.ge.s32.totalorder %s7, 4
    %s17 = sphi 0, %s19
    %s20 = sphi 0, %s17
    %s21 = sphi 0, %s20
    %s37 = sphi 0, %s21
    %s41 = sphi 0, %s41
    %s43 = sphi 0, %s41
    %s44 = sphi 0, %s43
    %s58 = sphi 0, %s44
  $region4: #{preact_bn_resblock4_forward.8} parent=0 // loop_header_branch
    %10 = sbr.rel (%p8) target = $region8
  $region5: #{preact_bn_resblock4_forward.8} parent=0 // loop_body
    %s12 = ssub.s32 %s7, 1
    %s13 = ssub.s32 %s7, 2
    %s14 = sadd.s32 %s7, 1
    %s15 = ssub.s32 %s7, %s14
    %p16 = scmp.eq.s32.totalorder %s15, 0
    %s18 = sadd.s32 %s17, 1
    %s19 = scalar_select %p16, %s17, %s18
    %p22 = pneg %p16
    %p23 = scmp.eq.s32.totalorder %s7, 1
    %p24 = por %p22, %p23
    %p25 = scmp.ne.s32.totalorder %s17, %s20
    %p26 = scmp.eq.s32.totalorder %s7, 0
    %p27 = por %p25, %p26
    %p28 = scmp.ne.s32.totalorder %s17, %s20
    %p29 = scmp.eq.s32.totalorder %s12, 1
    %p30 = por %p28, %p29
    %p31 = scmp.ne.s32.totalorder %s20, %s21
    %p32 = scmp.eq.s32.totalorder %s12, 0
    %p33 = por %p31, %p32
    %p34 = scmp.ne.s32.totalorder %s20, %s21
    %p35 = scmp.eq.s32.totalorder %s13, 1
    %p36 = por %p34, %p35
    %p38 = scmp.ne.s32.totalorder %s21, %s37
    %p39 = scmp.eq.s32.totalorder %s13, 0
    %p40 = por %p38, %p39
    %s42 = sadd.s32 %s41, 1
    %p45 = scmp.eq.s32.totalorder %s7, 1
    %p46 = scmp.ne.s32.totalorder %s41, %s43
    %p47 = scmp.eq.s32.totalorder %s7, 0
    %p48 = por %p46, %p47
    %p49 = scmp.ne.s32.totalorder %s41, %s43
    %p50 = scmp.eq.s32.totalorder %s12, 1
    %p51 = por %p49, %p50
    %p52 = scmp.ne.s32.totalorder %s43, %s44
    %p53 = scmp.eq.s32.totalorder %s12, 0
    %p54 = por %p52, %p53
    %p55 = scmp.ne.s32.totalorder %s43, %s44
    %p56 = scmp.eq.s32.totalorder %s13, 1
    %p57 = por %p55, %p56
    %p59 = scmp.ne.s32.totalorder %s44, %s58
    %p60 = scmp.eq.s32.totalorder %s13, 0
    %p61 = por %p59, %p60
    %p62 = scmp.le.s32.totalorder 1, %s7
    %p63 = scmp.lt.s32.totalorder %s7, 3
    %p64 = pnand %p62, %p63
    %p65 = pneg %p64
    // Predicated region
    $region9: #{preact_bn_resblock4_forward.8} parent=5 // pred_check
      _
    $region10: #{preact_bn_resblock4_forward.8} parent=5 // pred_check_branch
      %67 = sbr.rel (%p64) target = $region12
    $region11: #{preact_bn_resblock4_forward.8} parent=5 // pred_region
      %s68 = ssub.s32 %s7, 1
    $region12: #{preact_bn_resblock4_forward.8} parent=5 // pred_fallthru
      _
    %p69 = scmp.lt.s32.totalorder %s7, 2
    // Predicated region
    $region13: #{preact_bn_resblock4_forward.8} parent=5 // pred_check
      %p70 = pneg %p69
    $region14: #{preact_bn_resblock4_forward.8} parent=5 // pred_check_branch
      %72 = sbr.rel (%p70) target = $region16
    $region15: #{preact_bn_resblock4_forward.8} parent=5 // pred_region
      // Predicated region
      $region17: #{preact_bn_resblock4_forward.8} parent=15 // pred_check
        %p73 = pneg %p27
      $region18: #{preact_bn_resblock4_forward.8} parent=15 // pred_check_branch
        %75 = sbr.rel (%p73) target = $region20
      $region19: #{preact_bn_resblock4_forward.8} parent=15 // pred_region
        %s76 = smul.u32 32, %s7
        %p77 = scmp.lt.s32.totalorder %s76, 63
        %s78 = scalar_select %p77, %s76, 63
        %s79 = smul.addr %s78, 8
        %s80 = scalar_lea.vmem %s0, %s79
        %s81 = smul.u32 32, %s7
      $region20: #{preact_bn_resblock4_forward.8} parent=15 // pred_fallthru
        _
    $region16: #{preact_bn_resblock4_forward.8} parent=5 // pred_fallthru
      _
    %p82 = scmp.le.s32.totalorder 1, %s7
    %p83 = scmp.lt.s32.totalorder %s7, 3
    %p84 = pnand %p82, %p83
    %p85 = pneg %p84
    // Predicated region
    $region21: #{preact_bn_resblock4_forward.8} parent=5 // pred_check
      _
    $region22: #{preact_bn_resblock4_forward.8} parent=5 // pred_check_branch
      %87 = sbr.rel (%p84) target = $region24
    $region23: #{preact_bn_resblock4_forward.8} parent=5 // pred_region
      %s88 = ssub.s32 %s7, 1
      %s89 = smul.u32 32, %s12
      %p90 = scmp.lt.s32.totalorder %s89, 63
      %s91 = scalar_select %p90, %s89, 63
      %s92 = smul.addr %s91, 8
      %s93 = scalar_lea.vmem %s0, %s92
      %p94 = pneg %p33
      %p95 = pneg %p30
      %p96 = pneg %p54
      %p97 = pneg %p51
      %s98 = smul.u32 32, %s12
      %p99 = scmp.lt.s32.totalorder %s98, 63
      %s100 = scalar_select %p99, %s98, 63
      %s101 = smul.addr %s100, 8
      %s102 = scalar_lea.vmem %s0, %s101
      %s103 = smul.u32 32, %s12
      %p104 = scmp.eq.s32.totalorder %s12, 0
      // Predicated region
      $region25: #{preact_bn_resblock4_forward.8} parent=23 // pred_check
        %p105 = pneg %p104
      $region26: #{preact_bn_resblock4_forward.8} parent=23 // pred_check_branch
        %107 = sbr.rel (%p105) target = $region28
      $region27: #{preact_bn_resblock4_forward.8} parent=23 // pred_region
        %108 = vst [vmem:[#allocation2] sm:$0x3] 0.0
      $region28: #{preact_bn_resblock4_forward.8} parent=23 // pred_fallthru
        _
      %v109 = vld [vmem:[%s102] sm:$0xff]
      %v110 = vld [vmem:[%s102 + $0x8] sm:$0xff]
      %v111 = vld [vmem:[%s102 + $0x10] sm:$0xff]
      %v112 = vld [vmem:[%s102 + $0x18] sm:$0xff]
      %v113 = vld [vmem:[%s102 + $0x20] sm:$0xff]
      %v114 = vld [vmem:[%s102 + $0x28] sm:$0xff]
      %v115 = vld [vmem:[%s102 + $0x30] sm:$0xff]
      %v116 = vld [vmem:[%s102 + $0x38] sm:$0xff]
      %v117 = vld [vmem:[%s102 + $0x40] sm:$0xff]
      %v118 = vld [vmem:[%s102 + $0x48] sm:$0xff]
      %v119 = vld [vmem:[%s102 + $0x50] sm:$0xff]
      %v120 = vld [vmem:[%s102 + $0x58] sm:$0xff]
      %v121 = vld [vmem:[%s102 + $0x60] sm:$0xff]
      %v122 = vld [vmem:[%s102 + $0x68] sm:$0xff]
      %v123 = vld [vmem:[%s102 + $0x70] sm:$0xff]
      %v124 = vld [vmem:[%s102 + $0x78] sm:$0xff]
      %v125 = vld [vmem:[%s102 + $0x80] sm:$0xff]
      %v126 = vld [vmem:[%s102 + $0x88] sm:$0xff]
      %v127 = vld [vmem:[%s102 + $0x90] sm:$0xff]
      %v128 = vld [vmem:[%s102 + $0x98] sm:$0xff]
      %v129 = vld [vmem:[%s102 + $0xa0] sm:$0xff]
      %v130 = vld [vmem:[%s102 + $0xa8] sm:$0xff]
      %v131 = vld [vmem:[%s102 + $0xb0] sm:$0xff]
      %v132 = vld [vmem:[%s102 + $0xb8] sm:$0xff]
      %v133 = vld [vmem:[%s102 + $0xc0] sm:$0xff]
      %v134 = vld [vmem:[%s102 + $0xc8] sm:$0xff]
      %v135 = vld [vmem:[%s102 + $0xd0] sm:$0xff]
      %v136 = vld [vmem:[%s102 + $0xd8] sm:$0xff]
      %v137 = vld [vmem:[%s102 + $0xe0] sm:$0xff]
      %v138 = vld [vmem:[%s102 + $0xe8] sm:$0xff]
      %v139 = vld [vmem:[%s102 + $0xf0] sm:$0xff]
      %v140 = vld [vmem:[%s102 + $0xf8] sm:$0xff]
      %v141 = vadd.f32 %v109, %v110
      %v142 = vadd.f32 %v141, %v111
      %v143 = vadd.f32 %v142, %v112
      %v144 = vadd.f32 %v143, %v113
      %v145 = vadd.f32 %v144, %v114
      %v146 = vadd.f32 %v145, %v115
      %v147 = vadd.f32 %v146, %v116
      %v148 = vadd.f32 %v147, %v117
      %v149 = vadd.f32 %v148, %v118
      %v150 = vadd.f32 %v149, %v119
      %v151 = vadd.f32 %v150, %v120
      %v152 = vadd.f32 %v151, %v121
      %v153 = vadd.f32 %v152, %v122
      %v154 = vadd.f32 %v153, %v123
      %v155 = vadd.f32 %v154, %v124
      %v156 = vadd.f32 %v155, %v125
      %v157 = vadd.f32 %v156, %v126
      %v158 = vadd.f32 %v157, %v127
      %v159 = vadd.f32 %v158, %v128
      %v160 = vadd.f32 %v159, %v129
      %v161 = vadd.f32 %v160, %v130
      %v162 = vadd.f32 %v161, %v131
      %v163 = vadd.f32 %v162, %v132
      %v164 = vadd.f32 %v163, %v133
      %v165 = vadd.f32 %v164, %v134
      %v166 = vadd.f32 %v165, %v135
      %v167 = vadd.f32 %v166, %v136
      %v168 = vadd.f32 %v167, %v137
      %v169 = vadd.f32 %v168, %v138
      %v170 = vadd.f32 %v169, %v139
      %v171 = vadd.f32 %v170, %v140
      %v172 = vrot.slane %v171, 4
      %v173 = vadd.f32 %v171, %v172
      %v174 = vrot.slane %v173, 2
      %v175 = vadd.f32 %v173, %v174
      %v176 = vrot.slane %v175, 1
      %v177 = vadd.f32 %v175, %v176
      %v178 = vmul.f32 %v109, %v109
      %v179 = vmul.f32 %v110, %v110
      %v180 = vmul.f32 %v111, %v111
      %v181 = vmul.f32 %v112, %v112
      %v182 = vmul.f32 %v113, %v113
      %v183 = vmul.f32 %v114, %v114
      %v184 = vmul.f32 %v115, %v115
      %v185 = vmul.f32 %v116, %v116
      %v186 = vmul.f32 %v117, %v117
      %v187 = vmul.f32 %v118, %v118
      %v188 = vmul.f32 %v119, %v119
      %v189 = vmul.f32 %v120, %v120
      %v190 = vmul.f32 %v121, %v121
      %v191 = vmul.f32 %v122, %v122
      %v192 = vmul.f32 %v123, %v123
      %v193 = vmul.f32 %v124, %v124
      %v194 = vmul.f32 %v125, %v125
      %v195 = vmul.f32 %v126, %v126
      %v196 = vmul.f32 %v127, %v127
      %v197 = vmul.f32 %v128, %v128
      %v198 = vmul.f32 %v129, %v129
      %v199 = vmul.f32 %v130, %v130
      %v200 = vmul.f32 %v131, %v131
      %v201 = vmul.f32 %v132, %v132
      %v202 = vmul.f32 %v133, %v133
      %v203 = vmul.f32 %v134, %v134
      %v204 = vmul.f32 %v135, %v135
      %v205 = vmul.f32 %v136, %v136
      %v206 = vmul.f32 %v137, %v137
      %v207 = vmul.f32 %v138, %v138
      %v208 = vmul.f32 %v139, %v139
      %v209 = vmul.f32 %v140, %v140
      %v210 = vadd.f32 %v178, %v179
      %v211 = vadd.f32 %v210, %v180
      %v212 = vadd.f32 %v211, %v181
      %v213 = vadd.f32 %v212, %v182
      %v214 = vadd.f32 %v213, %v183
      %v215 = vadd.f32 %v214, %v184
      %v216 = vadd.f32 %v215, %v185
      %v217 = vadd.f32 %v216, %v186
      %v218 = vadd.f32 %v217, %v187
      %v219 = vadd.f32 %v218, %v188
      %v220 = vadd.f32 %v219, %v189
      %v221 = vadd.f32 %v220, %v190
      %v222 = vadd.f32 %v221, %v191
      %v223 = vadd.f32 %v222, %v192
      %v224 = vadd.f32 %v223, %v193
      %v225 = vadd.f32 %v224, %v194
      %v226 = vadd.f32 %v225, %v195
      %v227 = vadd.f32 %v226, %v196
      %v228 = vadd.f32 %v227, %v197
      %v229 = vadd.f32 %v228, %v198
      %v230 = vadd.f32 %v229, %v199
      %v231 = vadd.f32 %v230, %v200
      %v232 = vadd.f32 %v231, %v201
      %v233 = vadd.f32 %v232, %v202
      %v234 = vadd.f32 %v233, %v203
      %v235 = vadd.f32 %v234, %v204
      %v236 = vadd.f32 %v235, %v205
      %v237 = vadd.f32 %v236, %v206
      %v238 = vadd.f32 %v237, %v207
      %v239 = vadd.f32 %v238, %v208
      %v240 = vadd.f32 %v239, %v209
      %v241 = vrot.slane %v240, 4
      %v242 = vadd.f32 %v240, %v241
      %v243 = vrot.slane %v242, 2
      %v244 = vadd.f32 %v242, %v243
      %v245 = vrot.slane %v244, 1
      %v246 = vadd.f32 %v244, %v245
      %v247 = vld [vmem:[#allocation2] sm:$0x3]
      %vm248 = vcmask 1040384
      %v249 = vsel %vm248, %v177, %v246
      %v250 = vadd.f32 %v247, %v249
      %251 = vst [vmem:[#allocation2] sm:$0x3] %v250
      %v252 = vld [vmem:[#allocation2] sm:$0x3]
      %253 = vst [vmem:[%s1] sm:$0x3] %v252
      // Predicated region
      $region29: #{preact_bn_resblock4_forward.8} parent=23 // pred_check
        %p254 = pneg %p51
      $region30: #{preact_bn_resblock4_forward.8} parent=23 // pred_check_branch
        %256 = sbr.rel (%p254) target = $region32
      $region31: #{preact_bn_resblock4_forward.8} parent=23 // pred_region
        _
      $region32: #{preact_bn_resblock4_forward.8} parent=23 // pred_fallthru
        _
      // Predicated region
      $region33: #{preact_bn_resblock4_forward.8} parent=23 // pred_check
        %p257 = pneg %p51
      $region34: #{preact_bn_resblock4_forward.8} parent=23 // pred_check_branch
        %259 = sbr.rel (%p257) target = $region36
      $region35: #{preact_bn_resblock4_forward.8} parent=23 // pred_region
        _
      $region36: #{preact_bn_resblock4_forward.8} parent=23 // pred_fallthru
        _
    $region24: #{preact_bn_resblock4_forward.8} parent=5 // pred_fallthru
      _
    %p260 = scmp.le.s32.totalorder 2, %s7
    // Predicated region
    $region37: #{preact_bn_resblock4_forward.8} parent=5 // pred_check
      %p261 = pneg %p260
    $region38: #{preact_bn_resblock4_forward.8} parent=5 // pred_check_branch
      %263 = sbr.rel (%p261) target = $region40
    $region39: #{preact_bn_resblock4_forward.8} parent=5 // pred_region
      %s264 = ssub.s32 %s7, 2
    $region40: #{preact_bn_resblock4_forward.8} parent=5 // pred_fallthru
      _
  $region6: #{preact_bn_resblock4_forward.8} parent=0 // loop_footer
    %s11 = sadd.s32 1, %s7
  $region7: #{preact_bn_resblock4_forward.8} parent=0 // loop_footer_branch
    %6 = sbr.rel target = $region3
  $region8: #{preact_bn_resblock4_forward.8} parent=0 // loop_exit
    _

// kernel: preact_bn_resblock4_forward.9
$region0: #{preact_bn_resblock4_forward.9}
  #allocation0 [shape = 'u32[]', space=smem, size = 0x4, offset = 0x4, fixed_abs, tag = 'smem constant byte address 0x4 - core index']
  #allocation1 [shape = 'u32[144,128]{1,0:T(1,128)}', space=vmem, size = 0x12000, scoped, tag = 'internal scratch']
  %s0 = inlined_call_operand.vmem [shape: f32[2,18,18,128], index: 0, kind: input, shape index: {}, may-alias: {0,1,2}]
  %s1 = inlined_call_operand.vmem [shape: f32[2,18,18,128], index: 1, kind: input, shape index: {}, may-alias: {0,1,2}]
  %s2 = inlined_call_operand.vmem [shape: f32[2,18,18,128], index: 2, kind: input, shape index: {}, may-alias: {0,1,2}]
  %s3 = inlined_call_operand.vmem [shape: f32[1,128], index: 3, kind: input, shape index: {}]
  %s4 = inlined_call_operand.vmem [shape: f32[1,128], index: 4, kind: input, shape index: {}]
  %s5 = inlined_call_operand.vmem [shape: f32[1,128], index: 5, kind: input, shape index: {}]
  %s6 = inlined_call_operand.vmem [shape: f32[1,128], index: 6, kind: input, shape index: {}]
  %s7 = inlined_call_operand.vmem [shape: f32[1152,128], index: 7, kind: input, shape index: {}]
  %s8 = inlined_call_operand.vmem [shape: f32[1,128], index: 8, kind: input, shape index: {}]
  %s9 = inlined_call_operand.vmem [shape: f32[2,16,16,128], index: 9, kind: output, shape index: {}]
  %s10 = sld [smem:[#allocation0]]
  $region69: #{preact_bn_resblock4_forward.9} parent=0
    _
  %s12 = ssub.s32 1, %s10
  %s13 = scalar_select 0, %s12, %s10
  loop: start=0, step=1, limit=34
  $region2: #{preact_bn_resblock4_forward.9} parent=0 // loop_pre_header
    _
  $region3: #{preact_bn_resblock4_forward.9} parent=0 // loop_header
    %s15 = sphi 0, %s19
    %p16 = scmp.ge.s32.totalorder %s15, 34
    %s22 = sphi 0, %s34
    %s23 = sphi 0, %s30
    %s24 = sphi 0, %s22
    %s25 = sphi 0, %s23
    %s26 = sphi 0, %s24
    %s27 = sphi 0, %s25
    %s39 = sphi 0, %s41
    %s42 = sphi 0, %s39
    %s43 = sphi 0, %s42
    %s59 = sphi 0, %s43
    %s69 = sphi 0, %s71
    %s72 = sphi 0, %s69
    %s73 = sphi 0, %s72
    %s89 = sphi 0, %s73
    %s99 = sphi 0, %s101
    %s102 = sphi 0, %s99
    %s103 = sphi 0, %s102
    %s119 = sphi 0, %s103
    %s123 = sphi 0, %s123
    %s125 = sphi 0, %s123
    %s126 = sphi 0, %s125
    %s140 = sphi 0, %s126
    %s144 = sphi 0, %s144
    %s146 = sphi 0, %s144
    %s147 = sphi 0, %s146
    %s161 = sphi 0, %s147
    %s165 = sphi 0, %s165
    %s167 = sphi 0, %s165
    %s168 = sphi 0, %s167
    %s182 = sphi 0, %s168
    %s186 = sphi 0, %s186
    %s188 = sphi 0, %s186
    %s189 = sphi 0, %s188
    %s203 = sphi 0, %s189
    %s207 = sphi 0, %s207
    %s209 = sphi 0, %s207
    %s210 = sphi 0, %s209
    %s224 = sphi 0, %s210
    %s228 = sphi 0, %s228
    %s230 = sphi 0, %s228
    %s231 = sphi 0, %s230
    %s245 = sphi 0, %s231
    %s253 = sphi 0, %s255
    %s256 = sphi 0, %s253
    %s257 = sphi 0, %s256
    %s273 = sphi 0, %s257
  $region4: #{preact_bn_resblock4_forward.9} parent=0 // loop_header_branch
    %18 = sbr.rel (%p16) target = $region8
  $region5: #{preact_bn_resblock4_forward.9} parent=0 // loop_body
    %s20 = ssub.s32 %s15, 1
    %s21 = ssub.s32 %s15, 2
    %s28 = sadd.s32 1, %s23
    %p29 = scmp.ge.s32.totalorder %s28, 16
    %s30 = scalar_select %p29, 0, %s28
    %s31 = sadd.s32 1, %s22
    %s32 = scalar_select %p29, %s31, %s22
    %p33 = scmp.ge.s32.totalorder %s32, 2
    %s34 = scalar_select %p33, 0, %s32
    %s35 = ssub.s32 %s22, %s34
    %s36 = ssub.s32 %s23, %s30
    %s37 = sor.u32 %s35, %s36
    %p38 = scmp.eq.s32.totalorder %s37, 0
    %s40 = sadd.s32 %s39, 1
    %s41 = scalar_select %p38, %s39, %s40
    %p44 = pneg %p38
    %p45 = scmp.eq.s32.totalorder %s15, 31
    %p46 = por %p44, %p45
    %p47 = scmp.ne.s32.totalorder %s39, %s42
    %p48 = scmp.eq.s32.totalorder %s15, 0
    %p49 = por %p47, %p48
    %p50 = scmp.ne.s32.totalorder %s39, %s42
    %p51 = scmp.eq.s32.totalorder %s20, 31
    %p52 = por %p50, %p51
    %p53 = scmp.ne.s32.totalorder %s42, %s43
    %p54 = scmp.eq.s32.totalorder %s20, 0
    %p55 = por %p53, %p54
    %p56 = scmp.ne.s32.totalorder %s42, %s43
    %p57 = scmp.eq.s32.totalorder %s21, 31
    %p58 = por %p56, %p57
    %p60 = scmp.ne.s32.totalorder %s43, %s59
    %p61 = scmp.eq.s32.totalorder %s21, 0
    %p62 = por %p60, %p61
    %s63 = sadd.s32 %s23, 1
    %s64 = sadd.s32 %s30, 1
    %s65 = ssub.s32 %s22, %s34
    %s66 = ssub.s32 %s63, %s64
    %s67 = sor.u32 %s65, %s66
    %p68 = scmp.eq.s32.totalorder %s67, 0
    %s70 = sadd.s32 %s69, 1
    %s71 = scalar_select %p68, %s69, %s70
    %p74 = pneg %p68
    %p75 = scmp.eq.s32.totalorder %s15, 31
    %p76 = por %p74, %p75
    %p77 = scmp.ne.s32.totalorder %s69, %s72
    %p78 = scmp.eq.s32.totalorder %s15, 0
    %p79 = por %p77, %p78
    %p80 = scmp.ne.s32.totalorder %s69, %s72
    %p81 = scmp.eq.s32.totalorder %s20, 31
    %p82 = por %p80, %p81
    %p83 = scmp.ne.s32.totalorder %s72, %s73
    %p84 = scmp.eq.s32.totalorder %s20, 0
    %p85 = por %p83, %p84
    %p86 = scmp.ne.s32.totalorder %s72, %s73
    %p87 = scmp.eq.s32.totalorder %s21, 31
    %p88 = por %p86, %p87
    %p90 = scmp.ne.s32.totalorder %s73, %s89
    %p91 = scmp.eq.s32.totalorder %s21, 0
    %p92 = por %p90, %p91
    %s93 = sadd.s32 %s23, 2
    %s94 = sadd.s32 %s30, 2
    %s95 = ssub.s32 %s22, %s34
    %s96 = ssub.s32 %s93, %s94
    %s97 = sor.u32 %s95, %s96
    %p98 = scmp.eq.s32.totalorder %s97, 0
    %s100 = sadd.s32 %s99, 1
    %s101 = scalar_select %p98, %s99, %s100
    %p104 = pneg %p98
    %p105 = scmp.eq.s32.totalorder %s15, 31
    %p106 = por %p104, %p105
    %p107 = scmp.ne.s32.totalorder %s99, %s102
    %p108 = scmp.eq.s32.totalorder %s15, 0
    %p109 = por %p107, %p108
    %p110 = scmp.ne.s32.totalorder %s99, %s102
    %p111 = scmp.eq.s32.totalorder %s20, 31
    %p112 = por %p110, %p111
    %p113 = scmp.ne.s32.totalorder %s102, %s103
    %p114 = scmp.eq.s32.totalorder %s20, 0
    %p115 = por %p113, %p114
    %p116 = scmp.ne.s32.totalorder %s102, %s103
    %p117 = scmp.eq.s32.totalorder %s21, 31
    %p118 = por %p116, %p117
    %p120 = scmp.ne.s32.totalorder %s103, %s119
    %p121 = scmp.eq.s32.totalorder %s21, 0
    %p122 = por %p120, %p121
    %s124 = sadd.s32 %s123, 1
    %p127 = scmp.eq.s32.totalorder %s15, 31
    %p128 = scmp.ne.s32.totalorder %s123, %s125
    %p129 = scmp.eq.s32.totalorder %s15, 0
    %p130 = por %p128, %p129
    %p131 = scmp.ne.s32.totalorder %s123, %s125
    %p132 = scmp.eq.s32.totalorder %s20, 31
    %p133 = por %p131, %p132
    %p134 = scmp.ne.s32.totalorder %s125, %s126
    %p135 = scmp.eq.s32.totalorder %s20, 0
    %p136 = por %p134, %p135
    %p137 = scmp.ne.s32.totalorder %s125, %s126
    %p138 = scmp.eq.s32.totalorder %s21, 31
    %p139 = por %p137, %p138
    %p141 = scmp.ne.s32.totalorder %s126, %s140
    %p142 = scmp.eq.s32.totalorder %s21, 0
    %p143 = por %p141, %p142
    %s145 = sadd.s32 %s144, 1
    %p148 = scmp.eq.s32.totalorder %s15, 31
    %p149 = scmp.ne.s32.totalorder %s144, %s146
    %p150 = scmp.eq.s32.totalorder %s15, 0
    %p151 = por %p149, %p150
    %p152 = scmp.ne.s32.totalorder %s144, %s146
    %p153 = scmp.eq.s32.totalorder %s20, 31
    %p154 = por %p152, %p153
    %p155 = scmp.ne.s32.totalorder %s146, %s147
    %p156 = scmp.eq.s32.totalorder %s20, 0
    %p157 = por %p155, %p156
    %p158 = scmp.ne.s32.totalorder %s146, %s147
    %p159 = scmp.eq.s32.totalorder %s21, 31
    %p160 = por %p158, %p159
    %p162 = scmp.ne.s32.totalorder %s147, %s161
    %p163 = scmp.eq.s32.totalorder %s21, 0
    %p164 = por %p162, %p163
    %s166 = sadd.s32 %s165, 1
    %p169 = scmp.eq.s32.totalorder %s15, 31
    %p170 = scmp.ne.s32.totalorder %s165, %s167
    %p171 = scmp.eq.s32.totalorder %s15, 0
    %p172 = por %p170, %p171
    %p173 = scmp.ne.s32.totalorder %s165, %s167
    %p174 = scmp.eq.s32.totalorder %s20, 31
    %p175 = por %p173, %p174
    %p176 = scmp.ne.s32.totalorder %s167, %s168
    %p177 = scmp.eq.s32.totalorder %s20, 0
    %p178 = por %p176, %p177
    %p179 = scmp.ne.s32.totalorder %s167, %s168
    %p180 = scmp.eq.s32.totalorder %s21, 31
    %p181 = por %p179, %p180
    %p183 = scmp.ne.s32.totalorder %s168, %s182
    %p184 = scmp.eq.s32.totalorder %s21, 0
    %p185 = por %p183, %p184
    %s187 = sadd.s32 %s186, 1
    %p190 = scmp.eq.s32.totalorder %s15, 31
    %p191 = scmp.ne.s32.totalorder %s186, %s188
    %p192 = scmp.eq.s32.totalorder %s15, 0
    %p193 = por %p191, %p192
    %p194 = scmp.ne.s32.totalorder %s186, %s188
    %p195 = scmp.eq.s32.totalorder %s20, 31
    %p196 = por %p194, %p195
    %p197 = scmp.ne.s32.totalorder %s188, %s189
    %p198 = scmp.eq.s32.totalorder %s20, 0
    %p199 = por %p197, %p198
    %p200 = scmp.ne.s32.totalorder %s188, %s189
    %p201 = scmp.eq.s32.totalorder %s21, 31
    %p202 = por %p200, %p201
    %p204 = scmp.ne.s32.totalorder %s189, %s203
    %p205 = scmp.eq.s32.totalorder %s21, 0
    %p206 = por %p204, %p205
    %s208 = sadd.s32 %s207, 1
    %p211 = scmp.eq.s32.totalorder %s15, 31
    %p212 = scmp.ne.s32.totalorder %s207, %s209
    %p213 = scmp.eq.s32.totalorder %s15, 0
    %p214 = por %p212, %p213
    %p215 = scmp.ne.s32.totalorder %s207, %s209
    %p216 = scmp.eq.s32.totalorder %s20, 31
    %p217 = por %p215, %p216
    %p218 = scmp.ne.s32.totalorder %s209, %s210
    %p219 = scmp.eq.s32.totalorder %s20, 0
    %p220 = por %p218, %p219
    %p221 = scmp.ne.s32.totalorder %s209, %s210
    %p222 = scmp.eq.s32.totalorder %s21, 31
    %p223 = por %p221, %p222
    %p225 = scmp.ne.s32.totalorder %s210, %s224
    %p226 = scmp.eq.s32.totalorder %s21, 0
    %p227 = por %p225, %p226
    %s229 = sadd.s32 %s228, 1
    %p232 = scmp.eq.s32.totalorder %s15, 31
    %p233 = scmp.ne.s32.totalorder %s228, %s230
    %p234 = scmp.eq.s32.totalorder %s15, 0
    %p235 = por %p233, %p234
    %p236 = scmp.ne.s32.totalorder %s228, %s230
    %p237 = scmp.eq.s32.totalorder %s20, 31
    %p238 = por %p236, %p237
    %p239 = scmp.ne.s32.totalorder %s230, %s231
    %p240 = scmp.eq.s32.totalorder %s20, 0
    %p241 = por %p239, %p240
    %p242 = scmp.ne.s32.totalorder %s230, %s231
    %p243 = scmp.eq.s32.totalorder %s21, 31
    %p244 = por %p242, %p243
    %p246 = scmp.ne.s32.totalorder %s231, %s245
    %p247 = scmp.eq.s32.totalorder %s21, 0
    %p248 = por %p246, %p247
    %s249 = ssub.s32 %s22, %s34
    %s250 = ssub.s32 %s23, %s30
    %s251 = sor.u32 %s249, %s250
    %p252 = scmp.eq.s32.totalorder %s251, 0
    %s254 = sadd.s32 %s253, 1
    %s255 = scalar_select %p252, %s253, %s254
    %p258 = pneg %p252
    %p259 = scmp.eq.s32.totalorder %s15, 31
    %p260 = por %p258, %p259
    %p261 = scmp.ne.s32.totalorder %s253, %s256
    %p262 = scmp.eq.s32.totalorder %s15, 0
    %p263 = por %p261, %p262
    %p264 = scmp.ne.s32.totalorder %s253, %s256
    %p265 = scmp.eq.s32.totalorder %s20, 31
    %p266 = por %p264, %p265
    %p267 = scmp.ne.s32.totalorder %s256, %s257
    %p268 = scmp.eq.s32.totalorder %s20, 0
    %p269 = por %p267, %p268
    %p270 = scmp.ne.s32.totalorder %s256, %s257
    %p271 = scmp.eq.s32.totalorder %s21, 31
    %p272 = por %p270, %p271
    %p274 = scmp.ne.s32.totalorder %s257, %s273
    %p275 = scmp.eq.s32.totalorder %s21, 0
    %p276 = por %p274, %p275
    %p277 = scmp.le.s32.totalorder 1, %s15
    %p278 = scmp.lt.s32.totalorder %s15, 33
    %p279 = pnand %p277, %p278
    %p280 = pneg %p279
    // Predicated region
    $region9: #{preact_bn_resblock4_forward.9} parent=5 // pred_check
      _
    $region10: #{preact_bn_resblock4_forward.9} parent=5 // pred_check_branch
      %282 = sbr.rel (%p279) target = $region12
    $region11: #{preact_bn_resblock4_forward.9} parent=5 // pred_region
      %s283 = ssub.s32 %s15, 1
      // Predicated region
      $region13: #{preact_bn_resblock4_forward.9} parent=11 // pred_check
        %p284 = pneg %p136
      $region14: #{preact_bn_resblock4_forward.9} parent=11 // pred_check_branch
        %286 = sbr.rel (%p284) target = $region16
      $region15: #{preact_bn_resblock4_forward.9} parent=11 // pred_region
        _
      $region16: #{preact_bn_resblock4_forward.9} parent=11 // pred_fallthru
        _
      // Predicated region
      $region17: #{preact_bn_resblock4_forward.9} parent=11 // pred_check
        %p287 = pneg %p157
      $region18: #{preact_bn_resblock4_forward.9} parent=11 // pred_check_branch
        %289 = sbr.rel (%p287) target = $region20
      $region19: #{preact_bn_resblock4_forward.9} parent=11 // pred_region
        _
      $region20: #{preact_bn_resblock4_forward.9} parent=11 // pred_fallthru
        _
      // Predicated region
      $region21: #{preact_bn_resblock4_forward.9} parent=11 // pred_check
        %p290 = pneg %p178
      $region22: #{preact_bn_resblock4_forward.9} parent=11 // pred_check_branch
        %292 = sbr.rel (%p290) target = $region24
      $region23: #{preact_bn_resblock4_forward.9} parent=11 // pred_region
        _
      $region24: #{preact_bn_resblock4_forward.9} parent=11 // pred_fallthru
        _
      // Predicated region
      $region25: #{preact_bn_resblock4_forward.9} parent=11 // pred_check
        %p293 = pneg %p199
      $region26: #{preact_bn_resblock4_forward.9} parent=11 // pred_check_branch
        %295 = sbr.rel (%p293) target = $region28
      $region27: #{preact_bn_resblock4_forward.9} parent=11 // pred_region
        _
      $region28: #{preact_bn_resblock4_forward.9} parent=11 // pred_fallthru
        _
      // Predicated region
      $region29: #{preact_bn_resblock4_forward.9} parent=11 // pred_check
        %p296 = pneg %p220
      $region30: #{preact_bn_resblock4_forward.9} parent=11 // pred_check_branch
        %298 = sbr.rel (%p296) target = $region32
      $region31: #{preact_bn_resblock4_forward.9} parent=11 // pred_region
        _
      $region32: #{preact_bn_resblock4_forward.9} parent=11 // pred_fallthru
        _
      // Predicated region
      $region33: #{preact_bn_resblock4_forward.9} parent=11 // pred_check
        %p299 = pneg %p241
      $region34: #{preact_bn_resblock4_forward.9} parent=11 // pred_check_branch
        %301 = sbr.rel (%p299) target = $region36
      $region35: #{preact_bn_resblock4_forward.9} parent=11 // pred_region
        _
      $region36: #{preact_bn_resblock4_forward.9} parent=11 // pred_fallthru
        _
    $region12: #{preact_bn_resblock4_forward.9} parent=5 // pred_fallthru
      _
    %p302 = scmp.lt.s32.totalorder %s15, 32
    // Predicated region
    $region37: #{preact_bn_resblock4_forward.9} parent=5 // pred_check
      %p303 = pneg %p302
    $region38: #{preact_bn_resblock4_forward.9} parent=5 // pred_check_branch
      %305 = sbr.rel (%p303) target = $region40
    $region39: #{preact_bn_resblock4_forward.9} parent=5 // pred_region
      // Predicated region
      $region41: #{preact_bn_resblock4_forward.9} parent=39 // pred_check
        %p306 = pneg %p49
      $region42: #{preact_bn_resblock4_forward.9} parent=39 // pred_check_branch
        %308 = sbr.rel (%p306) target = $region44
      $region43: #{preact_bn_resblock4_forward.9} parent=39 // pred_region
        %p309 = scmp.lt.s32.totalorder %s22, 1
        %s310 = scalar_select %p309, %s22, 1
        %p311 = scmp.lt.s32.totalorder %s23, 17
        %s312 = scalar_select %p311, %s23, 17
        %s313 = smul.addr %s312, 3
        %s314 = smul.addr %s310, 54
        %s315 = sadd.s32 %s313, %s314
        %s316 = smul.addr %s315, 8
        %s317 = scalar_lea.vmem %s0, %s316
      $region44: #{preact_bn_resblock4_forward.9} parent=39 // pred_fallthru
        _
      // Predicated region
      $region45: #{preact_bn_resblock4_forward.9} parent=39 // pred_check
        %p318 = pneg %p79
      $region46: #{preact_bn_resblock4_forward.9} parent=39 // pred_check_branch
        %320 = sbr.rel (%p318) target = $region48
      $region47: #{preact_bn_resblock4_forward.9} parent=39 // pred_region
        %s321 = sadd.s32 %s23, 1
        %p322 = scmp.lt.s32.totalorder %s22, 1
        %s323 = scalar_select %p322, %s22, 1
        %p324 = scmp.lt.s32.totalorder %s321, 17
        %s325 = scalar_select %p324, %s321, 17
        %s326 = smul.addr %s325, 3
        %s327 = smul.addr %s323, 54
        %s328 = sadd.s32 %s326, %s327
        %s329 = smul.addr %s328, 8
        %s330 = scalar_lea.vmem %s1, %s329
        %s331 = sadd.s32 %s23, 1
      $region48: #{preact_bn_resblock4_forward.9} parent=39 // pred_fallthru
        _
      // Predicated region
      $region49: #{preact_bn_resblock4_forward.9} parent=39 // pred_check
        %p332 = pneg %p109
      $region50: #{preact_bn_resblock4_forward.9} parent=39 // pred_check_branch
        %334 = sbr.rel (%p332) target = $region52
      $region51: #{preact_bn_resblock4_forward.9} parent=39 // pred_region
        %s335 = sadd.s32 %s23, 2
        %p336 = scmp.lt.s32.totalorder %s22, 1
        %s337 = scalar_select %p336, %s22, 1
        %p338 = scmp.lt.s32.totalorder %s335, 17
        %s339 = scalar_select %p338, %s335, 17
        %s340 = smul.addr %s339, 3
        %s341 = smul.addr %s337, 54
        %s342 = sadd.s32 %s340, %s341
        %s343 = smul.addr %s342, 8
        %s344 = scalar_lea.vmem %s2, %s343
        %s345 = sadd.s32 %s23, 2
      $region52: #{preact_bn_resblock4_forward.9} parent=39 // pred_fallthru
        _
    $region40: #{preact_bn_resblock4_forward.9} parent=5 // pred_fallthru
      _
    %p346 = scmp.le.s32.totalorder 1, %s15
    %p347 = scmp.lt.s32.totalorder %s15, 33
    %p348 = pnand %p346, %p347
    %p349 = pneg %p348
    // Predicated region
    $region53: #{preact_bn_resblock4_forward.9} parent=5 // pred_check
      _
    $region54: #{preact_bn_resblock4_forward.9} parent=5 // pred_check_branch
      %351 = sbr.rel (%p348) target = $region56
    $region55: #{preact_bn_resblock4_forward.9} parent=5 // pred_region
      %s352 = ssub.s32 %s15, 1
      %p353 = scmp.lt.s32.totalorder %s24, 1
      %s354 = scalar_select %p353, %s24, 1
      %p355 = scmp.lt.s32.totalorder %s25, 17
      %s356 = scalar_select %p355, %s25, 17
      %s357 = smul.addr %s356, 3
      %s358 = smul.addr %s354, 54
      %s359 = sadd.s32 %s357, %s358
      %s360 = smul.addr %s359, 8
      %s361 = scalar_lea.vmem %s0, %s360
      %p362 = pneg %p55
      %p363 = pneg %p52
      %s364 = sadd.s32 %s25, 1
      %p365 = scmp.lt.s32.totalorder %s24, 1
      %s366 = scalar_select %p365, %s24, 1
      %p367 = scmp.lt.s32.totalorder %s364, 17
      %s368 = scalar_select %p367, %s364, 17
      %s369 = smul.addr %s368, 3
      %s370 = smul.addr %s366, 54
      %s371 = sadd.s32 %s369, %s370
      %s372 = smul.addr %s371, 8
      %s373 = scalar_lea.vmem %s1, %s372
      %p374 = pneg %p85
      %p375 = pneg %p82
      %s376 = sadd.s32 %s25, 2
      %p377 = scmp.lt.s32.totalorder %s24, 1
      %s378 = scalar_select %p377, %s24, 1
      %p379 = scmp.lt.s32.totalorder %s376, 17
      %s380 = scalar_select %p379, %s376, 17
      %s381 = smul.addr %s380, 3
      %s382 = smul.addr %s378, 54
      %s383 = sadd.s32 %s381, %s382
      %s384 = smul.addr %s383, 8
      %s385 = scalar_lea.vmem %s2, %s384
      %p386 = pneg %p115
      %p387 = pneg %p112
      %p388 = pneg %p136
      %p389 = pneg %p133
      %p390 = pneg %p157
      %p391 = pneg %p154
      %p392 = pneg %p178
      %p393 = pneg %p175
      %p394 = pneg %p199
      %p395 = pneg %p196
      %p396 = pneg %p220
      %p397 = pneg %p217
      %p398 = pneg %p241
      %p399 = pneg %p238
      %p400 = pneg %p269
      %p401 = pneg %p266
      %p402 = scmp.lt.s32.totalorder %s24, 1
      %s403 = scalar_select %p402, %s24, 1
      %p404 = scmp.lt.s32.totalorder %s25, 15
      %s405 = scalar_select %p404, %s25, 15
      %s406 = smul.addr %s405, 2
      %s407 = smul.addr %s403, 32
      %s408 = sadd.s32 %s406, %s407
      %s409 = smul.addr %s408, 8
      %s410 = scalar_lea.vmem %s9, %s409
      %p411 = scmp.lt.s32.totalorder %s24, 1
      %s412 = scalar_select %p411, %s24, 1
      %p413 = scmp.lt.s32.totalorder %s25, 17
      %s414 = scalar_select %p413, %s25, 17
      %s415 = smul.addr %s414, 3
      %s416 = smul.addr %s412, 54
      %s417 = sadd.s32 %s415, %s416
      %s418 = smul.addr %s417, 8
      %s419 = scalar_lea.vmem %s0, %s418
      %s420 = sadd.s32 %s25, 1
      %p421 = scmp.lt.s32.totalorder %s24, 1
      %s422 = scalar_select %p421, %s24, 1
      %p423 = scmp.lt.s32.totalorder %s420, 17
      %s424 = scalar_select %p423, %s420, 17
      %s425 = smul.addr %s424, 3
      %s426 = smul.addr %s422, 54
      %s427 = sadd.s32 %s425, %s426
      %s428 = smul.addr %s427, 8
      %s429 = scalar_lea.vmem %s1, %s428
      %s430 = sadd.s32 %s25, 1
      %s431 = sadd.s32 %s25, 2
      %p432 = scmp.lt.s32.totalorder %s24, 1
      %s433 = scalar_select %p432, %s24, 1
      %p434 = scmp.lt.s32.totalorder %s431, 17
      %s435 = scalar_select %p434, %s431, 17
      %s436 = smul.addr %s435, 3
      %s437 = smul.addr %s433, 54
      %s438 = sadd.s32 %s436, %s437
      %s439 = smul.addr %s438, 8
      %s440 = scalar_lea.vmem %s2, %s439
      %s441 = sadd.s32 %s25, 2
      %p442 = scmp.lt.s32.totalorder %s24, 1
      %s443 = scalar_select %p442, %s24, 1
      %p444 = scmp.lt.s32.totalorder %s25, 15
      %s445 = scalar_select %p444, %s25, 15
      %s446 = smul.addr %s445, 2
      %s447 = smul.addr %s443, 32
      %s448 = sadd.s32 %s446, %s447
      %s449 = smul.addr %s448, 8
      %s450 = scalar_lea.vmem %s9, %s449
      %v451 = vld [vmem:[%s4] sm:$0x1]
      %v452 = vld [vmem:[%s5] sm:$0x1]
      %v453 = vmul.f32 %v451, %v452
      %v454 = vld [vmem:[%s6] sm:$0x1]
      %v455 = vld [vmem:[%s3] sm:$0x1]
      %v456 = vmul.f32 %v455, %v453
      %v457 = vsub.f32 %v454, %v456
      %v458 = vld [vmem:[%s419] sm:$0xff]
      %v459 = vld [vmem:[%s419 + $0x8] sm:$0xff]
      %v460 = vld [vmem:[%s419 + $0x10] sm:$0x3]
      %v462 = vlaneseq
      %v463 = vshrl.u32 %v462, 7
      %v464 = vsub.s32 0, %v463
      %v465 = vrot.slane %v453, %v464
      %v467 = vmul.f32 %v458, %v465
      %v468 = vmul.f32 %v459, %v465
      %v469 = vmul.f32 %v460, %v465
      %v471 = vlaneseq
      %v472 = vshrl.u32 %v471, 7
      %v473 = vsub.s32 0, %v472
      %v474 = vrot.slane %v457, %v473
      %v476 = vadd.f32 %v467, %v474
      %v477 = vadd.f32 %v468, %v474
      %v478 = vadd.f32 %v469, %v474
      %vm479 = vcmp.ge.f32.partialorder %v476, 0.0
      %vm480 = vcmp.ge.f32.partialorder %v477, 0.0
      %vm481 = vcmp.ge.f32.partialorder %v478, 0.0
      %v482 = vmul.f32 %v476, 0.01
      %v483 = vmul.f32 %v477, 0.01
      %v484 = vmul.f32 %v478, 0.01
      %v485 = vsel %vm479, %v476, %v482
      %v486 = vsel %vm480, %v477, %v483
      %v487 = vsel %vm481, %v478, %v484
      %p488 = scmp.ge.s32.totalorder %s25, 1
      %p489 = scmp.le.s32.totalorder %s25, 16
      %p490 = pnand %p488, %p489
      %p491 = pneg %p490
      %v492 = vlaneseq
      %v493 = vshrl.u32 %v492, 7
      %v494 = vadd.s32 %v493, 8
      %v495 = vadd.s32 %v493, 16
      %vm496 = vcmp.ge.s32.totalorder %v493, 1
      %vm497 = vcmp.ge.s32.totalorder %v494, 1
      %vm498 = vcmp.ge.s32.totalorder %v495, 1
      %vm499 = vcmp.le.s32.totalorder %v493, 16
      %vm500 = vcmp.le.s32.totalorder %v494, 16
      %vm501 = vcmp.le.s32.totalorder %v495, 16
      %vm502 = vmand %vm496, %vm499
      %vm503 = vmand %vm497, %vm500
      %vm504 = vmand %vm498, %vm501
      %s505 = scalar_select %p491, 1, 0
      %v506 = vstv %s505
      %vm507 = vcmp.eq.s32.totalorder %v506, 1
      %vm508 = vmand %vm507, %vm502
      %vm509 = vmand %vm507, %vm503
      %vm510 = vmand %vm507, %vm504
      %v511 = vsel %vm508, %v485, 0.0
      %v512 = vsel %vm509, %v486, 0.0
      %v513 = vsel %vm510, %v487, 0.0
      %v514 = vld [vmem:[%s429] sm:$0xff]
      %v515 = vld [vmem:[%s429 + $0x8] sm:$0xff]
      %v516 = vld [vmem:[%s429 + $0x10] sm:$0x3]
      %v517 = vmul.f32 %v514, %v465
      %v518 = vmul.f32 %v515, %v465
      %v519 = vmul.f32 %v516, %v465
      %v520 = vadd.f32 %v517, %v474
      %v521 = vadd.f32 %v518, %v474
      %v522 = vadd.f32 %v519, %v474
      %vm523 = vcmp.ge.f32.partialorder %v520, 0.0
      %vm524 = vcmp.ge.f32.partialorder %v521, 0.0
      %vm525 = vcmp.ge.f32.partialorder %v522, 0.0
      %v526 = vmul.f32 %v520, 0.01
      %v527 = vmul.f32 %v521, 0.01
      %v528 = vmul.f32 %v522, 0.01
      %v529 = vsel %vm523, %v520, %v526
      %v530 = vsel %vm524, %v521, %v527
      %v531 = vsel %vm525, %v522, %v528
      %s532 = sadd.s32 %s25, 1
      %p533 = scmp.ge.s32.totalorder %s532, 1
      %p534 = scmp.le.s32.totalorder %s532, 16
      %p535 = pnand %p533, %p534
      %p536 = pneg %p535
      %s537 = scalar_select %p536, 1, 0
      %v538 = vstv %s537
      %vm539 = vcmp.eq.s32.totalorder %v538, 1
      %vm540 = vmand %vm539, %vm502
      %vm541 = vmand %vm539, %vm503
      %vm542 = vmand %vm539, %vm504
      %v543 = vsel %vm540, %v529, 0.0
      %v544 = vsel %vm541, %v530, 0.0
      %v545 = vsel %vm542, %v531, 0.0
      %v546 = vld [vmem:[%s440] sm:$0xff]
      %v547 = vld [vmem:[%s440 + $0x8] sm:$0xff]
      %v548 = vld [vmem:[%s440 + $0x10] sm:$0x3]
      %v549 = vmul.f32 %v546, %v465
      %v550 = vmul.f32 %v547, %v465
      %v551 = vmul.f32 %v548, %v465
      %v552 = vadd.f32 %v549, %v474
      %v553 = vadd.f32 %v550, %v474
      %v554 = vadd.f32 %v551, %v474
      %vm555 = vcmp.ge.f32.partialorder %v552, 0.0
      %vm556 = vcmp.ge.f32.partialorder %v553, 0.0
      %vm557 = vcmp.ge.f32.partialorder %v554, 0.0
      %v558 = vmul.f32 %v552, 0.01
      %v559 = vmul.f32 %v553, 0.01
      %v560 = vmul.f32 %v554, 0.01
      %v561 = vsel %vm555, %v552, %v558
      %v562 = vsel %vm556, %v553, %v559
      %v563 = vsel %vm557, %v554, %v560
      %s564 = sadd.s32 %s25, 2
      %p565 = scmp.ge.s32.totalorder %s564, 1
      %p566 = scmp.le.s32.totalorder %s564, 16
      %p567 = pnand %p565, %p566
      %p568 = pneg %p567
      %s569 = scalar_select %p568, 1, 0
      %v570 = vstv %s569
      %vm571 = vcmp.eq.s32.totalorder %v570, 1
      %vm572 = vmand %vm571, %vm502
      %vm573 = vmand %vm571, %vm503
      %vm574 = vmand %vm571, %vm504
      %v575 = vsel %vm572, %v561, 0.0
      %v576 = vsel %vm573, %v562, 0.0
      %v577 = vsel %vm574, %v563, 0.0
      %vm581 = vcmask 1046528
      %v582 = vrot.slane %v511, 1
      %v583 = vrot.slane %v512, 1
      %v584 = vsel %vm581, %v582, %v583
      %v585 = vrot.slane %v513, 1
      %v586 = vsel %vm581, %v583, %v585
      %vm589 = vcmask 1045504
      %v590 = vrot.slane %v511, 2
      %v591 = vrot.slane %v512, 2
      %v592 = vsel %vm589, %v590, %v591
      %v593 = vrot.slane %v513, 2
      %v594 = vsel %vm589, %v591, %v593
      %v600 = vrot.slane %v543, 1
      %v601 = vrot.slane %v544, 1
      %v602 = vsel %vm581, %v600, %v601
      %v603 = vrot.slane %v545, 1
      %v604 = vsel %vm581, %v601, %v603
      %v607 = vrot.slane %v543, 2
      %v608 = vrot.slane %v544, 2
      %v609 = vsel %vm589, %v607, %v608
      %v610 = vrot.slane %v545, 2
      %v611 = vsel %vm589, %v608, %v610
      %v617 = vrot.slane %v575, 1
      %v618 = vrot.slane %v576, 1
      %v619 = vsel %vm581, %v617, %v618
      %v620 = vrot.slane %v577, 1
      %v621 = vsel %vm581, %v618, %v620
      %v624 = vrot.slane %v575, 2
      %v625 = vrot.slane %v576, 2
      %v626 = vsel %vm589, %v624, %v625
      %v627 = vrot.slane %v577, 2
      %v628 = vsel %vm589, %v625, %v627
      %v631 = vld [vmem:[%s7] sm:$0xff]
      %v632 = vld [vmem:[%s7 + $0x8] sm:$0xff]
      %v633 = vld [vmem:[%s7 + $0x10] sm:$0xff]
      %v634 = vld [vmem:[%s7 + $0x18] sm:$0xff]
      %v635 = vld [vmem:[%s7 + $0x20] sm:$0xff]
      %v636 = vld [vmem:[%s7 + $0x28] sm:$0xff]
      %v637 = vld [vmem:[%s7 + $0x30] sm:$0xff]
      %v638 = vld [vmem:[%s7 + $0x38] sm:$0xff]
      %v639 = vld [vmem:[%s7 + $0x40] sm:$0xff]
      %v640 = vld [vmem:[%s7 + $0x48] sm:$0xff]
      %v641 = vld [vmem:[%s7 + $0x50] sm:$0xff]
      %v642 = vld [vmem:[%s7 + $0x58] sm:$0xff]
      %v643 = vld [vmem:[%s7 + $0x60] sm:$0xff]
      %v644 = vld [vmem:[%s7 + $0x68] sm:$0xff]
      %v645 = vld [vmem:[%s7 + $0x70] sm:$0xff]
      %v646 = vld [vmem:[%s7 + $0x78] sm:$0xff]
      %v647 = vld [vmem:[%s7 + $0x80] sm:$0xff]
      %v648 = vld [vmem:[%s7 + $0x88] sm:$0xff]
      %v649 = vld [vmem:[%s7 + $0x90] sm:$0xff]
      %v650 = vld [vmem:[%s7 + $0x98] sm:$0xff]
      %v651 = vld [vmem:[%s7 + $0xa0] sm:$0xff]
      %v652 = vld [vmem:[%s7 + $0xa8] sm:$0xff]
      %v653 = vld [vmem:[%s7 + $0xb0] sm:$0xff]
      %v654 = vld [vmem:[%s7 + $0xb8] sm:$0xff]
      %v655 = vld [vmem:[%s7 + $0xc0] sm:$0xff]
      %v656 = vld [vmem:[%s7 + $0xc8] sm:$0xff]
      %v657 = vld [vmem:[%s7 + $0xd0] sm:$0xff]
      %v658 = vld [vmem:[%s7 + $0xd8] sm:$0xff]
      %v659 = vld [vmem:[%s7 + $0xe0] sm:$0xff]
      %v660 = vld [vmem:[%s7 + $0xe8] sm:$0xff]
      %v661 = vld [vmem:[%s7 + $0xf0] sm:$0xff]
      %v662 = vld [vmem:[%s7 + $0xf8] sm:$0xff]
      %v663 = vld [vmem:[%s7 + $0x100] sm:$0xff]
      %v664 = vld [vmem:[%s7 + $0x108] sm:$0xff]
      %v665 = vld [vmem:[%s7 + $0x110] sm:$0xff]
      %v666 = vld [vmem:[%s7 + $0x118] sm:$0xff]
      %v667 = vld [vmem:[%s7 + $0x120] sm:$0xff]
      %v668 = vld [vmem:[%s7 + $0x128] sm:$0xff]
      %v669 = vld [vmem:[%s7 + $0x130] sm:$0xff]
      %v670 = vld [vmem:[%s7 + $0x138] sm:$0xff]
      %v671 = vld [vmem:[%s7 + $0x140] sm:$0xff]
      %v672 = vld [vmem:[%s7 + $0x148] sm:$0xff]
      %v673 = vld [vmem:[%s7 + $0x150] sm:$0xff]
      %v674 = vld [vmem:[%s7 + $0x158] sm:$0xff]
      %v675 = vld [vmem:[%s7 + $0x160] sm:$0xff]
      %v676 = vld [vmem:[%s7 + $0x168] sm:$0xff]
      %v677 = vld [vmem:[%s7 + $0x170] sm:$0xff]
      %v678 = vld [vmem:[%s7 + $0x178] sm:$0xff]
      %v679 = vld [vmem:[%s7 + $0x180] sm:$0xff]
      %v680 = vld [vmem:[%s7 + $0x188] sm:$0xff]
      %v681 = vld [vmem:[%s7 + $0x190] sm:$0xff]
      %v682 = vld [vmem:[%s7 + $0x198] sm:$0xff]
      %v683 = vld [vmem:[%s7 + $0x1a0] sm:$0xff]
      %v684 = vld [vmem:[%s7 + $0x1a8] sm:$0xff]
      %v685 = vld [vmem:[%s7 + $0x1b0] sm:$0xff]
      %v686 = vld [vmem:[%s7 + $0x1b8] sm:$0xff]
      %v687 = vld [vmem:[%s7 + $0x1c0] sm:$0xff]
      %v688 = vld [vmem:[%s7 + $0x1c8] sm:$0xff]
      %v689 = vld [vmem:[%s7 + $0x1d0] sm:$0xff]
      %v690 = vld [vmem:[%s7 + $0x1d8] sm:$0xff]
      %v691 = vld [vmem:[%s7 + $0x1e0] sm:$0xff]
      %v692 = vld [vmem:[%s7 + $0x1e8] sm:$0xff]
      %v693 = vld [vmem:[%s7 + $0x1f0] sm:$0xff]
      %v694 = vld [vmem:[%s7 + $0x1f8] sm:$0xff]
      %v695 = vld [vmem:[%s7 + $0x200] sm:$0xff]
      %v696 = vld [vmem:[%s7 + $0x208] sm:$0xff]
      %v697 = vld [vmem:[%s7 + $0x210] sm:$0xff]
      %v698 = vld [vmem:[%s7 + $0x218] sm:$0xff]
      %v699 = vld [vmem:[%s7 + $0x220] sm:$0xff]
      %v700 = vld [vmem:[%s7 + $0x228] sm:$0xff]
      %v701 = vld [vmem:[%s7 + $0x230] sm:$0xff]
      %v702 = vld [vmem:[%s7 + $0x238] sm:$0xff]
      %v703 = vld [vmem:[%s7 + $0x240] sm:$0xff]
      %v704 = vld [vmem:[%s7 + $0x248] sm:$0xff]
      %v705 = vld [vmem:[%s7 + $0x250] sm:$0xff]
      %v706 = vld [vmem:[%s7 + $0x258] sm:$0xff]
      %v707 = vld [vmem:[%s7 + $0x260] sm:$0xff]
      %v708 = vld [vmem:[%s7 + $0x268] sm:$0xff]
      %v709 = vld [vmem:[%s7 + $0x270] sm:$0xff]
      %v710 = vld [vmem:[%s7 + $0x278] sm:$0xff]
      %v711 = vld [vmem:[%s7 + $0x280] sm:$0xff]
      %v712 = vld [vmem:[%s7 + $0x288] sm:$0xff]
      %v713 = vld [vmem:[%s7 + $0x290] sm:$0xff]
      %v714 = vld [vmem:[%s7 + $0x298] sm:$0xff]
      %v715 = vld [vmem:[%s7 + $0x2a0] sm:$0xff]
      %v716 = vld [vmem:[%s7 + $0x2a8] sm:$0xff]
      %v717 = vld [vmem:[%s7 + $0x2b0] sm:$0xff]
      %v718 = vld [vmem:[%s7 + $0x2b8] sm:$0xff]
      %v719 = vld [vmem:[%s7 + $0x2c0] sm:$0xff]
      %v720 = vld [vmem:[%s7 + $0x2c8] sm:$0xff]
      %v721 = vld [vmem:[%s7 + $0x2d0] sm:$0xff]
      %v722 = vld [vmem:[%s7 + $0x2d8] sm:$0xff]
      %v723 = vld [vmem:[%s7 + $0x2e0] sm:$0xff]
      %v724 = vld [vmem:[%s7 + $0x2e8] sm:$0xff]
      %v725 = vld [vmem:[%s7 + $0x2f0] sm:$0xff]
      %v726 = vld [vmem:[%s7 + $0x2f8] sm:$0xff]
      %v727 = vld [vmem:[%s7 + $0x300] sm:$0xff]
      %v728 = vld [vmem:[%s7 + $0x308] sm:$0xff]
      %v729 = vld [vmem:[%s7 + $0x310] sm:$0xff]
      %v730 = vld [vmem:[%s7 + $0x318] sm:$0xff]
      %v731 = vld [vmem:[%s7 + $0x320] sm:$0xff]
      %v732 = vld [vmem:[%s7 + $0x328] sm:$0xff]
      %v733 = vld [vmem:[%s7 + $0x330] sm:$0xff]
      %v734 = vld [vmem:[%s7 + $0x338] sm:$0xff]
      %v735 = vld [vmem:[%s7 + $0x340] sm:$0xff]
      %v736 = vld [vmem:[%s7 + $0x348] sm:$0xff]
      %v737 = vld [vmem:[%s7 + $0x350] sm:$0xff]
      %v738 = vld [vmem:[%s7 + $0x358] sm:$0xff]
      %v739 = vld [vmem:[%s7 + $0x360] sm:$0xff]
      %v740 = vld [vmem:[%s7 + $0x368] sm:$0xff]
      %v741 = vld [vmem:[%s7 + $0x370] sm:$0xff]
      %v742 = vld [vmem:[%s7 + $0x378] sm:$0xff]
      %v743 = vld [vmem:[%s7 + $0x380] sm:$0xff]
      %v744 = vld [vmem:[%s7 + $0x388] sm:$0xff]
      %v745 = vld [vmem:[%s7 + $0x390] sm:$0xff]
      %v746 = vld [vmem:[%s7 + $0x398] sm:$0xff]
      %v747 = vld [vmem:[%s7 + $0x3a0] sm:$0xff]
      %v748 = vld [vmem:[%s7 + $0x3a8] sm:$0xff]
      %v749 = vld [vmem:[%s7 + $0x3b0] sm:$0xff]
      %v750 = vld [vmem:[%s7 + $0x3b8] sm:$0xff]
      %v751 = vld [vmem:[%s7 + $0x3c0] sm:$0xff]
      %v752 = vld [vmem:[%s7 + $0x3c8] sm:$0xff]
      %v753 = vld [vmem:[%s7 + $0x3d0] sm:$0xff]
      %v754 = vld [vmem:[%s7 + $0x3d8] sm:$0xff]
      %v755 = vld [vmem:[%s7 + $0x3e0] sm:$0xff]
      %v756 = vld [vmem:[%s7 + $0x3e8] sm:$0xff]
      %v757 = vld [vmem:[%s7 + $0x3f0] sm:$0xff]
      %v758 = vld [vmem:[%s7 + $0x3f8] sm:$0xff]
      %v759 = vld [vmem:[%s7 + $0x400] sm:$0xff]
      %v760 = vld [vmem:[%s7 + $0x408] sm:$0xff]
      %v761 = vld [vmem:[%s7 + $0x410] sm:$0xff]
      %v762 = vld [vmem:[%s7 + $0x418] sm:$0xff]
      %v763 = vld [vmem:[%s7 + $0x420] sm:$0xff]
      %v764 = vld [vmem:[%s7 + $0x428] sm:$0xff]
      %v765 = vld [vmem:[%s7 + $0x430] sm:$0xff]
      %v766 = vld [vmem:[%s7 + $0x438] sm:$0xff]
      %v767 = vld [vmem:[%s7 + $0x440] sm:$0xff]
      %v768 = vld [vmem:[%s7 + $0x448] sm:$0xff]
      %v769 = vld [vmem:[%s7 + $0x450] sm:$0xff]
      %v770 = vld [vmem:[%s7 + $0x458] sm:$0xff]
      %v771 = vld [vmem:[%s7 + $0x460] sm:$0xff]
      %v772 = vld [vmem:[%s7 + $0x468] sm:$0xff]
      %v773 = vld [vmem:[%s7 + $0x470] sm:$0xff]
      %v774 = vld [vmem:[%s7 + $0x478] sm:$0xff]
      %v775 = vld [vmem:[%s8] sm:$0x1]
      %v777 = vlaneseq
      %v778 = vshrl.u32 %v777, 7
      %v779 = vsub.s32 0, %v778
      %v780 = vrot.slane %v775, %v779
      %782 = vmatprep.subr.mxu0 0.0
      %783 = vmatpush1.msra.mxu0 %v631
      %784 = vmatprep.subr.mxu0 0.0
      %785 = vmatpush1.msra.mxu0 %v632
      %786 = vmatprep.subr.mxu0 0.0
      %787 = vmatpush1.msra.mxu0 %v633
      %788 = vmatprep.subr.mxu0 0.0
      %789 = vmatpush1.msra.mxu0 %v634
      %790 = vmatprep.subr.mxu0 0.0
      %791 = vmatpush1.msra.mxu0 %v635
      %792 = vmatprep.subr.mxu0 0.0
      %793 = vmatpush1.msra.mxu0 %v636
      %794 = vmatprep.subr.mxu0 0.0
      %795 = vmatpush1.msra.mxu0 %v637
      %796 = vmatprep.subr.mxu0 0.0
      %797 = vmatpush1.msra.mxu0 %v638
      %798 = vmatprep.subr.mxu0 0.0
      %799 = vmatpush1.msra.mxu0 %v639
      %800 = vmatprep.subr.mxu0 0.0
      %801 = vmatpush1.msra.mxu0 %v640
      %802 = vmatprep.subr.mxu0 0.0
      %803 = vmatpush1.msra.mxu0 %v641
      %804 = vmatprep.subr.mxu0 0.0
      %805 = vmatpush1.msra.mxu0 %v642
      %806 = vmatprep.subr.mxu0 0.0
      %807 = vmatpush1.msra.mxu0 %v643
      %808 = vmatprep.subr.mxu0 0.0
      %809 = vmatpush1.msra.mxu0 %v644
      %810 = vmatprep.subr.mxu0 0.0
      %811 = vmatpush1.msra.mxu0 %v645
      %812 = vmatprep.subr.mxu0 0.0
      %813 = vmatpush1.msra.mxu0 %v646
      %814 = vmatprep.subr.mxu0 0.0
      %815 = vmatpush1.msra.mxu0 %v647
      %816 = vmatprep.subr.mxu0 0.0
      %817 = vmatpush1.msra.mxu0 %v648
      %818 = vmatprep.subr.mxu0 0.0
      %819 = vmatpush1.msra.mxu0 %v649
      %820 = vmatprep.subr.mxu0 0.0
      %821 = vmatpush1.msra.mxu0 %v650
      %822 = vmatprep.subr.mxu0 0.0
      %823 = vmatpush1.msra.mxu0 %v651
      %824 = vmatprep.subr.mxu0 0.0
      %825 = vmatpush1.msra.mxu0 %v652
      %826 = vmatprep.subr.mxu0 0.0
      %827 = vmatpush1.msra.mxu0 %v653
      %828 = vmatprep.subr.mxu0 0.0
      %829 = vmatpush1.msra.mxu0 %v654
      %830 = vmatprep.subr.mxu0 0.0
      %831 = vmatpush1.msra.mxu0 %v655
      %832 = vmatprep.subr.mxu0 0.0
      %833 = vmatpush1.msra.mxu0 %v656
      %834 = vmatprep.subr.mxu0 0.0
      %835 = vmatpush1.msra.mxu0 %v657
      %836 = vmatprep.subr.mxu0 0.0
      %837 = vmatpush1.msra.mxu0 %v658
      %838 = vmatprep.subr.mxu0 0.0
      %839 = vmatpush1.msra.mxu0 %v659
      %840 = vmatprep.subr.mxu0 0.0
      %841 = vmatpush1.msra.mxu0 %v660
      %842 = vmatprep.subr.mxu0 0.0
      %843 = vmatpush1.msra.mxu0 %v661
      %844 = vmatprep.subr.mxu0 0.0
      %845 = vmatpush1.msra.mxu0 %v662
      %846 = vmatprep.mubr.f32.mxu0 %v584
      %847 = vmatmul.mubr.f32.gmra.mrb[0].mxu0 %v511
      %v848 = vpop.f32.mrb[0].mxu0
      %v849 = vadd.f32 %v780, %v848
      %v850 = vpop.f32.mrb[0].mxu0
      %851 = vmatprep.mubr.f32.mxu0 %v586
      %852 = vmatmul.mubr.f32.gmra.mrb[0].mxu0 %v512
      %v853 = vpop.f32.mrb[0].mxu0
      %v854 = vadd.f32 %v780, %v853
      %v855 = vpop.f32.mrb[0].mxu0
      %856 = vdwg.mxu0
      %857 = vmatprep.subr.mxu0 0.0
      %858 = vmatpush1.msra.mxu0 %v663
      %859 = vmatprep.subr.mxu0 0.0
      %860 = vmatpush1.msra.mxu0 %v664
      %861 = vmatprep.subr.mxu0 0.0
      %862 = vmatpush1.msra.mxu0 %v665
      %863 = vmatprep.subr.mxu0 0.0
      %864 = vmatpush1.msra.mxu0 %v666
      %865 = vmatprep.subr.mxu0 0.0
      %866 = vmatpush1.msra.mxu0 %v667
      %867 = vmatprep.subr.mxu0 0.0
      %868 = vmatpush1.msra.mxu0 %v668
      %869 = vmatprep.subr.mxu0 0.0
      %870 = vmatpush1.msra.mxu0 %v669
      %871 = vmatprep.subr.mxu0 0.0
      %872 = vmatpush1.msra.mxu0 %v670
      %873 = vmatprep.subr.mxu0 0.0
      %874 = vmatpush1.msra.mxu0 %v671
      %875 = vmatprep.subr.mxu0 0.0
      %876 = vmatpush1.msra.mxu0 %v672
      %877 = vmatprep.subr.mxu0 0.0
      %878 = vmatpush1.msra.mxu0 %v673
      %879 = vmatprep.subr.mxu0 0.0
      %880 = vmatpush1.msra.mxu0 %v674
      %881 = vmatprep.subr.mxu0 0.0
      %882 = vmatpush1.msra.mxu0 %v675
      %883 = vmatprep.subr.mxu0 0.0
      %884 = vmatpush1.msra.mxu0 %v676
      %885 = vmatprep.subr.mxu0 0.0
      %886 = vmatpush1.msra.mxu0 %v677
      %887 = vmatprep.subr.mxu0 0.0
      %888 = vmatpush1.msra.mxu0 %v678
      %889 = vmatprep.subr.mxu0 0.0
      %890 = vmatpush1.msra.mxu0 %v679
      %891 = vmatprep.subr.mxu0 0.0
      %892 = vmatpush1.msra.mxu0 %v680
      %893 = vmatprep.subr.mxu0 0.0
      %894 = vmatpush1.msra.mxu0 %v681
      %895 = vmatprep.subr.mxu0 0.0
      %896 = vmatpush1.msra.mxu0 %v682
      %897 = vmatprep.subr.mxu0 0.0
      %898 = vmatpush1.msra.mxu0 %v683
      %899 = vmatprep.subr.mxu0 0.0
      %900 = vmatpush1.msra.mxu0 %v684
      %901 = vmatprep.subr.mxu0 0.0
      %902 = vmatpush1.msra.mxu0 %v685
      %903 = vmatprep.subr.mxu0 0.0
      %904 = vmatpush1.msra.mxu0 %v686
      %905 = vmatprep.subr.mxu0 0.0
      %906 = vmatpush1.msra.mxu0 %v687
      %907 = vmatprep.subr.mxu0 0.0
      %908 = vmatpush1.msra.mxu0 %v688
      %909 = vmatprep.subr.mxu0 0.0
      %910 = vmatpush1.msra.mxu0 %v689
      %911 = vmatprep.subr.mxu0 0.0
      %912 = vmatpush1.msra.mxu0 %v690
      %913 = vmatprep.subr.mxu0 0.0
      %914 = vmatpush1.msra.mxu0 %v691
      %915 = vmatprep.subr.mxu0 0.0
      %916 = vmatpush1.msra.mxu0 %v692
      %917 = vmatprep.subr.mxu0 0.0
      %918 = vmatpush1.msra.mxu0 %v693
      %919 = vmatprep.subr.mxu0 0.0
      %920 = vmatpush1.msra.mxu0 %v694
      %921 = vmatprep.mubr.f32.mxu0 %v543
      %922 = vmatmul.mubr.f32.gmra.mrb[0].mxu0 %v592
      %v923 = vpop.f32.mrb[0].mxu0
      %v924 = vadd.f32 %v849, %v923
      %v925 = vpop.f32.mrb[0].mxu0
      %926 = vmatprep.mubr.f32.mxu0 %v544
      %927 = vmatmul.mubr.f32.gmra.mrb[0].mxu0 %v594
      %v928 = vpop.f32.mrb[0].mxu0
      %v929 = vadd.f32 %v854, %v928
      %v930 = vpop.f32.mrb[0].mxu0
      %931 = vdwg.mxu0
      %932 = vmatprep.subr.mxu0 0.0
      %933 = vmatpush1.msra.mxu0 %v695
      %934 = vmatprep.subr.mxu0 0.0
      %935 = vmatpush1.msra.mxu0 %v696
      %936 = vmatprep.subr.mxu0 0.0
      %937 = vmatpush1.msra.mxu0 %v697
      %938 = vmatprep.subr.mxu0 0.0
      %939 = vmatpush1.msra.mxu0 %v698
      %940 = vmatprep.subr.mxu0 0.0
      %941 = vmatpush1.msra.mxu0 %v699
      %942 = vmatprep.subr.mxu0 0.0
      %943 = vmatpush1.msra.mxu0 %v700
      %944 = vmatprep.subr.mxu0 0.0
      %945 = vmatpush1.msra.mxu0 %v701
      %946 = vmatprep.subr.mxu0 0.0
      %947 = vmatpush1.msra.mxu0 %v702
      %948 = vmatprep.subr.mxu0 0.0
      %949 = vmatpush1.msra.mxu0 %v703
      %950 = vmatprep.subr.mxu0 0.0
      %951 = vmatpush1.msra.mxu0 %v704
      %952 = vmatprep.subr.mxu0 0.0
      %953 = vmatpush1.msra.mxu0 %v705
      %954 = vmatprep.subr.mxu0 0.0
      %955 = vmatpush1.msra.mxu0 %v706
      %956 = vmatprep.subr.mxu0 0.0
      %957 = vmatpush1.msra.mxu0 %v707
      %958 = vmatprep.subr.mxu0 0.0
      %959 = vmatpush1.msra.mxu0 %v708
      %960 = vmatprep.subr.mxu0 0.0
      %961 = vmatpush1.msra.mxu0 %v709
      %962 = vmatprep.subr.mxu0 0.0
      %963 = vmatpush1.msra.mxu0 %v710
      %964 = vmatprep.subr.mxu0 0.0
      %965 = vmatpush1.msra.mxu0 %v711
      %966 = vmatprep.subr.mxu0 0.0
      %967 = vmatpush1.msra.mxu0 %v712
      %968 = vmatprep.subr.mxu0 0.0
      %969 = vmatpush1.msra.mxu0 %v713
      %970 = vmatprep.subr.mxu0 0.0
      %971 = vmatpush1.msra.mxu0 %v714
      %972 = vmatprep.subr.mxu0 0.0
      %973 = vmatpush1.msra.mxu0 %v715
      %974 = vmatprep.subr.mxu0 0.0
      %975 = vmatpush1.msra.mxu0 %v716
      %976 = vmatprep.subr.mxu0 0.0
      %977 = vmatpush1.msra.mxu0 %v717
      %978 = vmatprep.subr.mxu0 0.0
      %979 = vmatpush1.msra.mxu0 %v718
      %980 = vmatprep.subr.mxu0 0.0
      %981 = vmatpush1.msra.mxu0 %v719
      %982 = vmatprep.subr.mxu0 0.0
      %983 = vmatpush1.msra.mxu0 %v720
      %984 = vmatprep.subr.mxu0 0.0
      %985 = vmatpush1.msra.mxu0 %v721
      %986 = vmatprep.subr.mxu0 0.0
      %987 = vmatpush1.msra.mxu0 %v722
      %988 = vmatprep.subr.mxu0 0.0
      %989 = vmatpush1.msra.mxu0 %v723
      %990 = vmatprep.subr.mxu0 0.0
      %991 = vmatpush1.msra.mxu0 %v724
      %992 = vmatprep.subr.mxu0 0.0
      %993 = vmatpush1.msra.mxu0 %v725
      %994 = vmatprep.subr.mxu0 0.0
      %995 = vmatpush1.msra.mxu0 %v726
      %996 = vmatprep.mubr.f32.mxu0 %v609
      %997 = vmatmul.mubr.f32.gmra.mrb[0].mxu0 %v602
      %v998 = vpop.f32.mrb[0].mxu0
      %v999 = vadd.f32 %v924, %v998
      %v1000 = vpop.f32.mrb[0].mxu0
      %1001 = vmatprep.mubr.f32.mxu0 %v611
      %1002 = vmatmul.mubr.f32.gmra.mrb[0].mxu0 %v604
      %v1003 = vpop.f32.mrb[0].mxu0
      %v1004 = vadd.f32 %v929, %v1003
      %v1005 = vpop.f32.mrb[0].mxu0
      %1006 = vdwg.mxu0
      %1007 = vmatprep.subr.mxu0 0.0
      %1008 = vmatpush1.msra.mxu0 %v727
      %1009 = vmatprep.subr.mxu0 0.0
      %1010 = vmatpush1.msra.mxu0 %v728
      %1011 = vmatprep.subr.mxu0 0.0
      %1012 = vmatpush1.msra.mxu0 %v729
      %1013 = vmatprep.subr.mxu0 0.0
      %1014 = vmatpush1.msra.mxu0 %v730
      %1015 = vmatprep.subr.mxu0 0.0
      %1016 = vmatpush1.msra.mxu0 %v731
      %1017 = vmatprep.subr.mxu0 0.0
      %1018 = vmatpush1.msra.mxu0 %v732
      %1019 = vmatprep.subr.mxu0 0.0
      %1020 = vmatpush1.msra.mxu0 %v733
      %1021 = vmatprep.subr.mxu0 0.0
      %1022 = vmatpush1.msra.mxu0 %v734
      %1023 = vmatprep.subr.mxu0 0.0
      %1024 = vmatpush1.msra.mxu0 %v735
      %1025 = vmatprep.subr.mxu0 0.0
      %1026 = vmatpush1.msra.mxu0 %v736
      %1027 = vmatprep.subr.mxu0 0.0
      %1028 = vmatpush1.msra.mxu0 %v737
      %1029 = vmatprep.subr.mxu0 0.0
      %1030 = vmatpush1.msra.mxu0 %v738
      %1031 = vmatprep.subr.mxu0 0.0
      %1032 = vmatpush1.msra.mxu0 %v739
      %1033 = vmatprep.subr.mxu0 0.0
      %1034 = vmatpush1.msra.mxu0 %v740
      %1035 = vmatprep.subr.mxu0 0.0
      %1036 = vmatpush1.msra.mxu0 %v741
      %1037 = vmatprep.subr.mxu0 0.0
      %1038 = vmatpush1.msra.mxu0 %v742
      %1039 = vmatprep.subr.mxu0 0.0
      %1040 = vmatpush1.msra.mxu0 %v743
      %1041 = vmatprep.subr.mxu0 0.0
      %1042 = vmatpush1.msra.mxu0 %v744
      %1043 = vmatprep.subr.mxu0 0.0
      %1044 = vmatpush1.msra.mxu0 %v745
      %1045 = vmatprep.subr.mxu0 0.0
      %1046 = vmatpush1.msra.mxu0 %v746
      %1047 = vmatprep.subr.mxu0 0.0
      %1048 = vmatpush1.msra.mxu0 %v747
      %1049 = vmatprep.subr.mxu0 0.0
      %1050 = vmatpush1.msra.mxu0 %v748
      %1051 = vmatprep.subr.mxu0 0.0
      %1052 = vmatpush1.msra.mxu0 %v749
      %1053 = vmatprep.subr.mxu0 0.0
      %1054 = vmatpush1.msra.mxu0 %v750
      %1055 = vmatprep.subr.mxu0 0.0
      %1056 = vmatpush1.msra.mxu0 %v751
      %1057 = vmatprep.subr.mxu0 0.0
      %1058 = vmatpush1.msra.mxu0 %v752
      %1059 = vmatprep.subr.mxu0 0.0
      %1060 = vmatpush1.msra.mxu0 %v753
      %1061 = vmatprep.subr.mxu0 0.0
      %1062 = vmatpush1.msra.mxu0 %v754
      %1063 = vmatprep.subr.mxu0 0.0
      %1064 = vmatpush1.msra.mxu0 %v755
      %1065 = vmatprep.subr.mxu0 0.0
      %1066 = vmatpush1.msra.mxu0 %v756
      %1067 = vmatprep.subr.mxu0 0.0
      %1068 = vmatpush1.msra.mxu0 %v757
      %1069 = vmatprep.subr.mxu0 0.0
      %1070 = vmatpush1.msra.mxu0 %v758
      %1071 = vmatprep.mubr.f32.mxu0 %v619
      %1072 = vmatmul.mubr.f32.gmra.mrb[0].mxu0 %v575
      %v1073 = vpop.f32.mrb[0].mxu0
      %v1074 = vadd.f32 %v999, %v1073
      %v1075 = vpop.f32.mrb[0].mxu0
      %1076 = vmatprep.mubr.f32.mxu0 %v621
      %1077 = vmatmul.mubr.f32.gmra.mrb[0].mxu0 %v576
      %v1078 = vpop.f32.mrb[0].mxu0
      %v1079 = vadd.f32 %v1004, %v1078
      %v1080 = vpop.f32.mrb[0].mxu0
      %1081 = vdwg.mxu0
      %1082 = vmatprep.subr.mxu0 0.0
      %1083 = vmatpush1.msra.mxu0 %v759
      %1084 = vmatprep.subr.mxu0 0.0
      %1085 = vmatpush1.msra.mxu0 %v760
      %1086 = vmatprep.subr.mxu0 0.0
      %1087 = vmatpush1.msra.mxu0 %v761
      %1088 = vmatprep.subr.mxu0 0.0
      %1089 = vmatpush1.msra.mxu0 %v762
      %1090 = vmatprep.subr.mxu0 0.0
      %1091 = vmatpush1.msra.mxu0 %v763
      %1092 = vmatprep.subr.mxu0 0.0
      %1093 = vmatpush1.msra.mxu0 %v764
      %1094 = vmatprep.subr.mxu0 0.0
      %1095 = vmatpush1.msra.mxu0 %v765
      %1096 = vmatprep.subr.mxu0 0.0
      %1097 = vmatpush1.msra.mxu0 %v766
      %1098 = vmatprep.subr.mxu0 0.0
      %1099 = vmatpush1.msra.mxu0 %v767
      %1100 = vmatprep.subr.mxu0 0.0
      %1101 = vmatpush1.msra.mxu0 %v768
      %1102 = vmatprep.subr.mxu0 0.0
      %1103 = vmatpush1.msra.mxu0 %v769
      %1104 = vmatprep.subr.mxu0 0.0
      %1105 = vmatpush1.msra.mxu0 %v770
      %1106 = vmatprep.subr.mxu0 0.0
      %1107 = vmatpush1.msra.mxu0 %v771
      %1108 = vmatprep.subr.mxu0 0.0
      %1109 = vmatpush1.msra.mxu0 %v772
      %1110 = vmatprep.subr.mxu0 0.0
      %1111 = vmatpush1.msra.mxu0 %v773
      %1112 = vmatprep.subr.mxu0 0.0
      %1113 = vmatpush1.msra.mxu0 %v774
      %1114 = vmatprep.subr.mxu0 0.0
      %1115 = vmatpush1.msra.mxu0 0.0
      %1116 = vmatprep.subr.mxu0 0.0
      %1117 = vmatpush1.msra.mxu0 0.0
      %1118 = vmatprep.subr.mxu0 0.0
      %1119 = vmatpush1.msra.mxu0 0.0
      %1120 = vmatprep.subr.mxu0 0.0
      %1121 = vmatpush1.msra.mxu0 0.0
      %1122 = vmatprep.subr.mxu0 0.0
      %1123 = vmatpush1.msra.mxu0 0.0
      %1124 = vmatprep.subr.mxu0 0.0
      %1125 = vmatpush1.msra.mxu0 0.0
      %1126 = vmatprep.subr.mxu0 0.0
      %1127 = vmatpush1.msra.mxu0 0.0
      %1128 = vmatprep.subr.mxu0 0.0
      %1129 = vmatpush1.msra.mxu0 0.0
      %1130 = vmatprep.subr.mxu0 0.0
      %1131 = vmatpush1.msra.mxu0 0.0
      %1132 = vmatprep.subr.mxu0 0.0
      %1133 = vmatpush1.msra.mxu0 0.0
      %1134 = vmatprep.subr.mxu0 0.0
      %1135 = vmatpush1.msra.mxu0 0.0
      %1136 = vmatprep.subr.mxu0 0.0
      %1137 = vmatpush1.msra.mxu0 0.0
      %1138 = vmatprep.subr.mxu0 0.0
      %1139 = vmatpush1.msra.mxu0 0.0
      %1140 = vmatprep.subr.mxu0 0.0
      %1141 = vmatpush1.msra.mxu0 0.0
      %1142 = vmatprep.subr.mxu0 0.0
      %1143 = vmatpush1.msra.mxu0 0.0
      %1144 = vmatprep.subr.mxu0 0.0
      %1145 = vmatpush1.msra.mxu0 0.0
      %1146 = vmatprep.mubr.f32.mxu0 0.0
      %1147 = vmatmul.mubr.f32.gmra.mrb[0].mxu0 %v626
      %v1148 = vpop.f32.mrb[0].mxu0
      %v1149 = vadd.f32 %v1074, %v1148
      %v1150 = vpop.f32.mrb[0].mxu0
      %1151 = vmatprep.mubr.f32.mxu0 0.0
      %1152 = vmatmul.mubr.f32.gmra.mrb[0].mxu0 %v628
      %v1153 = vpop.f32.mrb[0].mxu0
      %v1154 = vadd.f32 %v1079, %v1153
      %v1155 = vpop.f32.mrb[0].mxu0
      %1156 = vdwg.mxu0
      %1157 = vst [vmem:[%s450] sm:$0xff] %v1149
      %1158 = vst [vmem:[%s450 + $0x8] sm:$0xff] %v1154
      %p1159 = scmp.lt.s32.totalorder %s24, 1
      %s1160 = scalar_select %p1159, %s24, 1
      %p1161 = scmp.lt.s32.totalorder %s25, 15
      %s1162 = scalar_select %p1161, %s25, 15
      %s1163 = smul.addr %s1162, 2
      %s1164 = smul.addr %s1160, 32
      %s1165 = sadd.s32 %s1163, %s1164
      %s1166 = smul.addr %s1165, 8
      %s1167 = scalar_lea.vmem %s9, %s1166
      // Predicated region
      $region57: #{preact_bn_resblock4_forward.9} parent=55 // pred_check
        %p1168 = pneg %p266
      $region58: #{preact_bn_resblock4_forward.9} parent=55 // pred_check_branch
        %1170 = sbr.rel (%p1168) target = $region60
      $region59: #{preact_bn_resblock4_forward.9} parent=55 // pred_region
        _
      $region60: #{preact_bn_resblock4_forward.9} parent=55 // pred_fallthru
        _
    $region56: #{preact_bn_resblock4_forward.9} parent=5 // pred_fallthru
      _
    %p1171 = scmp.le.s32.totalorder 2, %s15
    // Predicated region
    $region61: #{preact_bn_resblock4_forward.9} parent=5 // pred_check
      %p1172 = pneg %p1171
    $region62: #{preact_bn_resblock4_forward.9} parent=5 // pred_check_branch
      %1174 = sbr.rel (%p1172) target = $region64
    $region63: #{preact_bn_resblock4_forward.9} parent=5 // pred_region
      %s1175 = ssub.s32 %s15, 2
      // Predicated region
      $region65: #{preact_bn_resblock4_forward.9} parent=63 // pred_check
        %p1176 = pneg %p272
      $region66: #{preact_bn_resblock4_forward.9} parent=63 // pred_check_branch
        %1178 = sbr.rel (%p1176) target = $region68
      $region67: #{preact_bn_resblock4_forward.9} parent=63 // pred_region
        %p1179 = scmp.lt.s32.totalorder %s26, 1
        %s1180 = scalar_select %p1179, %s26, 1
        %p1181 = scmp.lt.s32.totalorder %s27, 15
        %s1182 = scalar_select %p1181, %s27, 15
        %s1183 = smul.addr %s1182, 2
        %s1184 = smul.addr %s1180, 32
        %s1185 = sadd.s32 %s1183, %s1184
        %s1186 = smul.addr %s1185, 8
        %s1187 = scalar_lea.vmem %s9, %s1186
      $region68: #{preact_bn_resblock4_forward.9} parent=63 // pred_fallthru
        _
    $region64: #{preact_bn_resblock4_forward.9} parent=5 // pred_fallthru
      _
  $region6: #{preact_bn_resblock4_forward.9} parent=0 // loop_footer
    %s19 = sadd.s32 1, %s15
  $region7: #{preact_bn_resblock4_forward.9} parent=0 // loop_footer_branch
    %14 = sbr.rel target = $region3
  $region8: #{preact_bn_resblock4_forward.9} parent=0 // loop_exit
    _

// kernel: preact_bn_resblock4_forward.11
$region0: #{preact_bn_resblock4_forward.11}
  #allocation0 [shape = 'u32[]', space=smem, size = 0x4, offset = 0x4, fixed_abs, tag = 'smem constant byte address 0x4 - core index']
  #allocation1 [shape = 'u32[144,128]{1,0:T(1,128)}', space=vmem, size = 0x12000, scoped, tag = 'internal scratch']
  %s0 = inlined_call_operand.vmem [shape: f32[2,18,18,128], index: 0, kind: input, shape index: {}, may-alias: {0,1,2}]
  %s1 = inlined_call_operand.vmem [shape: f32[2,18,18,128], index: 1, kind: input, shape index: {}, may-alias: {0,1,2}]
  %s2 = inlined_call_operand.vmem [shape: f32[2,18,18,128], index: 2, kind: input, shape index: {}, may-alias: {0,1,2}]
  %s3 = inlined_call_operand.vmem [shape: f32[1,128], index: 3, kind: input, shape index: {}]
  %s4 = inlined_call_operand.vmem [shape: f32[1,128], index: 4, kind: input, shape index: {}]
  %s5 = inlined_call_operand.vmem [shape: f32[1,128], index: 5, kind: input, shape index: {}]
  %s6 = inlined_call_operand.vmem [shape: f32[1,128], index: 6, kind: input, shape index: {}]
  %s7 = inlined_call_operand.vmem [shape: f32[1152,128], index: 7, kind: input, shape index: {}]
  %s8 = inlined_call_operand.vmem [shape: f32[1,128], index: 8, kind: input, shape index: {}]
  %s9 = inlined_call_operand.vmem [shape: f32[2,16,16,128], index: 9, kind: input, shape index: {}]
  %s10 = inlined_call_operand.vmem [shape: f32[128,128], index: 10, kind: input, shape index: {}]
  %s11 = inlined_call_operand.vmem [shape: f32[1,128], index: 11, kind: input, shape index: {}]
  %s12 = inlined_call_operand.vmem [shape: f32[2,16,16,128], index: 12, kind: output, shape index: {}]
  %s13 = sld [smem:[#allocation0]]
  $region81: #{preact_bn_resblock4_forward.11} parent=0
    _
  %s15 = ssub.s32 1, %s13
  %s16 = scalar_select 0, %s15, %s13
  loop: start=0, step=1, limit=34
  $region2: #{preact_bn_resblock4_forward.11} parent=0 // loop_pre_header
    _
  $region3: #{preact_bn_resblock4_forward.11} parent=0 // loop_header
    %s18 = sphi 0, %s22
    %p19 = scmp.ge.s32.totalorder %s18, 34
    %s25 = sphi 0, %s37
    %s26 = sphi 0, %s33
    %s27 = sphi 0, %s25
    %s28 = sphi 0, %s26
    %s29 = sphi 0, %s27
    %s30 = sphi 0, %s28
    %s42 = sphi 0, %s44
    %s45 = sphi 0, %s42
    %s46 = sphi 0, %s45
    %s62 = sphi 0, %s46
    %s72 = sphi 0, %s74
    %s75 = sphi 0, %s72
    %s76 = sphi 0, %s75
    %s92 = sphi 0, %s76
    %s102 = sphi 0, %s104
    %s105 = sphi 0, %s102
    %s106 = sphi 0, %s105
    %s122 = sphi 0, %s106
    %s126 = sphi 0, %s126
    %s128 = sphi 0, %s126
    %s129 = sphi 0, %s128
    %s143 = sphi 0, %s129
    %s147 = sphi 0, %s147
    %s149 = sphi 0, %s147
    %s150 = sphi 0, %s149
    %s164 = sphi 0, %s150
    %s168 = sphi 0, %s168
    %s170 = sphi 0, %s168
    %s171 = sphi 0, %s170
    %s185 = sphi 0, %s171
    %s189 = sphi 0, %s189
    %s191 = sphi 0, %s189
    %s192 = sphi 0, %s191
    %s206 = sphi 0, %s192
    %s210 = sphi 0, %s210
    %s212 = sphi 0, %s210
    %s213 = sphi 0, %s212
    %s227 = sphi 0, %s213
    %s231 = sphi 0, %s231
    %s233 = sphi 0, %s231
    %s234 = sphi 0, %s233
    %s248 = sphi 0, %s234
    %s256 = sphi 0, %s258
    %s259 = sphi 0, %s256
    %s260 = sphi 0, %s259
    %s276 = sphi 0, %s260
    %s280 = sphi 0, %s280
    %s282 = sphi 0, %s280
    %s283 = sphi 0, %s282
    %s297 = sphi 0, %s283
    %s301 = sphi 0, %s301
    %s303 = sphi 0, %s301
    %s304 = sphi 0, %s303
    %s318 = sphi 0, %s304
    %s326 = sphi 0, %s328
    %s329 = sphi 0, %s326
    %s330 = sphi 0, %s329
    %s346 = sphi 0, %s330
  $region4: #{preact_bn_resblock4_forward.11} parent=0 // loop_header_branch
    %21 = sbr.rel (%p19) target = $region8
  $region5: #{preact_bn_resblock4_forward.11} parent=0 // loop_body
    %s23 = ssub.s32 %s18, 1
    %s24 = ssub.s32 %s18, 2
    %s31 = sadd.s32 1, %s26
    %p32 = scmp.ge.s32.totalorder %s31, 16
    %s33 = scalar_select %p32, 0, %s31
    %s34 = sadd.s32 1, %s25
    %s35 = scalar_select %p32, %s34, %s25
    %p36 = scmp.ge.s32.totalorder %s35, 2
    %s37 = scalar_select %p36, 0, %s35
    %s38 = ssub.s32 %s25, %s37
    %s39 = ssub.s32 %s26, %s33
    %s40 = sor.u32 %s38, %s39
    %p41 = scmp.eq.s32.totalorder %s40, 0
    %s43 = sadd.s32 %s42, 1
    %s44 = scalar_select %p41, %s42, %s43
    %p47 = pneg %p41
    %p48 = scmp.eq.s32.totalorder %s18, 31
    %p49 = por %p47, %p48
    %p50 = scmp.ne.s32.totalorder %s42, %s45
    %p51 = scmp.eq.s32.totalorder %s18, 0
    %p52 = por %p50, %p51
    %p53 = scmp.ne.s32.totalorder %s42, %s45
    %p54 = scmp.eq.s32.totalorder %s23, 31
    %p55 = por %p53, %p54
    %p56 = scmp.ne.s32.totalorder %s45, %s46
    %p57 = scmp.eq.s32.totalorder %s23, 0
    %p58 = por %p56, %p57
    %p59 = scmp.ne.s32.totalorder %s45, %s46
    %p60 = scmp.eq.s32.totalorder %s24, 31
    %p61 = por %p59, %p60
    %p63 = scmp.ne.s32.totalorder %s46, %s62
    %p64 = scmp.eq.s32.totalorder %s24, 0
    %p65 = por %p63, %p64
    %s66 = sadd.s32 %s26, 1
    %s67 = sadd.s32 %s33, 1
    %s68 = ssub.s32 %s25, %s37
    %s69 = ssub.s32 %s66, %s67
    %s70 = sor.u32 %s68, %s69
    %p71 = scmp.eq.s32.totalorder %s70, 0
    %s73 = sadd.s32 %s72, 1
    %s74 = scalar_select %p71, %s72, %s73
    %p77 = pneg %p71
    %p78 = scmp.eq.s32.totalorder %s18, 31
    %p79 = por %p77, %p78
    %p80 = scmp.ne.s32.totalorder %s72, %s75
    %p81 = scmp.eq.s32.totalorder %s18, 0
    %p82 = por %p80, %p81
    %p83 = scmp.ne.s32.totalorder %s72, %s75
    %p84 = scmp.eq.s32.totalorder %s23, 31
    %p85 = por %p83, %p84
    %p86 = scmp.ne.s32.totalorder %s75, %s76
    %p87 = scmp.eq.s32.totalorder %s23, 0
    %p88 = por %p86, %p87
    %p89 = scmp.ne.s32.totalorder %s75, %s76
    %p90 = scmp.eq.s32.totalorder %s24, 31
    %p91 = por %p89, %p90
    %p93 = scmp.ne.s32.totalorder %s76, %s92
    %p94 = scmp.eq.s32.totalorder %s24, 0
    %p95 = por %p93, %p94
    %s96 = sadd.s32 %s26, 2
    %s97 = sadd.s32 %s33, 2
    %s98 = ssub.s32 %s25, %s37
    %s99 = ssub.s32 %s96, %s97
    %s100 = sor.u32 %s98, %s99
    %p101 = scmp.eq.s32.totalorder %s100, 0
    %s103 = sadd.s32 %s102, 1
    %s104 = scalar_select %p101, %s102, %s103
    %p107 = pneg %p101
    %p108 = scmp.eq.s32.totalorder %s18, 31
    %p109 = por %p107, %p108
    %p110 = scmp.ne.s32.totalorder %s102, %s105
    %p111 = scmp.eq.s32.totalorder %s18, 0
    %p112 = por %p110, %p111
    %p113 = scmp.ne.s32.totalorder %s102, %s105
    %p114 = scmp.eq.s32.totalorder %s23, 31
    %p115 = por %p113, %p114
    %p116 = scmp.ne.s32.totalorder %s105, %s106
    %p117 = scmp.eq.s32.totalorder %s23, 0
    %p118 = por %p116, %p117
    %p119 = scmp.ne.s32.totalorder %s105, %s106
    %p120 = scmp.eq.s32.totalorder %s24, 31
    %p121 = por %p119, %p120
    %p123 = scmp.ne.s32.totalorder %s106, %s122
    %p124 = scmp.eq.s32.totalorder %s24, 0
    %p125 = por %p123, %p124
    %s127 = sadd.s32 %s126, 1
    %p130 = scmp.eq.s32.totalorder %s18, 31
    %p131 = scmp.ne.s32.totalorder %s126, %s128
    %p132 = scmp.eq.s32.totalorder %s18, 0
    %p133 = por %p131, %p132
    %p134 = scmp.ne.s32.totalorder %s126, %s128
    %p135 = scmp.eq.s32.totalorder %s23, 31
    %p136 = por %p134, %p135
    %p137 = scmp.ne.s32.totalorder %s128, %s129
    %p138 = scmp.eq.s32.totalorder %s23, 0
    %p139 = por %p137, %p138
    %p140 = scmp.ne.s32.totalorder %s128, %s129
    %p141 = scmp.eq.s32.totalorder %s24, 31
    %p142 = por %p140, %p141
    %p144 = scmp.ne.s32.totalorder %s129, %s143
    %p145 = scmp.eq.s32.totalorder %s24, 0
    %p146 = por %p144, %p145
    %s148 = sadd.s32 %s147, 1
    %p151 = scmp.eq.s32.totalorder %s18, 31
    %p152 = scmp.ne.s32.totalorder %s147, %s149
    %p153 = scmp.eq.s32.totalorder %s18, 0
    %p154 = por %p152, %p153
    %p155 = scmp.ne.s32.totalorder %s147, %s149
    %p156 = scmp.eq.s32.totalorder %s23, 31
    %p157 = por %p155, %p156
    %p158 = scmp.ne.s32.totalorder %s149, %s150
    %p159 = scmp.eq.s32.totalorder %s23, 0
    %p160 = por %p158, %p159
    %p161 = scmp.ne.s32.totalorder %s149, %s150
    %p162 = scmp.eq.s32.totalorder %s24, 31
    %p163 = por %p161, %p162
    %p165 = scmp.ne.s32.totalorder %s150, %s164
    %p166 = scmp.eq.s32.totalorder %s24, 0
    %p167 = por %p165, %p166
    %s169 = sadd.s32 %s168, 1
    %p172 = scmp.eq.s32.totalorder %s18, 31
    %p173 = scmp.ne.s32.totalorder %s168, %s170
    %p174 = scmp.eq.s32.totalorder %s18, 0
    %p175 = por %p173, %p174
    %p176 = scmp.ne.s32.totalorder %s168, %s170
    %p177 = scmp.eq.s32.totalorder %s23, 31
    %p178 = por %p176, %p177
    %p179 = scmp.ne.s32.totalorder %s170, %s171
    %p180 = scmp.eq.s32.totalorder %s23, 0
    %p181 = por %p179, %p180
    %p182 = scmp.ne.s32.totalorder %s170, %s171
    %p183 = scmp.eq.s32.totalorder %s24, 31
    %p184 = por %p182, %p183
    %p186 = scmp.ne.s32.totalorder %s171, %s185
    %p187 = scmp.eq.s32.totalorder %s24, 0
    %p188 = por %p186, %p187
    %s190 = sadd.s32 %s189, 1
    %p193 = scmp.eq.s32.totalorder %s18, 31
    %p194 = scmp.ne.s32.totalorder %s189, %s191
    %p195 = scmp.eq.s32.totalorder %s18, 0
    %p196 = por %p194, %p195
    %p197 = scmp.ne.s32.totalorder %s189, %s191
    %p198 = scmp.eq.s32.totalorder %s23, 31
    %p199 = por %p197, %p198
    %p200 = scmp.ne.s32.totalorder %s191, %s192
    %p201 = scmp.eq.s32.totalorder %s23, 0
    %p202 = por %p200, %p201
    %p203 = scmp.ne.s32.totalorder %s191, %s192
    %p204 = scmp.eq.s32.totalorder %s24, 31
    %p205 = por %p203, %p204
    %p207 = scmp.ne.s32.totalorder %s192, %s206
    %p208 = scmp.eq.s32.totalorder %s24, 0
    %p209 = por %p207, %p208
    %s211 = sadd.s32 %s210, 1
    %p214 = scmp.eq.s32.totalorder %s18, 31
    %p215 = scmp.ne.s32.totalorder %s210, %s212
    %p216 = scmp.eq.s32.totalorder %s18, 0
    %p217 = por %p215, %p216
    %p218 = scmp.ne.s32.totalorder %s210, %s212
    %p219 = scmp.eq.s32.totalorder %s23, 31
    %p220 = por %p218, %p219
    %p221 = scmp.ne.s32.totalorder %s212, %s213
    %p222 = scmp.eq.s32.totalorder %s23, 0
    %p223 = por %p221, %p222
    %p224 = scmp.ne.s32.totalorder %s212, %s213
    %p225 = scmp.eq.s32.totalorder %s24, 31
    %p226 = por %p224, %p225
    %p228 = scmp.ne.s32.totalorder %s213, %s227
    %p229 = scmp.eq.s32.totalorder %s24, 0
    %p230 = por %p228, %p229
    %s232 = sadd.s32 %s231, 1
    %p235 = scmp.eq.s32.totalorder %s18, 31
    %p236 = scmp.ne.s32.totalorder %s231, %s233
    %p237 = scmp.eq.s32.totalorder %s18, 0
    %p238 = por %p236, %p237
    %p239 = scmp.ne.s32.totalorder %s231, %s233
    %p240 = scmp.eq.s32.totalorder %s23, 31
    %p241 = por %p239, %p240
    %p242 = scmp.ne.s32.totalorder %s233, %s234
    %p243 = scmp.eq.s32.totalorder %s23, 0
    %p244 = por %p242, %p243
    %p245 = scmp.ne.s32.totalorder %s233, %s234
    %p246 = scmp.eq.s32.totalorder %s24, 31
    %p247 = por %p245, %p246
    %p249 = scmp.ne.s32.totalorder %s234, %s248
    %p250 = scmp.eq.s32.totalorder %s24, 0
    %p251 = por %p249, %p250
    %s252 = ssub.s32 %s25, %s37
    %s253 = ssub.s32 %s26, %s33
    %s254 = sor.u32 %s252, %s253
    %p255 = scmp.eq.s32.totalorder %s254, 0
    %s257 = sadd.s32 %s256, 1
    %s258 = scalar_select %p255, %s256, %s257
    %p261 = pneg %p255
    %p262 = scmp.eq.s32.totalorder %s18, 31
    %p263 = por %p261, %p262
    %p264 = scmp.ne.s32.totalorder %s256, %s259
    %p265 = scmp.eq.s32.totalorder %s18, 0
    %p266 = por %p264, %p265
    %p267 = scmp.ne.s32.totalorder %s256, %s259
    %p268 = scmp.eq.s32.totalorder %s23, 31
    %p269 = por %p267, %p268
    %p270 = scmp.ne.s32.totalorder %s259, %s260
    %p271 = scmp.eq.s32.totalorder %s23, 0
    %p272 = por %p270, %p271
    %p273 = scmp.ne.s32.totalorder %s259, %s260
    %p274 = scmp.eq.s32.totalorder %s24, 31
    %p275 = por %p273, %p274
    %p277 = scmp.ne.s32.totalorder %s260, %s276
    %p278 = scmp.eq.s32.totalorder %s24, 0
    %p279 = por %p277, %p278
    %s281 = sadd.s32 %s280, 1
    %p284 = scmp.eq.s32.totalorder %s18, 31
    %p285 = scmp.ne.s32.totalorder %s280, %s282
    %p286 = scmp.eq.s32.totalorder %s18, 0
    %p287 = por %p285, %p286
    %p288 = scmp.ne.s32.totalorder %s280, %s282
    %p289 = scmp.eq.s32.totalorder %s23, 31
    %p290 = por %p288, %p289
    %p291 = scmp.ne.s32.totalorder %s282, %s283
    %p292 = scmp.eq.s32.totalorder %s23, 0
    %p293 = por %p291, %p292
    %p294 = scmp.ne.s32.totalorder %s282, %s283
    %p295 = scmp.eq.s32.totalorder %s24, 31
    %p296 = por %p294, %p295
    %p298 = scmp.ne.s32.totalorder %s283, %s297
    %p299 = scmp.eq.s32.totalorder %s24, 0
    %p300 = por %p298, %p299
    %s302 = sadd.s32 %s301, 1
    %p305 = scmp.eq.s32.totalorder %s18, 31
    %p306 = scmp.ne.s32.totalorder %s301, %s303
    %p307 = scmp.eq.s32.totalorder %s18, 0
    %p308 = por %p306, %p307
    %p309 = scmp.ne.s32.totalorder %s301, %s303
    %p310 = scmp.eq.s32.totalorder %s23, 31
    %p311 = por %p309, %p310
    %p312 = scmp.ne.s32.totalorder %s303, %s304
    %p313 = scmp.eq.s32.totalorder %s23, 0
    %p314 = por %p312, %p313
    %p315 = scmp.ne.s32.totalorder %s303, %s304
    %p316 = scmp.eq.s32.totalorder %s24, 31
    %p317 = por %p315, %p316
    %p319 = scmp.ne.s32.totalorder %s304, %s318
    %p320 = scmp.eq.s32.totalorder %s24, 0
    %p321 = por %p319, %p320
    %s322 = ssub.s32 %s25, %s37
    %s323 = ssub.s32 %s26, %s33
    %s324 = sor.u32 %s322, %s323
    %p325 = scmp.eq.s32.totalorder %s324, 0
    %s327 = sadd.s32 %s326, 1
    %s328 = scalar_select %p325, %s326, %s327
    %p331 = pneg %p325
    %p332 = scmp.eq.s32.totalorder %s18, 31
    %p333 = por %p331, %p332
    %p334 = scmp.ne.s32.totalorder %s326, %s329
    %p335 = scmp.eq.s32.totalorder %s18, 0
    %p336 = por %p334, %p335
    %p337 = scmp.ne.s32.totalorder %s326, %s329
    %p338 = scmp.eq.s32.totalorder %s23, 31
    %p339 = por %p337, %p338
    %p340 = scmp.ne.s32.totalorder %s329, %s330
    %p341 = scmp.eq.s32.totalorder %s23, 0
    %p342 = por %p340, %p341
    %p343 = scmp.ne.s32.totalorder %s329, %s330
    %p344 = scmp.eq.s32.totalorder %s24, 31
    %p345 = por %p343, %p344
    %p347 = scmp.ne.s32.totalorder %s330, %s346
    %p348 = scmp.eq.s32.totalorder %s24, 0
    %p349 = por %p347, %p348
    %p350 = scmp.le.s32.totalorder 1, %s18
    %p351 = scmp.lt.s32.totalorder %s18, 33
    %p352 = pnand %p350, %p351
    %p353 = pneg %p352
    // Predicated region
    $region9: #{preact_bn_resblock4_forward.11} parent=5 // pred_check
      _
    $region10: #{preact_bn_resblock4_forward.11} parent=5 // pred_check_branch
      %355 = sbr.rel (%p352) target = $region12
    $region11: #{preact_bn_resblock4_forward.11} parent=5 // pred_region
      %s356 = ssub.s32 %s18, 1
      // Predicated region
      $region13: #{preact_bn_resblock4_forward.11} parent=11 // pred_check
        %p357 = pneg %p139
      $region14: #{preact_bn_resblock4_forward.11} parent=11 // pred_check_branch
        %359 = sbr.rel (%p357) target = $region16
      $region15: #{preact_bn_resblock4_forward.11} parent=11 // pred_region
        _
      $region16: #{preact_bn_resblock4_forward.11} parent=11 // pred_fallthru
        _
      // Predicated region
      $region17: #{preact_bn_resblock4_forward.11} parent=11 // pred_check
        %p360 = pneg %p160
      $region18: #{preact_bn_resblock4_forward.11} parent=11 // pred_check_branch
        %362 = sbr.rel (%p360) target = $region20
      $region19: #{preact_bn_resblock4_forward.11} parent=11 // pred_region
        _
      $region20: #{preact_bn_resblock4_forward.11} parent=11 // pred_fallthru
        _
      // Predicated region
      $region21: #{preact_bn_resblock4_forward.11} parent=11 // pred_check
        %p363 = pneg %p181
      $region22: #{preact_bn_resblock4_forward.11} parent=11 // pred_check_branch
        %365 = sbr.rel (%p363) target = $region24
      $region23: #{preact_bn_resblock4_forward.11} parent=11 // pred_region
        _
      $region24: #{preact_bn_resblock4_forward.11} parent=11 // pred_fallthru
        _
      // Predicated region
      $region25: #{preact_bn_resblock4_forward.11} parent=11 // pred_check
        %p366 = pneg %p202
      $region26: #{preact_bn_resblock4_forward.11} parent=11 // pred_check_branch
        %368 = sbr.rel (%p366) target = $region28
      $region27: #{preact_bn_resblock4_forward.11} parent=11 // pred_region
        _
      $region28: #{preact_bn_resblock4_forward.11} parent=11 // pred_fallthru
        _
      // Predicated region
      $region29: #{preact_bn_resblock4_forward.11} parent=11 // pred_check
        %p369 = pneg %p223
      $region30: #{preact_bn_resblock4_forward.11} parent=11 // pred_check_branch
        %371 = sbr.rel (%p369) target = $region32
      $region31: #{preact_bn_resblock4_forward.11} parent=11 // pred_region
        _
      $region32: #{preact_bn_resblock4_forward.11} parent=11 // pred_fallthru
        _
      // Predicated region
      $region33: #{preact_bn_resblock4_forward.11} parent=11 // pred_check
        %p372 = pneg %p244
      $region34: #{preact_bn_resblock4_forward.11} parent=11 // pred_check_branch
        %374 = sbr.rel (%p372) target = $region36
      $region35: #{preact_bn_resblock4_forward.11} parent=11 // pred_region
        _
      $region36: #{preact_bn_resblock4_forward.11} parent=11 // pred_fallthru
        _
      // Predicated region
      $region37: #{preact_bn_resblock4_forward.11} parent=11 // pred_check
        %p375 = pneg %p293
      $region38: #{preact_bn_resblock4_forward.11} parent=11 // pred_check_branch
        %377 = sbr.rel (%p375) target = $region40
      $region39: #{preact_bn_resblock4_forward.11} parent=11 // pred_region
        _
      $region40: #{preact_bn_resblock4_forward.11} parent=11 // pred_fallthru
        _
      // Predicated region
      $region41: #{preact_bn_resblock4_forward.11} parent=11 // pred_check
        %p378 = pneg %p314
      $region42: #{preact_bn_resblock4_forward.11} parent=11 // pred_check_branch
        %380 = sbr.rel (%p378) target = $region44
      $region43: #{preact_bn_resblock4_forward.11} parent=11 // pred_region
        _
      $region44: #{preact_bn_resblock4_forward.11} parent=11 // pred_fallthru
        _
    $region12: #{preact_bn_resblock4_forward.11} parent=5 // pred_fallthru
      _
    %p381 = scmp.lt.s32.totalorder %s18, 32
    // Predicated region
    $region45: #{preact_bn_resblock4_forward.11} parent=5 // pred_check
      %p382 = pneg %p381
    $region46: #{preact_bn_resblock4_forward.11} parent=5 // pred_check_branch
      %384 = sbr.rel (%p382) target = $region48
    $region47: #{preact_bn_resblock4_forward.11} parent=5 // pred_region
      // Predicated region
      $region49: #{preact_bn_resblock4_forward.11} parent=47 // pred_check
        %p385 = pneg %p52
      $region50: #{preact_bn_resblock4_forward.11} parent=47 // pred_check_branch
        %387 = sbr.rel (%p385) target = $region52
      $region51: #{preact_bn_resblock4_forward.11} parent=47 // pred_region
        %p388 = scmp.lt.s32.totalorder %s25, 1
        %s389 = scalar_select %p388, %s25, 1
        %p390 = scmp.lt.s32.totalorder %s26, 17
        %s391 = scalar_select %p390, %s26, 17
        %s392 = smul.addr %s391, 3
        %s393 = smul.addr %s389, 54
        %s394 = sadd.s32 %s392, %s393
        %s395 = smul.addr %s394, 8
        %s396 = scalar_lea.vmem %s0, %s395
      $region52: #{preact_bn_resblock4_forward.11} parent=47 // pred_fallthru
        _
      // Predicated region
      $region53: #{preact_bn_resblock4_forward.11} parent=47 // pred_check
        %p397 = pneg %p82
      $region54: #{preact_bn_resblock4_forward.11} parent=47 // pred_check_branch
        %399 = sbr.rel (%p397) target = $region56
      $region55: #{preact_bn_resblock4_forward.11} parent=47 // pred_region
        %s400 = sadd.s32 %s26, 1
        %p401 = scmp.lt.s32.totalorder %s25, 1
        %s402 = scalar_select %p401, %s25, 1
        %p403 = scmp.lt.s32.totalorder %s400, 17
        %s404 = scalar_select %p403, %s400, 17
        %s405 = smul.addr %s404, 3
        %s406 = smul.addr %s402, 54
        %s407 = sadd.s32 %s405, %s406
        %s408 = smul.addr %s407, 8
        %s409 = scalar_lea.vmem %s1, %s408
        %s410 = sadd.s32 %s26, 1
      $region56: #{preact_bn_resblock4_forward.11} parent=47 // pred_fallthru
        _
      // Predicated region
      $region57: #{preact_bn_resblock4_forward.11} parent=47 // pred_check
        %p411 = pneg %p112
      $region58: #{preact_bn_resblock4_forward.11} parent=47 // pred_check_branch
        %413 = sbr.rel (%p411) target = $region60
      $region59: #{preact_bn_resblock4_forward.11} parent=47 // pred_region
        %s414 = sadd.s32 %s26, 2
        %p415 = scmp.lt.s32.totalorder %s25, 1
        %s416 = scalar_select %p415, %s25, 1
        %p417 = scmp.lt.s32.totalorder %s414, 17
        %s418 = scalar_select %p417, %s414, 17
        %s419 = smul.addr %s418, 3
        %s420 = smul.addr %s416, 54
        %s421 = sadd.s32 %s419, %s420
        %s422 = smul.addr %s421, 8
        %s423 = scalar_lea.vmem %s2, %s422
        %s424 = sadd.s32 %s26, 2
      $region60: #{preact_bn_resblock4_forward.11} parent=47 // pred_fallthru
        _
      // Predicated region
      $region61: #{preact_bn_resblock4_forward.11} parent=47 // pred_check
        %p425 = pneg %p266
      $region62: #{preact_bn_resblock4_forward.11} parent=47 // pred_check_branch
        %427 = sbr.rel (%p425) target = $region64
      $region63: #{preact_bn_resblock4_forward.11} parent=47 // pred_region
        %p428 = scmp.lt.s32.totalorder %s25, 1
        %s429 = scalar_select %p428, %s25, 1
        %p430 = scmp.lt.s32.totalorder %s26, 15
        %s431 = scalar_select %p430, %s26, 15
        %s432 = smul.addr %s431, 2
        %s433 = smul.addr %s429, 32
        %s434 = sadd.s32 %s432, %s433
        %s435 = smul.addr %s434, 8
        %s436 = scalar_lea.vmem %s9, %s435
      $region64: #{preact_bn_resblock4_forward.11} parent=47 // pred_fallthru
        _
    $region48: #{preact_bn_resblock4_forward.11} parent=5 // pred_fallthru
      _
    %p437 = scmp.le.s32.totalorder 1, %s18
    %p438 = scmp.lt.s32.totalorder %s18, 33
    %p439 = pnand %p437, %p438
    %p440 = pneg %p439
    // Predicated region
    $region65: #{preact_bn_resblock4_forward.11} parent=5 // pred_check
      _
    $region66: #{preact_bn_resblock4_forward.11} parent=5 // pred_check_branch
      %442 = sbr.rel (%p439) target = $region68
    $region67: #{preact_bn_resblock4_forward.11} parent=5 // pred_region
      %s443 = ssub.s32 %s18, 1
      %p444 = scmp.lt.s32.totalorder %s27, 1
      %s445 = scalar_select %p444, %s27, 1
      %p446 = scmp.lt.s32.totalorder %s28, 17
      %s447 = scalar_select %p446, %s28, 17
      %s448 = smul.addr %s447, 3
      %s449 = smul.addr %s445, 54
      %s450 = sadd.s32 %s448, %s449
      %s451 = smul.addr %s450, 8
      %s452 = scalar_lea.vmem %s0, %s451
      %p453 = pneg %p58
      %p454 = pneg %p55
      %s455 = sadd.s32 %s28, 1
      %p456 = scmp.lt.s32.totalorder %s27, 1
      %s457 = scalar_select %p456, %s27, 1
      %p458 = scmp.lt.s32.totalorder %s455, 17
      %s459 = scalar_select %p458, %s455, 17
      %s460 = smul.addr %s459, 3
      %s461 = smul.addr %s457, 54
      %s462 = sadd.s32 %s460, %s461
      %s463 = smul.addr %s462, 8
      %s464 = scalar_lea.vmem %s1, %s463
      %p465 = pneg %p88
      %p466 = pneg %p85
      %s467 = sadd.s32 %s28, 2
      %p468 = scmp.lt.s32.totalorder %s27, 1
      %s469 = scalar_select %p468, %s27, 1
      %p470 = scmp.lt.s32.totalorder %s467, 17
      %s471 = scalar_select %p470, %s467, 17
      %s472 = smul.addr %s471, 3
      %s473 = smul.addr %s469, 54
      %s474 = sadd.s32 %s472, %s473
      %s475 = smul.addr %s474, 8
      %s476 = scalar_lea.vmem %s2, %s475
      %p477 = pneg %p118
      %p478 = pneg %p115
      %p479 = pneg %p139
      %p480 = pneg %p136
      %p481 = pneg %p160
      %p482 = pneg %p157
      %p483 = pneg %p181
      %p484 = pneg %p178
      %p485 = pneg %p202
      %p486 = pneg %p199
      %p487 = pneg %p223
      %p488 = pneg %p220
      %p489 = pneg %p244
      %p490 = pneg %p241
      %p491 = scmp.lt.s32.totalorder %s27, 1
      %s492 = scalar_select %p491, %s27, 1
      %p493 = scmp.lt.s32.totalorder %s28, 15
      %s494 = scalar_select %p493, %s28, 15
      %s495 = smul.addr %s494, 2
      %s496 = smul.addr %s492, 32
      %s497 = sadd.s32 %s495, %s496
      %s498 = smul.addr %s497, 8
      %s499 = scalar_lea.vmem %s9, %s498
      %p500 = pneg %p272
      %p501 = pneg %p269
      %p502 = pneg %p293
      %p503 = pneg %p290
      %p504 = pneg %p314
      %p505 = pneg %p311
      %p506 = pneg %p342
      %p507 = pneg %p339
      %p508 = scmp.lt.s32.totalorder %s27, 1
      %s509 = scalar_select %p508, %s27, 1
      %p510 = scmp.lt.s32.totalorder %s28, 15
      %s511 = scalar_select %p510, %s28, 15
      %s512 = smul.addr %s511, 2
      %s513 = smul.addr %s509, 32
      %s514 = sadd.s32 %s512, %s513
      %s515 = smul.addr %s514, 8
      %s516 = scalar_lea.vmem %s12, %s515
      %p517 = scmp.lt.s32.totalorder %s27, 1
      %s518 = scalar_select %p517, %s27, 1
      %p519 = scmp.lt.s32.totalorder %s28, 17
      %s520 = scalar_select %p519, %s28, 17
      %s521 = smul.addr %s520, 3
      %s522 = smul.addr %s518, 54
      %s523 = sadd.s32 %s521, %s522
      %s524 = smul.addr %s523, 8
      %s525 = scalar_lea.vmem %s0, %s524
      %s526 = sadd.s32 %s28, 1
      %p527 = scmp.lt.s32.totalorder %s27, 1
      %s528 = scalar_select %p527, %s27, 1
      %p529 = scmp.lt.s32.totalorder %s526, 17
      %s530 = scalar_select %p529, %s526, 17
      %s531 = smul.addr %s530, 3
      %s532 = smul.addr %s528, 54
      %s533 = sadd.s32 %s531, %s532
      %s534 = smul.addr %s533, 8
      %s535 = scalar_lea.vmem %s1, %s534
      %s536 = sadd.s32 %s28, 1
      %s537 = sadd.s32 %s28, 2
      %p538 = scmp.lt.s32.totalorder %s27, 1
      %s539 = scalar_select %p538, %s27, 1
      %p540 = scmp.lt.s32.totalorder %s537, 17
      %s541 = scalar_select %p540, %s537, 17
      %s542 = smul.addr %s541, 3
      %s543 = smul.addr %s539, 54
      %s544 = sadd.s32 %s542, %s543
      %s545 = smul.addr %s544, 8
      %s546 = scalar_lea.vmem %s2, %s545
      %s547 = sadd.s32 %s28, 2
      %p548 = scmp.lt.s32.totalorder %s27, 1
      %s549 = scalar_select %p548, %s27, 1
      %p550 = scmp.lt.s32.totalorder %s28, 15
      %s551 = scalar_select %p550, %s28, 15
      %s552 = smul.addr %s551, 2
      %s553 = smul.addr %s549, 32
      %s554 = sadd.s32 %s552, %s553
      %s555 = smul.addr %s554, 8
      %s556 = scalar_lea.vmem %s9, %s555
      %p557 = scmp.lt.s32.totalorder %s27, 1
      %s558 = scalar_select %p557, %s27, 1
      %p559 = scmp.lt.s32.totalorder %s28, 15
      %s560 = scalar_select %p559, %s28, 15
      %s561 = smul.addr %s560, 2
      %s562 = smul.addr %s558, 32
      %s563 = sadd.s32 %s561, %s562
      %s564 = smul.addr %s563, 8
      %s565 = scalar_lea.vmem %s12, %s564
      %v566 = vld [vmem:[%s4] sm:$0x1]
      %v567 = vld [vmem:[%s5] sm:$0x1]
      %v568 = vmul.f32 %v566, %v567
      %v569 = vld [vmem:[%s6] sm:$0x1]
      %v570 = vld [vmem:[%s3] sm:$0x1]
      %v571 = vmul.f32 %v570, %v568
      %v572 = vsub.f32 %v569, %v571
      %v573 = vld [vmem:[%s525] sm:$0xff]
      %v574 = vld [vmem:[%s525 + $0x8] sm:$0xff]
      %v575 = vld [vmem:[%s525 + $0x10] sm:$0x3]
      %v577 = vlaneseq
      %v578 = vshrl.u32 %v577, 7
      %v579 = vsub.s32 0, %v578
      %v580 = vrot.slane %v568, %v579
      %v582 = vmul.f32 %v573, %v580
      %v583 = vmul.f32 %v574, %v580
      %v584 = vmul.f32 %v575, %v580
      %v586 = vlaneseq
      %v587 = vshrl.u32 %v586, 7
      %v588 = vsub.s32 0, %v587
      %v589 = vrot.slane %v572, %v588
      %v591 = vadd.f32 %v582, %v589
      %v592 = vadd.f32 %v583, %v589
      %v593 = vadd.f32 %v584, %v589
      %vm594 = vcmp.ge.f32.partialorder %v591, 0.0
      %vm595 = vcmp.ge.f32.partialorder %v592, 0.0
      %vm596 = vcmp.ge.f32.partialorder %v593, 0.0
      %v597 = vmul.f32 %v591, 0.01
      %v598 = vmul.f32 %v592, 0.01
      %v599 = vmul.f32 %v593, 0.01
      %v600 = vsel %vm594, %v591, %v597
      %v601 = vsel %vm595, %v592, %v598
      %v602 = vsel %vm596, %v593, %v599
      %p603 = scmp.ge.s32.totalorder %s28, 1
      %p604 = scmp.le.s32.totalorder %s28, 16
      %p605 = pnand %p603, %p604
      %p606 = pneg %p605
      %v607 = vlaneseq
      %v608 = vshrl.u32 %v607, 7
      %v609 = vadd.s32 %v608, 8
      %v610 = vadd.s32 %v608, 16
      %vm611 = vcmp.ge.s32.totalorder %v608, 1
      %vm612 = vcmp.ge.s32.totalorder %v609, 1
      %vm613 = vcmp.ge.s32.totalorder %v610, 1
      %vm614 = vcmp.le.s32.totalorder %v608, 16
      %vm615 = vcmp.le.s32.totalorder %v609, 16
      %vm616 = vcmp.le.s32.totalorder %v610, 16
      %vm617 = vmand %vm611, %vm614
      %vm618 = vmand %vm612, %vm615
      %vm619 = vmand %vm613, %vm616
      %s620 = scalar_select %p606, 1, 0
      %v621 = vstv %s620
      %vm622 = vcmp.eq.s32.totalorder %v621, 1
      %vm623 = vmand %vm622, %vm617
      %vm624 = vmand %vm622, %vm618
      %vm625 = vmand %vm622, %vm619
      %v626 = vsel %vm623, %v600, 0.0
      %v627 = vsel %vm624, %v601, 0.0
      %v628 = vsel %vm625, %v602, 0.0
      %v629 = vld [vmem:[%s535] sm:$0xff]
      %v630 = vld [vmem:[%s535 + $0x8] sm:$0xff]
      %v631 = vld [vmem:[%s535 + $0x10] sm:$0x3]
      %v632 = vmul.f32 %v629, %v580
      %v633 = vmul.f32 %v630, %v580
      %v634 = vmul.f32 %v631, %v580
      %v635 = vadd.f32 %v632, %v589
      %v636 = vadd.f32 %v633, %v589
      %v637 = vadd.f32 %v634, %v589
      %vm638 = vcmp.ge.f32.partialorder %v635, 0.0
      %vm639 = vcmp.ge.f32.partialorder %v636, 0.0
      %vm640 = vcmp.ge.f32.partialorder %v637, 0.0
      %v641 = vmul.f32 %v635, 0.01
      %v642 = vmul.f32 %v636, 0.01
      %v643 = vmul.f32 %v637, 0.01
      %v644 = vsel %vm638, %v635, %v641
      %v645 = vsel %vm639, %v636, %v642
      %v646 = vsel %vm640, %v637, %v643
      %s647 = sadd.s32 %s28, 1
      %p648 = scmp.ge.s32.totalorder %s647, 1
      %p649 = scmp.le.s32.totalorder %s647, 16
      %p650 = pnand %p648, %p649
      %p651 = pneg %p650
      %s652 = scalar_select %p651, 1, 0
      %v653 = vstv %s652
      %vm654 = vcmp.eq.s32.totalorder %v653, 1
      %vm655 = vmand %vm654, %vm617
      %vm656 = vmand %vm654, %vm618
      %vm657 = vmand %vm654, %vm619
      %v658 = vsel %vm655, %v644, 0.0
      %v659 = vsel %vm656, %v645, 0.0
      %v660 = vsel %vm657, %v646, 0.0
      %v661 = vld [vmem:[%s546] sm:$0xff]
      %v662 = vld [vmem:[%s546 + $0x8] sm:$0xff]
      %v663 = vld [vmem:[%s546 + $0x10] sm:$0x3]
      %v664 = vmul.f32 %v661, %v580
      %v665 = vmul.f32 %v662, %v580
      %v666 = vmul.f32 %v663, %v580
      %v667 = vadd.f32 %v664, %v589
      %v668 = vadd.f32 %v665, %v589
      %v669 = vadd.f32 %v666, %v589
      %vm670 = vcmp.ge.f32.partialorder %v667, 0.0
      %vm671 = vcmp.ge.f32.partialorder %v668, 0.0
      %vm672 = vcmp.ge.f32.partialorder %v669, 0.0
      %v673 = vmul.f32 %v667, 0.01
      %v674 = vmul.f32 %v668, 0.01
      %v675 = vmul.f32 %v669, 0.01
      %v676 = vsel %vm670, %v667, %v673
      %v677 = vsel %vm671, %v668, %v674
      %v678 = vsel %vm672, %v669, %v675
      %s679 = sadd.s32 %s28, 2
      %p680 = scmp.ge.s32.totalorder %s679, 1
      %p681 = scmp.le.s32.totalorder %s679, 16
      %p682 = pnand %p680, %p681
      %p683 = pneg %p682
      %s684 = scalar_select %p683, 1, 0
      %v685 = vstv %s684
      %vm686 = vcmp.eq.s32.totalorder %v685, 1
      %vm687 = vmand %vm686, %vm617
      %vm688 = vmand %vm686, %vm618
      %vm689 = vmand %vm686, %vm619
      %v690 = vsel %vm687, %v676, 0.0
      %v691 = vsel %vm688, %v677, 0.0
      %v692 = vsel %vm689, %v678, 0.0
      %vm696 = vcmask 1046528
      %v697 = vrot.slane %v626, 1
      %v698 = vrot.slane %v627, 1
      %v699 = vsel %vm696, %v697, %v698
      %v700 = vrot.slane %v628, 1
      %v701 = vsel %vm696, %v698, %v700
      %vm704 = vcmask 1045504
      %v705 = vrot.slane %v626, 2
      %v706 = vrot.slane %v627, 2
      %v707 = vsel %vm704, %v705, %v706
      %v708 = vrot.slane %v628, 2
      %v709 = vsel %vm704, %v706, %v708
      %v715 = vrot.slane %v658, 1
      %v716 = vrot.slane %v659, 1
      %v717 = vsel %vm696, %v715, %v716
      %v718 = vrot.slane %v660, 1
      %v719 = vsel %vm696, %v716, %v718
      %v722 = vrot.slane %v658, 2
      %v723 = vrot.slane %v659, 2
      %v724 = vsel %vm704, %v722, %v723
      %v725 = vrot.slane %v660, 2
      %v726 = vsel %vm704, %v723, %v725
      %v732 = vrot.slane %v690, 1
      %v733 = vrot.slane %v691, 1
      %v734 = vsel %vm696, %v732, %v733
      %v735 = vrot.slane %v692, 1
      %v736 = vsel %vm696, %v733, %v735
      %v739 = vrot.slane %v690, 2
      %v740 = vrot.slane %v691, 2
      %v741 = vsel %vm704, %v739, %v740
      %v742 = vrot.slane %v692, 2
      %v743 = vsel %vm704, %v740, %v742
      %v746 = vld [vmem:[%s7] sm:$0xff]
      %v747 = vld [vmem:[%s7 + $0x8] sm:$0xff]
      %v748 = vld [vmem:[%s7 + $0x10] sm:$0xff]
      %v749 = vld [vmem:[%s7 + $0x18] sm:$0xff]
      %v750 = vld [vmem:[%s7 + $0x20] sm:$0xff]
      %v751 = vld [vmem:[%s7 + $0x28] sm:$0xff]
      %v752 = vld [vmem:[%s7 + $0x30] sm:$0xff]
      %v753 = vld [vmem:[%s7 + $0x38] sm:$0xff]
      %v754 = vld [vmem:[%s7 + $0x40] sm:$0xff]
      %v755 = vld [vmem:[%s7 + $0x48] sm:$0xff]
      %v756 = vld [vmem:[%s7 + $0x50] sm:$0xff]
      %v757 = vld [vmem:[%s7 + $0x58] sm:$0xff]
      %v758 = vld [vmem:[%s7 + $0x60] sm:$0xff]
      %v759 = vld [vmem:[%s7 + $0x68] sm:$0xff]
      %v760 = vld [vmem:[%s7 + $0x70] sm:$0xff]
      %v761 = vld [vmem:[%s7 + $0x78] sm:$0xff]
      %v762 = vld [vmem:[%s7 + $0x80] sm:$0xff]
      %v763 = vld [vmem:[%s7 + $0x88] sm:$0xff]
      %v764 = vld [vmem:[%s7 + $0x90] sm:$0xff]
      %v765 = vld [vmem:[%s7 + $0x98] sm:$0xff]
      %v766 = vld [vmem:[%s7 + $0xa0] sm:$0xff]
      %v767 = vld [vmem:[%s7 + $0xa8] sm:$0xff]
      %v768 = vld [vmem:[%s7 + $0xb0] sm:$0xff]
      %v769 = vld [vmem:[%s7 + $0xb8] sm:$0xff]
      %v770 = vld [vmem:[%s7 + $0xc0] sm:$0xff]
      %v771 = vld [vmem:[%s7 + $0xc8] sm:$0xff]
      %v772 = vld [vmem:[%s7 + $0xd0] sm:$0xff]
      %v773 = vld [vmem:[%s7 + $0xd8] sm:$0xff]
      %v774 = vld [vmem:[%s7 + $0xe0] sm:$0xff]
      %v775 = vld [vmem:[%s7 + $0xe8] sm:$0xff]
      %v776 = vld [vmem:[%s7 + $0xf0] sm:$0xff]
      %v777 = vld [vmem:[%s7 + $0xf8] sm:$0xff]
      %v778 = vld [vmem:[%s7 + $0x100] sm:$0xff]
      %v779 = vld [vmem:[%s7 + $0x108] sm:$0xff]
      %v780 = vld [vmem:[%s7 + $0x110] sm:$0xff]
      %v781 = vld [vmem:[%s7 + $0x118] sm:$0xff]
      %v782 = vld [vmem:[%s7 + $0x120] sm:$0xff]
      %v783 = vld [vmem:[%s7 + $0x128] sm:$0xff]
      %v784 = vld [vmem:[%s7 + $0x130] sm:$0xff]
      %v785 = vld [vmem:[%s7 + $0x138] sm:$0xff]
      %v786 = vld [vmem:[%s7 + $0x140] sm:$0xff]
      %v787 = vld [vmem:[%s7 + $0x148] sm:$0xff]
      %v788 = vld [vmem:[%s7 + $0x150] sm:$0xff]
      %v789 = vld [vmem:[%s7 + $0x158] sm:$0xff]
      %v790 = vld [vmem:[%s7 + $0x160] sm:$0xff]
      %v791 = vld [vmem:[%s7 + $0x168] sm:$0xff]
      %v792 = vld [vmem:[%s7 + $0x170] sm:$0xff]
      %v793 = vld [vmem:[%s7 + $0x178] sm:$0xff]
      %v794 = vld [vmem:[%s7 + $0x180] sm:$0xff]
      %v795 = vld [vmem:[%s7 + $0x188] sm:$0xff]
      %v796 = vld [vmem:[%s7 + $0x190] sm:$0xff]
      %v797 = vld [vmem:[%s7 + $0x198] sm:$0xff]
      %v798 = vld [vmem:[%s7 + $0x1a0] sm:$0xff]
      %v799 = vld [vmem:[%s7 + $0x1a8] sm:$0xff]
      %v800 = vld [vmem:[%s7 + $0x1b0] sm:$0xff]
      %v801 = vld [vmem:[%s7 + $0x1b8] sm:$0xff]
      %v802 = vld [vmem:[%s7 + $0x1c0] sm:$0xff]
      %v803 = vld [vmem:[%s7 + $0x1c8] sm:$0xff]
      %v804 = vld [vmem:[%s7 + $0x1d0] sm:$0xff]
      %v805 = vld [vmem:[%s7 + $0x1d8] sm:$0xff]
      %v806 = vld [vmem:[%s7 + $0x1e0] sm:$0xff]
      %v807 = vld [vmem:[%s7 + $0x1e8] sm:$0xff]
      %v808 = vld [vmem:[%s7 + $0x1f0] sm:$0xff]
      %v809 = vld [vmem:[%s7 + $0x1f8] sm:$0xff]
      %v810 = vld [vmem:[%s7 + $0x200] sm:$0xff]
      %v811 = vld [vmem:[%s7 + $0x208] sm:$0xff]
      %v812 = vld [vmem:[%s7 + $0x210] sm:$0xff]
      %v813 = vld [vmem:[%s7 + $0x218] sm:$0xff]
      %v814 = vld [vmem:[%s7 + $0x220] sm:$0xff]
      %v815 = vld [vmem:[%s7 + $0x228] sm:$0xff]
      %v816 = vld [vmem:[%s7 + $0x230] sm:$0xff]
      %v817 = vld [vmem:[%s7 + $0x238] sm:$0xff]
      %v818 = vld [vmem:[%s7 + $0x240] sm:$0xff]
      %v819 = vld [vmem:[%s7 + $0x248] sm:$0xff]
      %v820 = vld [vmem:[%s7 + $0x250] sm:$0xff]
      %v821 = vld [vmem:[%s7 + $0x258] sm:$0xff]
      %v822 = vld [vmem:[%s7 + $0x260] sm:$0xff]
      %v823 = vld [vmem:[%s7 + $0x268] sm:$0xff]
      %v824 = vld [vmem:[%s7 + $0x270] sm:$0xff]
      %v825 = vld [vmem:[%s7 + $0x278] sm:$0xff]
      %v826 = vld [vmem:[%s7 + $0x280] sm:$0xff]
      %v827 = vld [vmem:[%s7 + $0x288] sm:$0xff]
      %v828 = vld [vmem:[%s7 + $0x290] sm:$0xff]
      %v829 = vld [vmem:[%s7 + $0x298] sm:$0xff]
      %v830 = vld [vmem:[%s7 + $0x2a0] sm:$0xff]
      %v831 = vld [vmem:[%s7 + $0x2a8] sm:$0xff]
      %v832 = vld [vmem:[%s7 + $0x2b0] sm:$0xff]
      %v833 = vld [vmem:[%s7 + $0x2b8] sm:$0xff]
      %v834 = vld [vmem:[%s7 + $0x2c0] sm:$0xff]
      %v835 = vld [vmem:[%s7 + $0x2c8] sm:$0xff]
      %v836 = vld [vmem:[%s7 + $0x2d0] sm:$0xff]
      %v837 = vld [vmem:[%s7 + $0x2d8] sm:$0xff]
      %v838 = vld [vmem:[%s7 + $0x2e0] sm:$0xff]
      %v839 = vld [vmem:[%s7 + $0x2e8] sm:$0xff]
      %v840 = vld [vmem:[%s7 + $0x2f0] sm:$0xff]
      %v841 = vld [vmem:[%s7 + $0x2f8] sm:$0xff]
      %v842 = vld [vmem:[%s7 + $0x300] sm:$0xff]
      %v843 = vld [vmem:[%s7 + $0x308] sm:$0xff]
      %v844 = vld [vmem:[%s7 + $0x310] sm:$0xff]
      %v845 = vld [vmem:[%s7 + $0x318] sm:$0xff]
      %v846 = vld [vmem:[%s7 + $0x320] sm:$0xff]
      %v847 = vld [vmem:[%s7 + $0x328] sm:$0xff]
      %v848 = vld [vmem:[%s7 + $0x330] sm:$0xff]
      %v849 = vld [vmem:[%s7 + $0x338] sm:$0xff]
      %v850 = vld [vmem:[%s7 + $0x340] sm:$0xff]
      %v851 = vld [vmem:[%s7 + $0x348] sm:$0xff]
      %v852 = vld [vmem:[%s7 + $0x350] sm:$0xff]
      %v853 = vld [vmem:[%s7 + $0x358] sm:$0xff]
      %v854 = vld [vmem:[%s7 + $0x360] sm:$0xff]
      %v855 = vld [vmem:[%s7 + $0x368] sm:$0xff]
      %v856 = vld [vmem:[%s7 + $0x370] sm:$0xff]
      %v857 = vld [vmem:[%s7 + $0x378] sm:$0xff]
      %v858 = vld [vmem:[%s7 + $0x380] sm:$0xff]
      %v859 = vld [vmem:[%s7 + $0x388] sm:$0xff]
      %v860 = vld [vmem:[%s7 + $0x390] sm:$0xff]
      %v861 = vld [vmem:[%s7 + $0x398] sm:$0xff]
      %v862 = vld [vmem:[%s7 + $0x3a0] sm:$0xff]
      %v863 = vld [vmem:[%s7 + $0x3a8] sm:$0xff]
      %v864 = vld [vmem:[%s7 + $0x3b0] sm:$0xff]
      %v865 = vld [vmem:[%s7 + $0x3b8] sm:$0xff]
      %v866 = vld [vmem:[%s7 + $0x3c0] sm:$0xff]
      %v867 = vld [vmem:[%s7 + $0x3c8] sm:$0xff]
      %v868 = vld [vmem:[%s7 + $0x3d0] sm:$0xff]
      %v869 = vld [vmem:[%s7 + $0x3d8] sm:$0xff]
      %v870 = vld [vmem:[%s7 + $0x3e0] sm:$0xff]
      %v871 = vld [vmem:[%s7 + $0x3e8] sm:$0xff]
      %v872 = vld [vmem:[%s7 + $0x3f0] sm:$0xff]
      %v873 = vld [vmem:[%s7 + $0x3f8] sm:$0xff]
      %v874 = vld [vmem:[%s7 + $0x400] sm:$0xff]
      %v875 = vld [vmem:[%s7 + $0x408] sm:$0xff]
      %v876 = vld [vmem:[%s7 + $0x410] sm:$0xff]
      %v877 = vld [vmem:[%s7 + $0x418] sm:$0xff]
      %v878 = vld [vmem:[%s7 + $0x420] sm:$0xff]
      %v879 = vld [vmem:[%s7 + $0x428] sm:$0xff]
      %v880 = vld [vmem:[%s7 + $0x430] sm:$0xff]
      %v881 = vld [vmem:[%s7 + $0x438] sm:$0xff]
      %v882 = vld [vmem:[%s7 + $0x440] sm:$0xff]
      %v883 = vld [vmem:[%s7 + $0x448] sm:$0xff]
      %v884 = vld [vmem:[%s7 + $0x450] sm:$0xff]
      %v885 = vld [vmem:[%s7 + $0x458] sm:$0xff]
      %v886 = vld [vmem:[%s7 + $0x460] sm:$0xff]
      %v887 = vld [vmem:[%s7 + $0x468] sm:$0xff]
      %v888 = vld [vmem:[%s7 + $0x470] sm:$0xff]
      %v889 = vld [vmem:[%s7 + $0x478] sm:$0xff]
      %v890 = vld [vmem:[%s8] sm:$0x1]
      %v892 = vlaneseq
      %v893 = vshrl.u32 %v892, 7
      %v894 = vsub.s32 0, %v893
      %v895 = vrot.slane %v890, %v894
      %897 = vmatprep.subr.mxu0 0.0
      %898 = vmatpush1.msra.mxu0 %v746
      %899 = vmatprep.subr.mxu0 0.0
      %900 = vmatpush1.msra.mxu0 %v747
      %901 = vmatprep.subr.mxu0 0.0
      %902 = vmatpush1.msra.mxu0 %v748
      %903 = vmatprep.subr.mxu0 0.0
      %904 = vmatpush1.msra.mxu0 %v749
      %905 = vmatprep.subr.mxu0 0.0
      %906 = vmatpush1.msra.mxu0 %v750
      %907 = vmatprep.subr.mxu0 0.0
      %908 = vmatpush1.msra.mxu0 %v751
      %909 = vmatprep.subr.mxu0 0.0
      %910 = vmatpush1.msra.mxu0 %v752
      %911 = vmatprep.subr.mxu0 0.0
      %912 = vmatpush1.msra.mxu0 %v753
      %913 = vmatprep.subr.mxu0 0.0
      %914 = vmatpush1.msra.mxu0 %v754
      %915 = vmatprep.subr.mxu0 0.0
      %916 = vmatpush1.msra.mxu0 %v755
      %917 = vmatprep.subr.mxu0 0.0
      %918 = vmatpush1.msra.mxu0 %v756
      %919 = vmatprep.subr.mxu0 0.0
      %920 = vmatpush1.msra.mxu0 %v757
      %921 = vmatprep.subr.mxu0 0.0
      %922 = vmatpush1.msra.mxu0 %v758
      %923 = vmatprep.subr.mxu0 0.0
      %924 = vmatpush1.msra.mxu0 %v759
      %925 = vmatprep.subr.mxu0 0.0
      %926 = vmatpush1.msra.mxu0 %v760
      %927 = vmatprep.subr.mxu0 0.0
      %928 = vmatpush1.msra.mxu0 %v761
      %929 = vmatprep.subr.mxu0 0.0
      %930 = vmatpush1.msra.mxu0 %v762
      %931 = vmatprep.subr.mxu0 0.0
      %932 = vmatpush1.msra.mxu0 %v763
      %933 = vmatprep.subr.mxu0 0.0
      %934 = vmatpush1.msra.mxu0 %v764
      %935 = vmatprep.subr.mxu0 0.0
      %936 = vmatpush1.msra.mxu0 %v765
      %937 = vmatprep.subr.mxu0 0.0
      %938 = vmatpush1.msra.mxu0 %v766
      %939 = vmatprep.subr.mxu0 0.0
      %940 = vmatpush1.msra.mxu0 %v767
      %941 = vmatprep.subr.mxu0 0.0
      %942 = vmatpush1.msra.mxu0 %v768
      %943 = vmatprep.subr.mxu0 0.0
      %944 = vmatpush1.msra.mxu0 %v769
      %945 = vmatprep.subr.mxu0 0.0
      %946 = vmatpush1.msra.mxu0 %v770
      %947 = vmatprep.subr.mxu0 0.0
      %948 = vmatpush1.msra.mxu0 %v771
      %949 = vmatprep.subr.mxu0 0.0
      %950 = vmatpush1.msra.mxu0 %v772
      %951 = vmatprep.subr.mxu0 0.0
      %952 = vmatpush1.msra.mxu0 %v773
      %953 = vmatprep.subr.mxu0 0.0
      %954 = vmatpush1.msra.mxu0 %v774
      %955 = vmatprep.subr.mxu0 0.0
      %956 = vmatpush1.msra.mxu0 %v775
      %957 = vmatprep.subr.mxu0 0.0
      %958 = vmatpush1.msra.mxu0 %v776
      %959 = vmatprep.subr.mxu0 0.0
      %960 = vmatpush1.msra.mxu0 %v777
      %961 = vmatprep.mubr.f32.mxu0 %v699
      %962 = vmatmul.mubr.f32.gmra.mrb[0].mxu0 %v626
      %v963 = vpop.f32.mrb[0].mxu0
      %v964 = vadd.f32 %v895, %v963
      %v965 = vpop.f32.mrb[0].mxu0
      %966 = vmatprep.mubr.f32.mxu0 %v701
      %967 = vmatmul.mubr.f32.gmra.mrb[0].mxu0 %v627
      %v968 = vpop.f32.mrb[0].mxu0
      %v969 = vadd.f32 %v895, %v968
      %v970 = vpop.f32.mrb[0].mxu0
      %971 = vdwg.mxu0
      %972 = vmatprep.subr.mxu0 0.0
      %973 = vmatpush1.msra.mxu0 %v778
      %974 = vmatprep.subr.mxu0 0.0
      %975 = vmatpush1.msra.mxu0 %v779
      %976 = vmatprep.subr.mxu0 0.0
      %977 = vmatpush1.msra.mxu0 %v780
      %978 = vmatprep.subr.mxu0 0.0
      %979 = vmatpush1.msra.mxu0 %v781
      %980 = vmatprep.subr.mxu0 0.0
      %981 = vmatpush1.msra.mxu0 %v782
      %982 = vmatprep.subr.mxu0 0.0
      %983 = vmatpush1.msra.mxu0 %v783
      %984 = vmatprep.subr.mxu0 0.0
      %985 = vmatpush1.msra.mxu0 %v784
      %986 = vmatprep.subr.mxu0 0.0
      %987 = vmatpush1.msra.mxu0 %v785
      %988 = vmatprep.subr.mxu0 0.0
      %989 = vmatpush1.msra.mxu0 %v786
      %990 = vmatprep.subr.mxu0 0.0
      %991 = vmatpush1.msra.mxu0 %v787
      %992 = vmatprep.subr.mxu0 0.0
      %993 = vmatpush1.msra.mxu0 %v788
      %994 = vmatprep.subr.mxu0 0.0
      %995 = vmatpush1.msra.mxu0 %v789
      %996 = vmatprep.subr.mxu0 0.0
      %997 = vmatpush1.msra.mxu0 %v790
      %998 = vmatprep.subr.mxu0 0.0
      %999 = vmatpush1.msra.mxu0 %v791
      %1000 = vmatprep.subr.mxu0 0.0
      %1001 = vmatpush1.msra.mxu0 %v792
      %1002 = vmatprep.subr.mxu0 0.0
      %1003 = vmatpush1.msra.mxu0 %v793
      %1004 = vmatprep.subr.mxu0 0.0
      %1005 = vmatpush1.msra.mxu0 %v794
      %1006 = vmatprep.subr.mxu0 0.0
      %1007 = vmatpush1.msra.mxu0 %v795
      %1008 = vmatprep.subr.mxu0 0.0
      %1009 = vmatpush1.msra.mxu0 %v796
      %1010 = vmatprep.subr.mxu0 0.0
      %1011 = vmatpush1.msra.mxu0 %v797
      %1012 = vmatprep.subr.mxu0 0.0
      %1013 = vmatpush1.msra.mxu0 %v798
      %1014 = vmatprep.subr.mxu0 0.0
      %1015 = vmatpush1.msra.mxu0 %v799
      %1016 = vmatprep.subr.mxu0 0.0
      %1017 = vmatpush1.msra.mxu0 %v800
      %1018 = vmatprep.subr.mxu0 0.0
      %1019 = vmatpush1.msra.mxu0 %v801
      %1020 = vmatprep.subr.mxu0 0.0
      %1021 = vmatpush1.msra.mxu0 %v802
      %1022 = vmatprep.subr.mxu0 0.0
      %1023 = vmatpush1.msra.mxu0 %v803
      %1024 = vmatprep.subr.mxu0 0.0
      %1025 = vmatpush1.msra.mxu0 %v804
      %1026 = vmatprep.subr.mxu0 0.0
      %1027 = vmatpush1.msra.mxu0 %v805
      %1028 = vmatprep.subr.mxu0 0.0
      %1029 = vmatpush1.msra.mxu0 %v806
      %1030 = vmatprep.subr.mxu0 0.0
      %1031 = vmatpush1.msra.mxu0 %v807
      %1032 = vmatprep.subr.mxu0 0.0
      %1033 = vmatpush1.msra.mxu0 %v808
      %1034 = vmatprep.subr.mxu0 0.0
      %1035 = vmatpush1.msra.mxu0 %v809
      %1036 = vmatprep.mubr.f32.mxu0 %v658
      %1037 = vmatmul.mubr.f32.gmra.mrb[0].mxu0 %v707
      %v1038 = vpop.f32.mrb[0].mxu0
      %v1039 = vadd.f32 %v964, %v1038
      %v1040 = vpop.f32.mrb[0].mxu0
      %1041 = vmatprep.mubr.f32.mxu0 %v659
      %1042 = vmatmul.mubr.f32.gmra.mrb[0].mxu0 %v709
      %v1043 = vpop.f32.mrb[0].mxu0
      %v1044 = vadd.f32 %v969, %v1043
      %v1045 = vpop.f32.mrb[0].mxu0
      %1046 = vdwg.mxu0
      %1047 = vmatprep.subr.mxu0 0.0
      %1048 = vmatpush1.msra.mxu0 %v810
      %1049 = vmatprep.subr.mxu0 0.0
      %1050 = vmatpush1.msra.mxu0 %v811
      %1051 = vmatprep.subr.mxu0 0.0
      %1052 = vmatpush1.msra.mxu0 %v812
      %1053 = vmatprep.subr.mxu0 0.0
      %1054 = vmatpush1.msra.mxu0 %v813
      %1055 = vmatprep.subr.mxu0 0.0
      %1056 = vmatpush1.msra.mxu0 %v814
      %1057 = vmatprep.subr.mxu0 0.0
      %1058 = vmatpush1.msra.mxu0 %v815
      %1059 = vmatprep.subr.mxu0 0.0
      %1060 = vmatpush1.msra.mxu0 %v816
      %1061 = vmatprep.subr.mxu0 0.0
      %1062 = vmatpush1.msra.mxu0 %v817
      %1063 = vmatprep.subr.mxu0 0.0
      %1064 = vmatpush1.msra.mxu0 %v818
      %1065 = vmatprep.subr.mxu0 0.0
      %1066 = vmatpush1.msra.mxu0 %v819
      %1067 = vmatprep.subr.mxu0 0.0
      %1068 = vmatpush1.msra.mxu0 %v820
      %1069 = vmatprep.subr.mxu0 0.0
      %1070 = vmatpush1.msra.mxu0 %v821
      %1071 = vmatprep.subr.mxu0 0.0
      %1072 = vmatpush1.msra.mxu0 %v822
      %1073 = vmatprep.subr.mxu0 0.0
      %1074 = vmatpush1.msra.mxu0 %v823
      %1075 = vmatprep.subr.mxu0 0.0
      %1076 = vmatpush1.msra.mxu0 %v824
      %1077 = vmatprep.subr.mxu0 0.0
      %1078 = vmatpush1.msra.mxu0 %v825
      %1079 = vmatprep.subr.mxu0 0.0
      %1080 = vmatpush1.msra.mxu0 %v826
      %1081 = vmatprep.subr.mxu0 0.0
      %1082 = vmatpush1.msra.mxu0 %v827
      %1083 = vmatprep.subr.mxu0 0.0
      %1084 = vmatpush1.msra.mxu0 %v828
      %1085 = vmatprep.subr.mxu0 0.0
      %1086 = vmatpush1.msra.mxu0 %v829
      %1087 = vmatprep.subr.mxu0 0.0
      %1088 = vmatpush1.msra.mxu0 %v830
      %1089 = vmatprep.subr.mxu0 0.0
      %1090 = vmatpush1.msra.mxu0 %v831
      %1091 = vmatprep.subr.mxu0 0.0
      %1092 = vmatpush1.msra.mxu0 %v832
      %1093 = vmatprep.subr.mxu0 0.0
      %1094 = vmatpush1.msra.mxu0 %v833
      %1095 = vmatprep.subr.mxu0 0.0
      %1096 = vmatpush1.msra.mxu0 %v834
      %1097 = vmatprep.subr.mxu0 0.0
      %1098 = vmatpush1.msra.mxu0 %v835
      %1099 = vmatprep.subr.mxu0 0.0
      %1100 = vmatpush1.msra.mxu0 %v836
      %1101 = vmatprep.subr.mxu0 0.0
      %1102 = vmatpush1.msra.mxu0 %v837
      %1103 = vmatprep.subr.mxu0 0.0
      %1104 = vmatpush1.msra.mxu0 %v838
      %1105 = vmatprep.subr.mxu0 0.0
      %1106 = vmatpush1.msra.mxu0 %v839
      %1107 = vmatprep.subr.mxu0 0.0
      %1108 = vmatpush1.msra.mxu0 %v840
      %1109 = vmatprep.subr.mxu0 0.0
      %1110 = vmatpush1.msra.mxu0 %v841
      %1111 = vmatprep.mubr.f32.mxu0 %v724
      %1112 = vmatmul.mubr.f32.gmra.mrb[0].mxu0 %v717
      %v1113 = vpop.f32.mrb[0].mxu0
      %v1114 = vadd.f32 %v1039, %v1113
      %v1115 = vpop.f32.mrb[0].mxu0
      %1116 = vmatprep.mubr.f32.mxu0 %v726
      %1117 = vmatmul.mubr.f32.gmra.mrb[0].mxu0 %v719
      %v1118 = vpop.f32.mrb[0].mxu0
      %v1119 = vadd.f32 %v1044, %v1118
      %v1120 = vpop.f32.mrb[0].mxu0
      %1121 = vdwg.mxu0
      %1122 = vmatprep.subr.mxu0 0.0
      %1123 = vmatpush1.msra.mxu0 %v842
      %1124 = vmatprep.subr.mxu0 0.0
      %1125 = vmatpush1.msra.mxu0 %v843
      %1126 = vmatprep.subr.mxu0 0.0
      %1127 = vmatpush1.msra.mxu0 %v844
      %1128 = vmatprep.subr.mxu0 0.0
      %1129 = vmatpush1.msra.mxu0 %v845
      %1130 = vmatprep.subr.mxu0 0.0
      %1131 = vmatpush1.msra.mxu0 %v846
      %1132 = vmatprep.subr.mxu0 0.0
      %1133 = vmatpush1.msra.mxu0 %v847
      %1134 = vmatprep.subr.mxu0 0.0
      %1135 = vmatpush1.msra.mxu0 %v848
      %1136 = vmatprep.subr.mxu0 0.0
      %1137 = vmatpush1.msra.mxu0 %v849
      %1138 = vmatprep.subr.mxu0 0.0
      %1139 = vmatpush1.msra.mxu0 %v850
      %1140 = vmatprep.subr.mxu0 0.0
      %1141 = vmatpush1.msra.mxu0 %v851
      %1142 = vmatprep.subr.mxu0 0.0
      %1143 = vmatpush1.msra.mxu0 %v852
      %1144 = vmatprep.subr.mxu0 0.0
      %1145 = vmatpush1.msra.mxu0 %v853
      %1146 = vmatprep.subr.mxu0 0.0
      %1147 = vmatpush1.msra.mxu0 %v854
      %1148 = vmatprep.subr.mxu0 0.0
      %1149 = vmatpush1.msra.mxu0 %v855
      %1150 = vmatprep.subr.mxu0 0.0
      %1151 = vmatpush1.msra.mxu0 %v856
      %1152 = vmatprep.subr.mxu0 0.0
      %1153 = vmatpush1.msra.mxu0 %v857
      %1154 = vmatprep.subr.mxu0 0.0
      %1155 = vmatpush1.msra.mxu0 %v858
      %1156 = vmatprep.subr.mxu0 0.0
      %1157 = vmatpush1.msra.mxu0 %v859
      %1158 = vmatprep.subr.mxu0 0.0
      %1159 = vmatpush1.msra.mxu0 %v860
      %1160 = vmatprep.subr.mxu0 0.0
      %1161 = vmatpush1.msra.mxu0 %v861
      %1162 = vmatprep.subr.mxu0 0.0
      %1163 = vmatpush1.msra.mxu0 %v862
      %1164 = vmatprep.subr.mxu0 0.0
      %1165 = vmatpush1.msra.mxu0 %v863
      %1166 = vmatprep.subr.mxu0 0.0
      %1167 = vmatpush1.msra.mxu0 %v864
      %1168 = vmatprep.subr.mxu0 0.0
      %1169 = vmatpush1.msra.mxu0 %v865
      %1170 = vmatprep.subr.mxu0 0.0
      %1171 = vmatpush1.msra.mxu0 %v866
      %1172 = vmatprep.subr.mxu0 0.0
      %1173 = vmatpush1.msra.mxu0 %v867
      %1174 = vmatprep.subr.mxu0 0.0
      %1175 = vmatpush1.msra.mxu0 %v868
      %1176 = vmatprep.subr.mxu0 0.0
      %1177 = vmatpush1.msra.mxu0 %v869
      %1178 = vmatprep.subr.mxu0 0.0
      %1179 = vmatpush1.msra.mxu0 %v870
      %1180 = vmatprep.subr.mxu0 0.0
      %1181 = vmatpush1.msra.mxu0 %v871
      %1182 = vmatprep.subr.mxu0 0.0
      %1183 = vmatpush1.msra.mxu0 %v872
      %1184 = vmatprep.subr.mxu0 0.0
      %1185 = vmatpush1.msra.mxu0 %v873
      %1186 = vmatprep.mubr.f32.mxu0 %v734
      %1187 = vmatmul.mubr.f32.gmra.mrb[0].mxu0 %v690
      %v1188 = vpop.f32.mrb[0].mxu0
      %v1189 = vadd.f32 %v1114, %v1188
      %v1190 = vpop.f32.mrb[0].mxu0
      %1191 = vmatprep.mubr.f32.mxu0 %v736
      %1192 = vmatmul.mubr.f32.gmra.mrb[0].mxu0 %v691
      %v1193 = vpop.f32.mrb[0].mxu0
      %v1194 = vadd.f32 %v1119, %v1193
      %v1195 = vpop.f32.mrb[0].mxu0
      %1196 = vdwg.mxu0
      %1197 = vmatprep.subr.mxu0 0.0
      %1198 = vmatpush1.msra.mxu0 %v874
      %1199 = vmatprep.subr.mxu0 0.0
      %1200 = vmatpush1.msra.mxu0 %v875
      %1201 = vmatprep.subr.mxu0 0.0
      %1202 = vmatpush1.msra.mxu0 %v876
      %1203 = vmatprep.subr.mxu0 0.0
      %1204 = vmatpush1.msra.mxu0 %v877
      %1205 = vmatprep.subr.mxu0 0.0
      %1206 = vmatpush1.msra.mxu0 %v878
      %1207 = vmatprep.subr.mxu0 0.0
      %1208 = vmatpush1.msra.mxu0 %v879
      %1209 = vmatprep.subr.mxu0 0.0
      %1210 = vmatpush1.msra.mxu0 %v880
      %1211 = vmatprep.subr.mxu0 0.0
      %1212 = vmatpush1.msra.mxu0 %v881
      %1213 = vmatprep.subr.mxu0 0.0
      %1214 = vmatpush1.msra.mxu0 %v882
      %1215 = vmatprep.subr.mxu0 0.0
      %1216 = vmatpush1.msra.mxu0 %v883
      %1217 = vmatprep.subr.mxu0 0.0
      %1218 = vmatpush1.msra.mxu0 %v884
      %1219 = vmatprep.subr.mxu0 0.0
      %1220 = vmatpush1.msra.mxu0 %v885
      %1221 = vmatprep.subr.mxu0 0.0
      %1222 = vmatpush1.msra.mxu0 %v886
      %1223 = vmatprep.subr.mxu0 0.0
      %1224 = vmatpush1.msra.mxu0 %v887
      %1225 = vmatprep.subr.mxu0 0.0
      %1226 = vmatpush1.msra.mxu0 %v888
      %1227 = vmatprep.subr.mxu0 0.0
      %1228 = vmatpush1.msra.mxu0 %v889
      %1229 = vmatprep.subr.mxu0 0.0
      %1230 = vmatpush1.msra.mxu0 0.0
      %1231 = vmatprep.subr.mxu0 0.0
      %1232 = vmatpush1.msra.mxu0 0.0
      %1233 = vmatprep.subr.mxu0 0.0
      %1234 = vmatpush1.msra.mxu0 0.0
      %1235 = vmatprep.subr.mxu0 0.0
      %1236 = vmatpush1.msra.mxu0 0.0
      %1237 = vmatprep.subr.mxu0 0.0
      %1238 = vmatpush1.msra.mxu0 0.0
      %1239 = vmatprep.subr.mxu0 0.0
      %1240 = vmatpush1.msra.mxu0 0.0
      %1241 = vmatprep.subr.mxu0 0.0
      %1242 = vmatpush1.msra.mxu0 0.0
      %1243 = vmatprep.subr.mxu0 0.0
      %1244 = vmatpush1.msra.mxu0 0.0
      %1245 = vmatprep.subr.mxu0 0.0
      %1246 = vmatpush1.msra.mxu0 0.0
      %1247 = vmatprep.subr.mxu0 0.0
      %1248 = vmatpush1.msra.mxu0 0.0
      %1249 = vmatprep.subr.mxu0 0.0
      %1250 = vmatpush1.msra.mxu0 0.0
      %1251 = vmatprep.subr.mxu0 0.0
      %1252 = vmatpush1.msra.mxu0 0.0
      %1253 = vmatprep.subr.mxu0 0.0
      %1254 = vmatpush1.msra.mxu0 0.0
      %1255 = vmatprep.subr.mxu0 0.0
      %1256 = vmatpush1.msra.mxu0 0.0
      %1257 = vmatprep.subr.mxu0 0.0
      %1258 = vmatpush1.msra.mxu0 0.0
      %1259 = vmatprep.subr.mxu0 0.0
      %1260 = vmatpush1.msra.mxu0 0.0
      %1261 = vmatprep.mubr.f32.mxu0 0.0
      %1262 = vmatmul.mubr.f32.gmra.mrb[0].mxu0 %v741
      %v1263 = vpop.f32.mrb[0].mxu0
      %v1264 = vadd.f32 %v1189, %v1263
      %v1265 = vpop.f32.mrb[0].mxu0
      %1266 = vmatprep.mubr.f32.mxu0 0.0
      %1267 = vmatmul.mubr.f32.gmra.mrb[0].mxu0 %v743
      %v1268 = vpop.f32.mrb[0].mxu0
      %v1269 = vadd.f32 %v1194, %v1268
      %v1270 = vpop.f32.mrb[0].mxu0
      %1271 = vdwg.mxu0
      %v1272 = vld [vmem:[%s556] sm:$0xff]
      %v1273 = vld [vmem:[%s556 + $0x8] sm:$0xff]
      %v1274 = vld [vmem:[%s10] sm:$0xff]
      %v1275 = vld [vmem:[%s10 + $0x8] sm:$0xff]
      %v1276 = vld [vmem:[%s10 + $0x10] sm:$0xff]
      %v1277 = vld [vmem:[%s10 + $0x18] sm:$0xff]
      %v1278 = vld [vmem:[%s10 + $0x20] sm:$0xff]
      %v1279 = vld [vmem:[%s10 + $0x28] sm:$0xff]
      %v1280 = vld [vmem:[%s10 + $0x30] sm:$0xff]
      %v1281 = vld [vmem:[%s10 + $0x38] sm:$0xff]
      %v1282 = vld [vmem:[%s10 + $0x40] sm:$0xff]
      %v1283 = vld [vmem:[%s10 + $0x48] sm:$0xff]
      %v1284 = vld [vmem:[%s10 + $0x50] sm:$0xff]
      %v1285 = vld [vmem:[%s10 + $0x58] sm:$0xff]
      %v1286 = vld [vmem:[%s10 + $0x60] sm:$0xff]
      %v1287 = vld [vmem:[%s10 + $0x68] sm:$0xff]
      %v1288 = vld [vmem:[%s10 + $0x70] sm:$0xff]
      %v1289 = vld [vmem:[%s10 + $0x78] sm:$0xff]
      %1290 = vmatprep.subr.mxu0 0.0
      %1291 = vmatpush1.msra.mxu0 %v1274
      %1292 = vmatprep.subr.mxu0 0.0
      %1293 = vmatpush1.msra.mxu0 %v1275
      %1294 = vmatprep.subr.mxu0 0.0
      %1295 = vmatpush1.msra.mxu0 %v1276
      %1296 = vmatprep.subr.mxu0 0.0
      %1297 = vmatpush1.msra.mxu0 %v1277
      %1298 = vmatprep.subr.mxu0 0.0
      %1299 = vmatpush1.msra.mxu0 %v1278
      %1300 = vmatprep.subr.mxu0 0.0
      %1301 = vmatpush1.msra.mxu0 %v1279
      %1302 = vmatprep.subr.mxu0 0.0
      %1303 = vmatpush1.msra.mxu0 %v1280
      %1304 = vmatprep.subr.mxu0 0.0
      %1305 = vmatpush1.msra.mxu0 %v1281
      %1306 = vmatprep.subr.mxu0 0.0
      %1307 = vmatpush1.msra.mxu0 %v1282
      %1308 = vmatprep.subr.mxu0 0.0
      %1309 = vmatpush1.msra.mxu0 %v1283
      %1310 = vmatprep.subr.mxu0 0.0
      %1311 = vmatpush1.msra.mxu0 %v1284
      %1312 = vmatprep.subr.mxu0 0.0
      %1313 = vmatpush1.msra.mxu0 %v1285
      %1314 = vmatprep.subr.mxu0 0.0
      %1315 = vmatpush1.msra.mxu0 %v1286
      %1316 = vmatprep.subr.mxu0 0.0
      %1317 = vmatpush1.msra.mxu0 %v1287
      %1318 = vmatprep.subr.mxu0 0.0
      %1319 = vmatpush1.msra.mxu0 %v1288
      %1320 = vmatprep.subr.mxu0 0.0
      %1321 = vmatpush1.msra.mxu0 %v1289
      %1322 = vmatprep.subr.mxu0 0.0
      %1323 = vmatpush1.msra.mxu0 0.0
      %1324 = vmatprep.subr.mxu0 0.0
      %1325 = vmatpush1.msra.mxu0 0.0
      %1326 = vmatprep.subr.mxu0 0.0
      %1327 = vmatpush1.msra.mxu0 0.0
      %1328 = vmatprep.subr.mxu0 0.0
      %1329 = vmatpush1.msra.mxu0 0.0
      %1330 = vmatprep.subr.mxu0 0.0
      %1331 = vmatpush1.msra.mxu0 0.0
      %1332 = vmatprep.subr.mxu0 0.0
      %1333 = vmatpush1.msra.mxu0 0.0
      %1334 = vmatprep.subr.mxu0 0.0
      %1335 = vmatpush1.msra.mxu0 0.0
      %1336 = vmatprep.subr.mxu0 0.0
      %1337 = vmatpush1.msra.mxu0 0.0
      %1338 = vmatprep.subr.mxu0 0.0
      %1339 = vmatpush1.msra.mxu0 0.0
      %1340 = vmatprep.subr.mxu0 0.0
      %1341 = vmatpush1.msra.mxu0 0.0
      %1342 = vmatprep.subr.mxu0 0.0
      %1343 = vmatpush1.msra.mxu0 0.0
      %1344 = vmatprep.subr.mxu0 0.0
      %1345 = vmatpush1.msra.mxu0 0.0
      %1346 = vmatprep.subr.mxu0 0.0
      %1347 = vmatpush1.msra.mxu0 0.0
      %1348 = vmatprep.subr.mxu0 0.0
      %1349 = vmatpush1.msra.mxu0 0.0
      %1350 = vmatprep.subr.mxu0 0.0
      %1351 = vmatpush1.msra.mxu0 0.0
      %1352 = vmatprep.subr.mxu0 0.0
      %1353 = vmatpush1.msra.mxu0 0.0
      %1354 = vmatprep.mubr.f32.mxu0 0.0
      %1355 = vmatmul.mubr.f32.gmra.mrb[0].mxu0 %v1272
      %v1356 = vpop.f32.mrb[0].mxu0
      %v1357 = vadd.f32 0.0, %v1356
      %v1358 = vpop.f32.mrb[0].mxu0
      %1359 = vmatprep.mubr.f32.mxu0 0.0
      %1360 = vmatmul.mubr.f32.gmra.mrb[0].mxu0 %v1273
      %v1361 = vpop.f32.mrb[0].mxu0
      %v1362 = vadd.f32 0.0, %v1361
      %v1363 = vpop.f32.mrb[0].mxu0
      %1364 = vdwg.mxu0
      %v1365 = vadd.f32 %v1264, %v1357
      %v1366 = vadd.f32 %v1269, %v1362
      %v1367 = vld [vmem:[%s11] sm:$0x1]
      %v1369 = vlaneseq
      %v1370 = vshrl.u32 %v1369, 7
      %v1371 = vsub.s32 0, %v1370
      %v1372 = vrot.slane %v1367, %v1371
      %v1374 = vadd.f32 %v1365, %v1372
      %v1375 = vadd.f32 %v1366, %v1372
      %1376 = vst [vmem:[%s565] sm:$0xff] %v1374
      %1377 = vst [vmem:[%s565 + $0x8] sm:$0xff] %v1375
      %p1378 = scmp.lt.s32.totalorder %s27, 1
      %s1379 = scalar_select %p1378, %s27, 1
      %p1380 = scmp.lt.s32.totalorder %s28, 15
      %s1381 = scalar_select %p1380, %s28, 15
      %s1382 = smul.addr %s1381, 2
      %s1383 = smul.addr %s1379, 32
      %s1384 = sadd.s32 %s1382, %s1383
      %s1385 = smul.addr %s1384, 8
      %s1386 = scalar_lea.vmem %s12, %s1385
      // Predicated region
      $region69: #{preact_bn_resblock4_forward.11} parent=67 // pred_check
        %p1387 = pneg %p339
      $region70: #{preact_bn_resblock4_forward.11} parent=67 // pred_check_branch
        %1389 = sbr.rel (%p1387) target = $region72
      $region71: #{preact_bn_resblock4_forward.11} parent=67 // pred_region
        _
      $region72: #{preact_bn_resblock4_forward.11} parent=67 // pred_fallthru
        _
    $region68: #{preact_bn_resblock4_forward.11} parent=5 // pred_fallthru
      _
    %p1390 = scmp.le.s32.totalorder 2, %s18
    // Predicated region
    $region73: #{preact_bn_resblock4_forward.11} parent=5 // pred_check
      %p1391 = pneg %p1390
    $region74: #{preact_bn_resblock4_forward.11} parent=5 // pred_check_branch
      %1393 = sbr.rel (%p1391) target = $region76
    $region75: #{preact_bn_resblock4_forward.11} parent=5 // pred_region
      %s1394 = ssub.s32 %s18, 2
      // Predicated region
      $region77: #{preact_bn_resblock4_forward.11} parent=75 // pred_check
        %p1395 = pneg %p345
      $region78: #{preact_bn_resblock4_forward.11} parent=75 // pred_check_branch
        %1397 = sbr.rel (%p1395) target = $region80
      $region79: #{preact_bn_resblock4_forward.11} parent=75 // pred_region
        %p1398 = scmp.lt.s32.totalorder %s29, 1
        %s1399 = scalar_select %p1398, %s29, 1
        %p1400 = scmp.lt.s32.totalorder %s30, 15
        %s1401 = scalar_select %p1400, %s30, 15
        %s1402 = smul.addr %s1401, 2
        %s1403 = smul.addr %s1399, 32
        %s1404 = sadd.s32 %s1402, %s1403
        %s1405 = smul.addr %s1404, 8
        %s1406 = scalar_lea.vmem %s12, %s1405
      $region80: #{preact_bn_resblock4_forward.11} parent=75 // pred_fallthru
        _
    $region76: #{preact_bn_resblock4_forward.11} parent=5 // pred_fallthru
      _
  $region6: #{preact_bn_resblock4_forward.11} parent=0 // loop_footer
    %s22 = sadd.s32 1, %s18
  $region7: #{preact_bn_resblock4_forward.11} parent=0 // loop_footer_branch
    %17 = sbr.rel target = $region3
  $region8: #{preact_bn_resblock4_forward.11} parent=0 // loop_exit
    _

// kernel: preact_bn_resblock4_forward.15
$region0: #{preact_bn_resblock4_forward.15}
  #allocation0 [shape = 'u32[]', space=smem, size = 0x4, offset = 0x4, fixed_abs, tag = 'smem constant byte address 0x4 - core index']
  #allocation1 [shape = 'u32[144,128]{1,0:T(1,128)}', space=vmem, size = 0x12000, scoped, tag = 'internal scratch']
  %s0 = inlined_call_operand.vmem [shape: f32[2,18,18,128], index: 0, kind: input, shape index: {}, may-alias: {0,1,2}]
  %s1 = inlined_call_operand.vmem [shape: f32[2,18,18,128], index: 1, kind: input, shape index: {}, may-alias: {0,1,2}]
  %s2 = inlined_call_operand.vmem [shape: f32[2,18,18,128], index: 2, kind: input, shape index: {}, may-alias: {0,1,2}]
  %s3 = inlined_call_operand.vmem [shape: f32[1,128], index: 3, kind: input, shape index: {}]
  %s4 = inlined_call_operand.vmem [shape: f32[1,128], index: 4, kind: input, shape index: {}]
  %s5 = inlined_call_operand.vmem [shape: f32[1,128], index: 5, kind: input, shape index: {}]
  %s6 = inlined_call_operand.vmem [shape: f32[1,128], index: 6, kind: input, shape index: {}]
  %s7 = inlined_call_operand.vmem [shape: f32[1152,128], index: 7, kind: input, shape index: {}]
  %s8 = inlined_call_operand.vmem [shape: f32[1,128], index: 8, kind: input, shape index: {}]
  %s9 = inlined_call_operand.vmem [shape: f32[2,16,16,128], index: 9, kind: input, shape index: {}]
  %s10 = inlined_call_operand.vmem [shape: f32[2,16,16,128], index: 10, kind: output, shape index: {}]
  %s11 = sld [smem:[#allocation0]]
  $region73: #{preact_bn_resblock4_forward.15} parent=0
    _
  %s13 = ssub.s32 1, %s11
  %s14 = scalar_select 0, %s13, %s11
  loop: start=0, step=1, limit=34
  $region2: #{preact_bn_resblock4_forward.15} parent=0 // loop_pre_header
    _
  $region3: #{preact_bn_resblock4_forward.15} parent=0 // loop_header
    %s16 = sphi 0, %s20
    %p17 = scmp.ge.s32.totalorder %s16, 34
    %s23 = sphi 0, %s35
    %s24 = sphi 0, %s31
    %s25 = sphi 0, %s23
    %s26 = sphi 0, %s24
    %s27 = sphi 0, %s25
    %s28 = sphi 0, %s26
    %s40 = sphi 0, %s42
    %s43 = sphi 0, %s40
    %s44 = sphi 0, %s43
    %s60 = sphi 0, %s44
    %s70 = sphi 0, %s72
    %s73 = sphi 0, %s70
    %s74 = sphi 0, %s73
    %s90 = sphi 0, %s74
    %s100 = sphi 0, %s102
    %s103 = sphi 0, %s100
    %s104 = sphi 0, %s103
    %s120 = sphi 0, %s104
    %s124 = sphi 0, %s124
    %s126 = sphi 0, %s124
    %s127 = sphi 0, %s126
    %s141 = sphi 0, %s127
    %s145 = sphi 0, %s145
    %s147 = sphi 0, %s145
    %s148 = sphi 0, %s147
    %s162 = sphi 0, %s148
    %s166 = sphi 0, %s166
    %s168 = sphi 0, %s166
    %s169 = sphi 0, %s168
    %s183 = sphi 0, %s169
    %s187 = sphi 0, %s187
    %s189 = sphi 0, %s187
    %s190 = sphi 0, %s189
    %s204 = sphi 0, %s190
    %s208 = sphi 0, %s208
    %s210 = sphi 0, %s208
    %s211 = sphi 0, %s210
    %s225 = sphi 0, %s211
    %s229 = sphi 0, %s229
    %s231 = sphi 0, %s229
    %s232 = sphi 0, %s231
    %s246 = sphi 0, %s232
    %s254 = sphi 0, %s256
    %s257 = sphi 0, %s254
    %s258 = sphi 0, %s257
    %s274 = sphi 0, %s258
    %s282 = sphi 0, %s284
    %s285 = sphi 0, %s282
    %s286 = sphi 0, %s285
    %s302 = sphi 0, %s286
  $region4: #{preact_bn_resblock4_forward.15} parent=0 // loop_header_branch
    %19 = sbr.rel (%p17) target = $region8
  $region5: #{preact_bn_resblock4_forward.15} parent=0 // loop_body
    %s21 = ssub.s32 %s16, 1
    %s22 = ssub.s32 %s16, 2
    %s29 = sadd.s32 1, %s24
    %p30 = scmp.ge.s32.totalorder %s29, 16
    %s31 = scalar_select %p30, 0, %s29
    %s32 = sadd.s32 1, %s23
    %s33 = scalar_select %p30, %s32, %s23
    %p34 = scmp.ge.s32.totalorder %s33, 2
    %s35 = scalar_select %p34, 0, %s33
    %s36 = ssub.s32 %s23, %s35
    %s37 = ssub.s32 %s24, %s31
    %s38 = sor.u32 %s36, %s37
    %p39 = scmp.eq.s32.totalorder %s38, 0
    %s41 = sadd.s32 %s40, 1
    %s42 = scalar_select %p39, %s40, %s41
    %p45 = pneg %p39
    %p46 = scmp.eq.s32.totalorder %s16, 31
    %p47 = por %p45, %p46
    %p48 = scmp.ne.s32.totalorder %s40, %s43
    %p49 = scmp.eq.s32.totalorder %s16, 0
    %p50 = por %p48, %p49
    %p51 = scmp.ne.s32.totalorder %s40, %s43
    %p52 = scmp.eq.s32.totalorder %s21, 31
    %p53 = por %p51, %p52
    %p54 = scmp.ne.s32.totalorder %s43, %s44
    %p55 = scmp.eq.s32.totalorder %s21, 0
    %p56 = por %p54, %p55
    %p57 = scmp.ne.s32.totalorder %s43, %s44
    %p58 = scmp.eq.s32.totalorder %s22, 31
    %p59 = por %p57, %p58
    %p61 = scmp.ne.s32.totalorder %s44, %s60
    %p62 = scmp.eq.s32.totalorder %s22, 0
    %p63 = por %p61, %p62
    %s64 = sadd.s32 %s24, 1
    %s65 = sadd.s32 %s31, 1
    %s66 = ssub.s32 %s23, %s35
    %s67 = ssub.s32 %s64, %s65
    %s68 = sor.u32 %s66, %s67
    %p69 = scmp.eq.s32.totalorder %s68, 0
    %s71 = sadd.s32 %s70, 1
    %s72 = scalar_select %p69, %s70, %s71
    %p75 = pneg %p69
    %p76 = scmp.eq.s32.totalorder %s16, 31
    %p77 = por %p75, %p76
    %p78 = scmp.ne.s32.totalorder %s70, %s73
    %p79 = scmp.eq.s32.totalorder %s16, 0
    %p80 = por %p78, %p79
    %p81 = scmp.ne.s32.totalorder %s70, %s73
    %p82 = scmp.eq.s32.totalorder %s21, 31
    %p83 = por %p81, %p82
    %p84 = scmp.ne.s32.totalorder %s73, %s74
    %p85 = scmp.eq.s32.totalorder %s21, 0
    %p86 = por %p84, %p85
    %p87 = scmp.ne.s32.totalorder %s73, %s74
    %p88 = scmp.eq.s32.totalorder %s22, 31
    %p89 = por %p87, %p88
    %p91 = scmp.ne.s32.totalorder %s74, %s90
    %p92 = scmp.eq.s32.totalorder %s22, 0
    %p93 = por %p91, %p92
    %s94 = sadd.s32 %s24, 2
    %s95 = sadd.s32 %s31, 2
    %s96 = ssub.s32 %s23, %s35
    %s97 = ssub.s32 %s94, %s95
    %s98 = sor.u32 %s96, %s97
    %p99 = scmp.eq.s32.totalorder %s98, 0
    %s101 = sadd.s32 %s100, 1
    %s102 = scalar_select %p99, %s100, %s101
    %p105 = pneg %p99
    %p106 = scmp.eq.s32.totalorder %s16, 31
    %p107 = por %p105, %p106
    %p108 = scmp.ne.s32.totalorder %s100, %s103
    %p109 = scmp.eq.s32.totalorder %s16, 0
    %p110 = por %p108, %p109
    %p111 = scmp.ne.s32.totalorder %s100, %s103
    %p112 = scmp.eq.s32.totalorder %s21, 31
    %p113 = por %p111, %p112
    %p114 = scmp.ne.s32.totalorder %s103, %s104
    %p115 = scmp.eq.s32.totalorder %s21, 0
    %p116 = por %p114, %p115
    %p117 = scmp.ne.s32.totalorder %s103, %s104
    %p118 = scmp.eq.s32.totalorder %s22, 31
    %p119 = por %p117, %p118
    %p121 = scmp.ne.s32.totalorder %s104, %s120
    %p122 = scmp.eq.s32.totalorder %s22, 0
    %p123 = por %p121, %p122
    %s125 = sadd.s32 %s124, 1
    %p128 = scmp.eq.s32.totalorder %s16, 31
    %p129 = scmp.ne.s32.totalorder %s124, %s126
    %p130 = scmp.eq.s32.totalorder %s16, 0
    %p131 = por %p129, %p130
    %p132 = scmp.ne.s32.totalorder %s124, %s126
    %p133 = scmp.eq.s32.totalorder %s21, 31
    %p134 = por %p132, %p133
    %p135 = scmp.ne.s32.totalorder %s126, %s127
    %p136 = scmp.eq.s32.totalorder %s21, 0
    %p137 = por %p135, %p136
    %p138 = scmp.ne.s32.totalorder %s126, %s127
    %p139 = scmp.eq.s32.totalorder %s22, 31
    %p140 = por %p138, %p139
    %p142 = scmp.ne.s32.totalorder %s127, %s141
    %p143 = scmp.eq.s32.totalorder %s22, 0
    %p144 = por %p142, %p143
    %s146 = sadd.s32 %s145, 1
    %p149 = scmp.eq.s32.totalorder %s16, 31
    %p150 = scmp.ne.s32.totalorder %s145, %s147
    %p151 = scmp.eq.s32.totalorder %s16, 0
    %p152 = por %p150, %p151
    %p153 = scmp.ne.s32.totalorder %s145, %s147
    %p154 = scmp.eq.s32.totalorder %s21, 31
    %p155 = por %p153, %p154
    %p156 = scmp.ne.s32.totalorder %s147, %s148
    %p157 = scmp.eq.s32.totalorder %s21, 0
    %p158 = por %p156, %p157
    %p159 = scmp.ne.s32.totalorder %s147, %s148
    %p160 = scmp.eq.s32.totalorder %s22, 31
    %p161 = por %p159, %p160
    %p163 = scmp.ne.s32.totalorder %s148, %s162
    %p164 = scmp.eq.s32.totalorder %s22, 0
    %p165 = por %p163, %p164
    %s167 = sadd.s32 %s166, 1
    %p170 = scmp.eq.s32.totalorder %s16, 31
    %p171 = scmp.ne.s32.totalorder %s166, %s168
    %p172 = scmp.eq.s32.totalorder %s16, 0
    %p173 = por %p171, %p172
    %p174 = scmp.ne.s32.totalorder %s166, %s168
    %p175 = scmp.eq.s32.totalorder %s21, 31
    %p176 = por %p174, %p175
    %p177 = scmp.ne.s32.totalorder %s168, %s169
    %p178 = scmp.eq.s32.totalorder %s21, 0
    %p179 = por %p177, %p178
    %p180 = scmp.ne.s32.totalorder %s168, %s169
    %p181 = scmp.eq.s32.totalorder %s22, 31
    %p182 = por %p180, %p181
    %p184 = scmp.ne.s32.totalorder %s169, %s183
    %p185 = scmp.eq.s32.totalorder %s22, 0
    %p186 = por %p184, %p185
    %s188 = sadd.s32 %s187, 1
    %p191 = scmp.eq.s32.totalorder %s16, 31
    %p192 = scmp.ne.s32.totalorder %s187, %s189
    %p193 = scmp.eq.s32.totalorder %s16, 0
    %p194 = por %p192, %p193
    %p195 = scmp.ne.s32.totalorder %s187, %s189
    %p196 = scmp.eq.s32.totalorder %s21, 31
    %p197 = por %p195, %p196
    %p198 = scmp.ne.s32.totalorder %s189, %s190
    %p199 = scmp.eq.s32.totalorder %s21, 0
    %p200 = por %p198, %p199
    %p201 = scmp.ne.s32.totalorder %s189, %s190
    %p202 = scmp.eq.s32.totalorder %s22, 31
    %p203 = por %p201, %p202
    %p205 = scmp.ne.s32.totalorder %s190, %s204
    %p206 = scmp.eq.s32.totalorder %s22, 0
    %p207 = por %p205, %p206
    %s209 = sadd.s32 %s208, 1
    %p212 = scmp.eq.s32.totalorder %s16, 31
    %p213 = scmp.ne.s32.totalorder %s208, %s210
    %p214 = scmp.eq.s32.totalorder %s16, 0
    %p215 = por %p213, %p214
    %p216 = scmp.ne.s32.totalorder %s208, %s210
    %p217 = scmp.eq.s32.totalorder %s21, 31
    %p218 = por %p216, %p217
    %p219 = scmp.ne.s32.totalorder %s210, %s211
    %p220 = scmp.eq.s32.totalorder %s21, 0
    %p221 = por %p219, %p220
    %p222 = scmp.ne.s32.totalorder %s210, %s211
    %p223 = scmp.eq.s32.totalorder %s22, 31
    %p224 = por %p222, %p223
    %p226 = scmp.ne.s32.totalorder %s211, %s225
    %p227 = scmp.eq.s32.totalorder %s22, 0
    %p228 = por %p226, %p227
    %s230 = sadd.s32 %s229, 1
    %p233 = scmp.eq.s32.totalorder %s16, 31
    %p234 = scmp.ne.s32.totalorder %s229, %s231
    %p235 = scmp.eq.s32.totalorder %s16, 0
    %p236 = por %p234, %p235
    %p237 = scmp.ne.s32.totalorder %s229, %s231
    %p238 = scmp.eq.s32.totalorder %s21, 31
    %p239 = por %p237, %p238
    %p240 = scmp.ne.s32.totalorder %s231, %s232
    %p241 = scmp.eq.s32.totalorder %s21, 0
    %p242 = por %p240, %p241
    %p243 = scmp.ne.s32.totalorder %s231, %s232
    %p244 = scmp.eq.s32.totalorder %s22, 31
    %p245 = por %p243, %p244
    %p247 = scmp.ne.s32.totalorder %s232, %s246
    %p248 = scmp.eq.s32.totalorder %s22, 0
    %p249 = por %p247, %p248
    %s250 = ssub.s32 %s23, %s35
    %s251 = ssub.s32 %s24, %s31
    %s252 = sor.u32 %s250, %s251
    %p253 = scmp.eq.s32.totalorder %s252, 0
    %s255 = sadd.s32 %s254, 1
    %s256 = scalar_select %p253, %s254, %s255
    %p259 = pneg %p253
    %p260 = scmp.eq.s32.totalorder %s16, 31
    %p261 = por %p259, %p260
    %p262 = scmp.ne.s32.totalorder %s254, %s257
    %p263 = scmp.eq.s32.totalorder %s16, 0
    %p264 = por %p262, %p263
    %p265 = scmp.ne.s32.totalorder %s254, %s257
    %p266 = scmp.eq.s32.totalorder %s21, 31
    %p267 = por %p265, %p266
    %p268 = scmp.ne.s32.totalorder %s257, %s258
    %p269 = scmp.eq.s32.totalorder %s21, 0
    %p270 = por %p268, %p269
    %p271 = scmp.ne.s32.totalorder %s257, %s258
    %p272 = scmp.eq.s32.totalorder %s22, 31
    %p273 = por %p271, %p272
    %p275 = scmp.ne.s32.totalorder %s258, %s274
    %p276 = scmp.eq.s32.totalorder %s22, 0
    %p277 = por %p275, %p276
    %s278 = ssub.s32 %s23, %s35
    %s279 = ssub.s32 %s24, %s31
    %s280 = sor.u32 %s278, %s279
    %p281 = scmp.eq.s32.totalorder %s280, 0
    %s283 = sadd.s32 %s282, 1
    %s284 = scalar_select %p281, %s282, %s283
    %p287 = pneg %p281
    %p288 = scmp.eq.s32.totalorder %s16, 31
    %p289 = por %p287, %p288
    %p290 = scmp.ne.s32.totalorder %s282, %s285
    %p291 = scmp.eq.s32.totalorder %s16, 0
    %p292 = por %p290, %p291
    %p293 = scmp.ne.s32.totalorder %s282, %s285
    %p294 = scmp.eq.s32.totalorder %s21, 31
    %p295 = por %p293, %p294
    %p296 = scmp.ne.s32.totalorder %s285, %s286
    %p297 = scmp.eq.s32.totalorder %s21, 0
    %p298 = por %p296, %p297
    %p299 = scmp.ne.s32.totalorder %s285, %s286
    %p300 = scmp.eq.s32.totalorder %s22, 31
    %p301 = por %p299, %p300
    %p303 = scmp.ne.s32.totalorder %s286, %s302
    %p304 = scmp.eq.s32.totalorder %s22, 0
    %p305 = por %p303, %p304
    %p306 = scmp.le.s32.totalorder 1, %s16
    %p307 = scmp.lt.s32.totalorder %s16, 33
    %p308 = pnand %p306, %p307
    %p309 = pneg %p308
    // Predicated region
    $region9: #{preact_bn_resblock4_forward.15} parent=5 // pred_check
      _
    $region10: #{preact_bn_resblock4_forward.15} parent=5 // pred_check_branch
      %311 = sbr.rel (%p308) target = $region12
    $region11: #{preact_bn_resblock4_forward.15} parent=5 // pred_region
      %s312 = ssub.s32 %s16, 1
      // Predicated region
      $region13: #{preact_bn_resblock4_forward.15} parent=11 // pred_check
        %p313 = pneg %p137
      $region14: #{preact_bn_resblock4_forward.15} parent=11 // pred_check_branch
        %315 = sbr.rel (%p313) target = $region16
      $region15: #{preact_bn_resblock4_forward.15} parent=11 // pred_region
        _
      $region16: #{preact_bn_resblock4_forward.15} parent=11 // pred_fallthru
        _
      // Predicated region
      $region17: #{preact_bn_resblock4_forward.15} parent=11 // pred_check
        %p316 = pneg %p158
      $region18: #{preact_bn_resblock4_forward.15} parent=11 // pred_check_branch
        %318 = sbr.rel (%p316) target = $region20
      $region19: #{preact_bn_resblock4_forward.15} parent=11 // pred_region
        _
      $region20: #{preact_bn_resblock4_forward.15} parent=11 // pred_fallthru
        _
      // Predicated region
      $region21: #{preact_bn_resblock4_forward.15} parent=11 // pred_check
        %p319 = pneg %p179
      $region22: #{preact_bn_resblock4_forward.15} parent=11 // pred_check_branch
        %321 = sbr.rel (%p319) target = $region24
      $region23: #{preact_bn_resblock4_forward.15} parent=11 // pred_region
        _
      $region24: #{preact_bn_resblock4_forward.15} parent=11 // pred_fallthru
        _
      // Predicated region
      $region25: #{preact_bn_resblock4_forward.15} parent=11 // pred_check
        %p322 = pneg %p200
      $region26: #{preact_bn_resblock4_forward.15} parent=11 // pred_check_branch
        %324 = sbr.rel (%p322) target = $region28
      $region27: #{preact_bn_resblock4_forward.15} parent=11 // pred_region
        _
      $region28: #{preact_bn_resblock4_forward.15} parent=11 // pred_fallthru
        _
      // Predicated region
      $region29: #{preact_bn_resblock4_forward.15} parent=11 // pred_check
        %p325 = pneg %p221
      $region30: #{preact_bn_resblock4_forward.15} parent=11 // pred_check_branch
        %327 = sbr.rel (%p325) target = $region32
      $region31: #{preact_bn_resblock4_forward.15} parent=11 // pred_region
        _
      $region32: #{preact_bn_resblock4_forward.15} parent=11 // pred_fallthru
        _
      // Predicated region
      $region33: #{preact_bn_resblock4_forward.15} parent=11 // pred_check
        %p328 = pneg %p242
      $region34: #{preact_bn_resblock4_forward.15} parent=11 // pred_check_branch
        %330 = sbr.rel (%p328) target = $region36
      $region35: #{preact_bn_resblock4_forward.15} parent=11 // pred_region
        _
      $region36: #{preact_bn_resblock4_forward.15} parent=11 // pred_fallthru
        _
    $region12: #{preact_bn_resblock4_forward.15} parent=5 // pred_fallthru
      _
    %p331 = scmp.lt.s32.totalorder %s16, 32
    // Predicated region
    $region37: #{preact_bn_resblock4_forward.15} parent=5 // pred_check
      %p332 = pneg %p331
    $region38: #{preact_bn_resblock4_forward.15} parent=5 // pred_check_branch
      %334 = sbr.rel (%p332) target = $region40
    $region39: #{preact_bn_resblock4_forward.15} parent=5 // pred_region
      // Predicated region
      $region41: #{preact_bn_resblock4_forward.15} parent=39 // pred_check
        %p335 = pneg %p50
      $region42: #{preact_bn_resblock4_forward.15} parent=39 // pred_check_branch
        %337 = sbr.rel (%p335) target = $region44
      $region43: #{preact_bn_resblock4_forward.15} parent=39 // pred_region
        %p338 = scmp.lt.s32.totalorder %s23, 1
        %s339 = scalar_select %p338, %s23, 1
        %p340 = scmp.lt.s32.totalorder %s24, 17
        %s341 = scalar_select %p340, %s24, 17
        %s342 = smul.addr %s341, 3
        %s343 = smul.addr %s339, 54
        %s344 = sadd.s32 %s342, %s343
        %s345 = smul.addr %s344, 8
        %s346 = scalar_lea.vmem %s0, %s345
      $region44: #{preact_bn_resblock4_forward.15} parent=39 // pred_fallthru
        _
      // Predicated region
      $region45: #{preact_bn_resblock4_forward.15} parent=39 // pred_check
        %p347 = pneg %p80
      $region46: #{preact_bn_resblock4_forward.15} parent=39 // pred_check_branch
        %349 = sbr.rel (%p347) target = $region48
      $region47: #{preact_bn_resblock4_forward.15} parent=39 // pred_region
        %s350 = sadd.s32 %s24, 1
        %p351 = scmp.lt.s32.totalorder %s23, 1
        %s352 = scalar_select %p351, %s23, 1
        %p353 = scmp.lt.s32.totalorder %s350, 17
        %s354 = scalar_select %p353, %s350, 17
        %s355 = smul.addr %s354, 3
        %s356 = smul.addr %s352, 54
        %s357 = sadd.s32 %s355, %s356
        %s358 = smul.addr %s357, 8
        %s359 = scalar_lea.vmem %s1, %s358
        %s360 = sadd.s32 %s24, 1
      $region48: #{preact_bn_resblock4_forward.15} parent=39 // pred_fallthru
        _
      // Predicated region
      $region49: #{preact_bn_resblock4_forward.15} parent=39 // pred_check
        %p361 = pneg %p110
      $region50: #{preact_bn_resblock4_forward.15} parent=39 // pred_check_branch
        %363 = sbr.rel (%p361) target = $region52
      $region51: #{preact_bn_resblock4_forward.15} parent=39 // pred_region
        %s364 = sadd.s32 %s24, 2
        %p365 = scmp.lt.s32.totalorder %s23, 1
        %s366 = scalar_select %p365, %s23, 1
        %p367 = scmp.lt.s32.totalorder %s364, 17
        %s368 = scalar_select %p367, %s364, 17
        %s369 = smul.addr %s368, 3
        %s370 = smul.addr %s366, 54
        %s371 = sadd.s32 %s369, %s370
        %s372 = smul.addr %s371, 8
        %s373 = scalar_lea.vmem %s2, %s372
        %s374 = sadd.s32 %s24, 2
      $region52: #{preact_bn_resblock4_forward.15} parent=39 // pred_fallthru
        _
      // Predicated region
      $region53: #{preact_bn_resblock4_forward.15} parent=39 // pred_check
        %p375 = pneg %p264
      $region54: #{preact_bn_resblock4_forward.15} parent=39 // pred_check_branch
        %377 = sbr.rel (%p375) target = $region56
      $region55: #{preact_bn_resblock4_forward.15} parent=39 // pred_region
        %p378 = scmp.lt.s32.totalorder %s23, 1
        %s379 = scalar_select %p378, %s23, 1
        %p380 = scmp.lt.s32.totalorder %s24, 15
        %s381 = scalar_select %p380, %s24, 15
        %s382 = smul.addr %s381, 2
        %s383 = smul.addr %s379, 32
        %s384 = sadd.s32 %s382, %s383
        %s385 = smul.addr %s384, 8
        %s386 = scalar_lea.vmem %s9, %s385
      $region56: #{preact_bn_resblock4_forward.15} parent=39 // pred_fallthru
        _
    $region40: #{preact_bn_resblock4_forward.15} parent=5 // pred_fallthru
      _
    %p387 = scmp.le.s32.totalorder 1, %s16
    %p388 = scmp.lt.s32.totalorder %s16, 33
    %p389 = pnand %p387, %p388
    %p390 = pneg %p389
    // Predicated region
    $region57: #{preact_bn_resblock4_forward.15} parent=5 // pred_check
      _
    $region58: #{preact_bn_resblock4_forward.15} parent=5 // pred_check_branch
      %392 = sbr.rel (%p389) target = $region60
    $region59: #{preact_bn_resblock4_forward.15} parent=5 // pred_region
      %s393 = ssub.s32 %s16, 1
      %p394 = scmp.lt.s32.totalorder %s25, 1
      %s395 = scalar_select %p394, %s25, 1
      %p396 = scmp.lt.s32.totalorder %s26, 17
      %s397 = scalar_select %p396, %s26, 17
      %s398 = smul.addr %s397, 3
      %s399 = smul.addr %s395, 54
      %s400 = sadd.s32 %s398, %s399
      %s401 = smul.addr %s400, 8
      %s402 = scalar_lea.vmem %s0, %s401
      %p403 = pneg %p56
      %p404 = pneg %p53
      %s405 = sadd.s32 %s26, 1
      %p406 = scmp.lt.s32.totalorder %s25, 1
      %s407 = scalar_select %p406, %s25, 1
      %p408 = scmp.lt.s32.totalorder %s405, 17
      %s409 = scalar_select %p408, %s405, 17
      %s410 = smul.addr %s409, 3
      %s411 = smul.addr %s407, 54
      %s412 = sadd.s32 %s410, %s411
      %s413 = smul.addr %s412, 8
      %s414 = scalar_lea.vmem %s1, %s413
      %p415 = pneg %p86
      %p416 = pneg %p83
      %s417 = sadd.s32 %s26, 2
      %p418 = scmp.lt.s32.totalorder %s25, 1
      %s419 = scalar_select %p418, %s25, 1
      %p420 = scmp.lt.s32.totalorder %s417, 17
      %s421 = scalar_select %p420, %s417, 17
      %s422 = smul.addr %s421, 3
      %s423 = smul.addr %s419, 54
      %s424 = sadd.s32 %s422, %s423
      %s425 = smul.addr %s424, 8
      %s426 = scalar_lea.vmem %s2, %s425
      %p427 = pneg %p116
      %p428 = pneg %p113
      %p429 = pneg %p137
      %p430 = pneg %p134
      %p431 = pneg %p158
      %p432 = pneg %p155
      %p433 = pneg %p179
      %p434 = pneg %p176
      %p435 = pneg %p200
      %p436 = pneg %p197
      %p437 = pneg %p221
      %p438 = pneg %p218
      %p439 = pneg %p242
      %p440 = pneg %p239
      %p441 = scmp.lt.s32.totalorder %s25, 1
      %s442 = scalar_select %p441, %s25, 1
      %p443 = scmp.lt.s32.totalorder %s26, 15
      %s444 = scalar_select %p443, %s26, 15
      %s445 = smul.addr %s444, 2
      %s446 = smul.addr %s442, 32
      %s447 = sadd.s32 %s445, %s446
      %s448 = smul.addr %s447, 8
      %s449 = scalar_lea.vmem %s9, %s448
      %p450 = pneg %p270
      %p451 = pneg %p267
      %p452 = pneg %p298
      %p453 = pneg %p295
      %p454 = scmp.lt.s32.totalorder %s25, 1
      %s455 = scalar_select %p454, %s25, 1
      %p456 = scmp.lt.s32.totalorder %s26, 15
      %s457 = scalar_select %p456, %s26, 15
      %s458 = smul.addr %s457, 2
      %s459 = smul.addr %s455, 32
      %s460 = sadd.s32 %s458, %s459
      %s461 = smul.addr %s460, 8
      %s462 = scalar_lea.vmem %s10, %s461
      %p463 = scmp.lt.s32.totalorder %s25, 1
      %s464 = scalar_select %p463, %s25, 1
      %p465 = scmp.lt.s32.totalorder %s26, 17
      %s466 = scalar_select %p465, %s26, 17
      %s467 = smul.addr %s466, 3
      %s468 = smul.addr %s464, 54
      %s469 = sadd.s32 %s467, %s468
      %s470 = smul.addr %s469, 8
      %s471 = scalar_lea.vmem %s0, %s470
      %s472 = sadd.s32 %s26, 1
      %p473 = scmp.lt.s32.totalorder %s25, 1
      %s474 = scalar_select %p473, %s25, 1
      %p475 = scmp.lt.s32.totalorder %s472, 17
      %s476 = scalar_select %p475, %s472, 17
      %s477 = smul.addr %s476, 3
      %s478 = smul.addr %s474, 54
      %s479 = sadd.s32 %s477, %s478
      %s480 = smul.addr %s479, 8
      %s481 = scalar_lea.vmem %s1, %s480
      %s482 = sadd.s32 %s26, 1
      %s483 = sadd.s32 %s26, 2
      %p484 = scmp.lt.s32.totalorder %s25, 1
      %s485 = scalar_select %p484, %s25, 1
      %p486 = scmp.lt.s32.totalorder %s483, 17
      %s487 = scalar_select %p486, %s483, 17
      %s488 = smul.addr %s487, 3
      %s489 = smul.addr %s485, 54
      %s490 = sadd.s32 %s488, %s489
      %s491 = smul.addr %s490, 8
      %s492 = scalar_lea.vmem %s2, %s491
      %s493 = sadd.s32 %s26, 2
      %p494 = scmp.lt.s32.totalorder %s25, 1
      %s495 = scalar_select %p494, %s25, 1
      %p496 = scmp.lt.s32.totalorder %s26, 15
      %s497 = scalar_select %p496, %s26, 15
      %s498 = smul.addr %s497, 2
      %s499 = smul.addr %s495, 32
      %s500 = sadd.s32 %s498, %s499
      %s501 = smul.addr %s500, 8
      %s502 = scalar_lea.vmem %s9, %s501
      %p503 = scmp.lt.s32.totalorder %s25, 1
      %s504 = scalar_select %p503, %s25, 1
      %p505 = scmp.lt.s32.totalorder %s26, 15
      %s506 = scalar_select %p505, %s26, 15
      %s507 = smul.addr %s506, 2
      %s508 = smul.addr %s504, 32
      %s509 = sadd.s32 %s507, %s508
      %s510 = smul.addr %s509, 8
      %s511 = scalar_lea.vmem %s10, %s510
      %v512 = vld [vmem:[%s4] sm:$0x1]
      %v513 = vld [vmem:[%s5] sm:$0x1]
      %v514 = vmul.f32 %v512, %v513
      %v515 = vld [vmem:[%s6] sm:$0x1]
      %v516 = vld [vmem:[%s3] sm:$0x1]
      %v517 = vmul.f32 %v516, %v514
      %v518 = vsub.f32 %v515, %v517
      %v519 = vld [vmem:[%s471] sm:$0xff]
      %v520 = vld [vmem:[%s471 + $0x8] sm:$0xff]
      %v521 = vld [vmem:[%s471 + $0x10] sm:$0x3]
      %v523 = vlaneseq
      %v524 = vshrl.u32 %v523, 7
      %v525 = vsub.s32 0, %v524
      %v526 = vrot.slane %v514, %v525
      %v528 = vmul.f32 %v519, %v526
      %v529 = vmul.f32 %v520, %v526
      %v530 = vmul.f32 %v521, %v526
      %v532 = vlaneseq
      %v533 = vshrl.u32 %v532, 7
      %v534 = vsub.s32 0, %v533
      %v535 = vrot.slane %v518, %v534
      %v537 = vadd.f32 %v528, %v535
      %v538 = vadd.f32 %v529, %v535
      %v539 = vadd.f32 %v530, %v535
      %vm540 = vcmp.ge.f32.partialorder %v537, 0.0
      %vm541 = vcmp.ge.f32.partialorder %v538, 0.0
      %vm542 = vcmp.ge.f32.partialorder %v539, 0.0
      %v543 = vmul.f32 %v537, 0.01
      %v544 = vmul.f32 %v538, 0.01
      %v545 = vmul.f32 %v539, 0.01
      %v546 = vsel %vm540, %v537, %v543
      %v547 = vsel %vm541, %v538, %v544
      %v548 = vsel %vm542, %v539, %v545
      %p549 = scmp.ge.s32.totalorder %s26, 1
      %p550 = scmp.le.s32.totalorder %s26, 16
      %p551 = pnand %p549, %p550
      %p552 = pneg %p551
      %v553 = vlaneseq
      %v554 = vshrl.u32 %v553, 7
      %v555 = vadd.s32 %v554, 8
      %v556 = vadd.s32 %v554, 16
      %vm557 = vcmp.ge.s32.totalorder %v554, 1
      %vm558 = vcmp.ge.s32.totalorder %v555, 1
      %vm559 = vcmp.ge.s32.totalorder %v556, 1
      %vm560 = vcmp.le.s32.totalorder %v554, 16
      %vm561 = vcmp.le.s32.totalorder %v555, 16
      %vm562 = vcmp.le.s32.totalorder %v556, 16
      %vm563 = vmand %vm557, %vm560
      %vm564 = vmand %vm558, %vm561
      %vm565 = vmand %vm559, %vm562
      %s566 = scalar_select %p552, 1, 0
      %v567 = vstv %s566
      %vm568 = vcmp.eq.s32.totalorder %v567, 1
      %vm569 = vmand %vm568, %vm563
      %vm570 = vmand %vm568, %vm564
      %vm571 = vmand %vm568, %vm565
      %v572 = vsel %vm569, %v546, 0.0
      %v573 = vsel %vm570, %v547, 0.0
      %v574 = vsel %vm571, %v548, 0.0
      %v575 = vld [vmem:[%s481] sm:$0xff]
      %v576 = vld [vmem:[%s481 + $0x8] sm:$0xff]
      %v577 = vld [vmem:[%s481 + $0x10] sm:$0x3]
      %v578 = vmul.f32 %v575, %v526
      %v579 = vmul.f32 %v576, %v526
      %v580 = vmul.f32 %v577, %v526
      %v581 = vadd.f32 %v578, %v535
      %v582 = vadd.f32 %v579, %v535
      %v583 = vadd.f32 %v580, %v535
      %vm584 = vcmp.ge.f32.partialorder %v581, 0.0
      %vm585 = vcmp.ge.f32.partialorder %v582, 0.0
      %vm586 = vcmp.ge.f32.partialorder %v583, 0.0
      %v587 = vmul.f32 %v581, 0.01
      %v588 = vmul.f32 %v582, 0.01
      %v589 = vmul.f32 %v583, 0.01
      %v590 = vsel %vm584, %v581, %v587
      %v591 = vsel %vm585, %v582, %v588
      %v592 = vsel %vm586, %v583, %v589
      %s593 = sadd.s32 %s26, 1
      %p594 = scmp.ge.s32.totalorder %s593, 1
      %p595 = scmp.le.s32.totalorder %s593, 16
      %p596 = pnand %p594, %p595
      %p597 = pneg %p596
      %s598 = scalar_select %p597, 1, 0
      %v599 = vstv %s598
      %vm600 = vcmp.eq.s32.totalorder %v599, 1
      %vm601 = vmand %vm600, %vm563
      %vm602 = vmand %vm600, %vm564
      %vm603 = vmand %vm600, %vm565
      %v604 = vsel %vm601, %v590, 0.0
      %v605 = vsel %vm602, %v591, 0.0
      %v606 = vsel %vm603, %v592, 0.0
      %v607 = vld [vmem:[%s492] sm:$0xff]
      %v608 = vld [vmem:[%s492 + $0x8] sm:$0xff]
      %v609 = vld [vmem:[%s492 + $0x10] sm:$0x3]
      %v610 = vmul.f32 %v607, %v526
      %v611 = vmul.f32 %v608, %v526
      %v612 = vmul.f32 %v609, %v526
      %v613 = vadd.f32 %v610, %v535
      %v614 = vadd.f32 %v611, %v535
      %v615 = vadd.f32 %v612, %v535
      %vm616 = vcmp.ge.f32.partialorder %v613, 0.0
      %vm617 = vcmp.ge.f32.partialorder %v614, 0.0
      %vm618 = vcmp.ge.f32.partialorder %v615, 0.0
      %v619 = vmul.f32 %v613, 0.01
      %v620 = vmul.f32 %v614, 0.01
      %v621 = vmul.f32 %v615, 0.01
      %v622 = vsel %vm616, %v613, %v619
      %v623 = vsel %vm617, %v614, %v620
      %v624 = vsel %vm618, %v615, %v621
      %s625 = sadd.s32 %s26, 2
      %p626 = scmp.ge.s32.totalorder %s625, 1
      %p627 = scmp.le.s32.totalorder %s625, 16
      %p628 = pnand %p626, %p627
      %p629 = pneg %p628
      %s630 = scalar_select %p629, 1, 0
      %v631 = vstv %s630
      %vm632 = vcmp.eq.s32.totalorder %v631, 1
      %vm633 = vmand %vm632, %vm563
      %vm634 = vmand %vm632, %vm564
      %vm635 = vmand %vm632, %vm565
      %v636 = vsel %vm633, %v622, 0.0
      %v637 = vsel %vm634, %v623, 0.0
      %v638 = vsel %vm635, %v624, 0.0
      %vm642 = vcmask 1046528
      %v643 = vrot.slane %v572, 1
      %v644 = vrot.slane %v573, 1
      %v645 = vsel %vm642, %v643, %v644
      %v646 = vrot.slane %v574, 1
      %v647 = vsel %vm642, %v644, %v646
      %vm650 = vcmask 1045504
      %v651 = vrot.slane %v572, 2
      %v652 = vrot.slane %v573, 2
      %v653 = vsel %vm650, %v651, %v652
      %v654 = vrot.slane %v574, 2
      %v655 = vsel %vm650, %v652, %v654
      %v661 = vrot.slane %v604, 1
      %v662 = vrot.slane %v605, 1
      %v663 = vsel %vm642, %v661, %v662
      %v664 = vrot.slane %v606, 1
      %v665 = vsel %vm642, %v662, %v664
      %v668 = vrot.slane %v604, 2
      %v669 = vrot.slane %v605, 2
      %v670 = vsel %vm650, %v668, %v669
      %v671 = vrot.slane %v606, 2
      %v672 = vsel %vm650, %v669, %v671
      %v678 = vrot.slane %v636, 1
      %v679 = vrot.slane %v637, 1
      %v680 = vsel %vm642, %v678, %v679
      %v681 = vrot.slane %v638, 1
      %v682 = vsel %vm642, %v679, %v681
      %v685 = vrot.slane %v636, 2
      %v686 = vrot.slane %v637, 2
      %v687 = vsel %vm650, %v685, %v686
      %v688 = vrot.slane %v638, 2
      %v689 = vsel %vm650, %v686, %v688
      %v692 = vld [vmem:[%s7] sm:$0xff]
      %v693 = vld [vmem:[%s7 + $0x8] sm:$0xff]
      %v694 = vld [vmem:[%s7 + $0x10] sm:$0xff]
      %v695 = vld [vmem:[%s7 + $0x18] sm:$0xff]
      %v696 = vld [vmem:[%s7 + $0x20] sm:$0xff]
      %v697 = vld [vmem:[%s7 + $0x28] sm:$0xff]
      %v698 = vld [vmem:[%s7 + $0x30] sm:$0xff]
      %v699 = vld [vmem:[%s7 + $0x38] sm:$0xff]
      %v700 = vld [vmem:[%s7 + $0x40] sm:$0xff]
      %v701 = vld [vmem:[%s7 + $0x48] sm:$0xff]
      %v702 = vld [vmem:[%s7 + $0x50] sm:$0xff]
      %v703 = vld [vmem:[%s7 + $0x58] sm:$0xff]
      %v704 = vld [vmem:[%s7 + $0x60] sm:$0xff]
      %v705 = vld [vmem:[%s7 + $0x68] sm:$0xff]
      %v706 = vld [vmem:[%s7 + $0x70] sm:$0xff]
      %v707 = vld [vmem:[%s7 + $0x78] sm:$0xff]
      %v708 = vld [vmem:[%s7 + $0x80] sm:$0xff]
      %v709 = vld [vmem:[%s7 + $0x88] sm:$0xff]
      %v710 = vld [vmem:[%s7 + $0x90] sm:$0xff]
      %v711 = vld [vmem:[%s7 + $0x98] sm:$0xff]
      %v712 = vld [vmem:[%s7 + $0xa0] sm:$0xff]
      %v713 = vld [vmem:[%s7 + $0xa8] sm:$0xff]
      %v714 = vld [vmem:[%s7 + $0xb0] sm:$0xff]
      %v715 = vld [vmem:[%s7 + $0xb8] sm:$0xff]
      %v716 = vld [vmem:[%s7 + $0xc0] sm:$0xff]
      %v717 = vld [vmem:[%s7 + $0xc8] sm:$0xff]
      %v718 = vld [vmem:[%s7 + $0xd0] sm:$0xff]
      %v719 = vld [vmem:[%s7 + $0xd8] sm:$0xff]
      %v720 = vld [vmem:[%s7 + $0xe0] sm:$0xff]
      %v721 = vld [vmem:[%s7 + $0xe8] sm:$0xff]
      %v722 = vld [vmem:[%s7 + $0xf0] sm:$0xff]
      %v723 = vld [vmem:[%s7 + $0xf8] sm:$0xff]
      %v724 = vld [vmem:[%s7 + $0x100] sm:$0xff]
      %v725 = vld [vmem:[%s7 + $0x108] sm:$0xff]
      %v726 = vld [vmem:[%s7 + $0x110] sm:$0xff]
      %v727 = vld [vmem:[%s7 + $0x118] sm:$0xff]
      %v728 = vld [vmem:[%s7 + $0x120] sm:$0xff]
      %v729 = vld [vmem:[%s7 + $0x128] sm:$0xff]
      %v730 = vld [vmem:[%s7 + $0x130] sm:$0xff]
      %v731 = vld [vmem:[%s7 + $0x138] sm:$0xff]
      %v732 = vld [vmem:[%s7 + $0x140] sm:$0xff]
      %v733 = vld [vmem:[%s7 + $0x148] sm:$0xff]
      %v734 = vld [vmem:[%s7 + $0x150] sm:$0xff]
      %v735 = vld [vmem:[%s7 + $0x158] sm:$0xff]
      %v736 = vld [vmem:[%s7 + $0x160] sm:$0xff]
      %v737 = vld [vmem:[%s7 + $0x168] sm:$0xff]
      %v738 = vld [vmem:[%s7 + $0x170] sm:$0xff]
      %v739 = vld [vmem:[%s7 + $0x178] sm:$0xff]
      %v740 = vld [vmem:[%s7 + $0x180] sm:$0xff]
      %v741 = vld [vmem:[%s7 + $0x188] sm:$0xff]
      %v742 = vld [vmem:[%s7 + $0x190] sm:$0xff]
      %v743 = vld [vmem:[%s7 + $0x198] sm:$0xff]
      %v744 = vld [vmem:[%s7 + $0x1a0] sm:$0xff]
      %v745 = vld [vmem:[%s7 + $0x1a8] sm:$0xff]
      %v746 = vld [vmem:[%s7 + $0x1b0] sm:$0xff]
      %v747 = vld [vmem:[%s7 + $0x1b8] sm:$0xff]
      %v748 = vld [vmem:[%s7 + $0x1c0] sm:$0xff]
      %v749 = vld [vmem:[%s7 + $0x1c8] sm:$0xff]
      %v750 = vld [vmem:[%s7 + $0x1d0] sm:$0xff]
      %v751 = vld [vmem:[%s7 + $0x1d8] sm:$0xff]
      %v752 = vld [vmem:[%s7 + $0x1e0] sm:$0xff]
      %v753 = vld [vmem:[%s7 + $0x1e8] sm:$0xff]
      %v754 = vld [vmem:[%s7 + $0x1f0] sm:$0xff]
      %v755 = vld [vmem:[%s7 + $0x1f8] sm:$0xff]
      %v756 = vld [vmem:[%s7 + $0x200] sm:$0xff]
      %v757 = vld [vmem:[%s7 + $0x208] sm:$0xff]
      %v758 = vld [vmem:[%s7 + $0x210] sm:$0xff]
      %v759 = vld [vmem:[%s7 + $0x218] sm:$0xff]
      %v760 = vld [vmem:[%s7 + $0x220] sm:$0xff]
      %v761 = vld [vmem:[%s7 + $0x228] sm:$0xff]
      %v762 = vld [vmem:[%s7 + $0x230] sm:$0xff]
      %v763 = vld [vmem:[%s7 + $0x238] sm:$0xff]
      %v764 = vld [vmem:[%s7 + $0x240] sm:$0xff]
      %v765 = vld [vmem:[%s7 + $0x248] sm:$0xff]
      %v766 = vld [vmem:[%s7 + $0x250] sm:$0xff]
      %v767 = vld [vmem:[%s7 + $0x258] sm:$0xff]
      %v768 = vld [vmem:[%s7 + $0x260] sm:$0xff]
      %v769 = vld [vmem:[%s7 + $0x268] sm:$0xff]
      %v770 = vld [vmem:[%s7 + $0x270] sm:$0xff]
      %v771 = vld [vmem:[%s7 + $0x278] sm:$0xff]
      %v772 = vld [vmem:[%s7 + $0x280] sm:$0xff]
      %v773 = vld [vmem:[%s7 + $0x288] sm:$0xff]
      %v774 = vld [vmem:[%s7 + $0x290] sm:$0xff]
      %v775 = vld [vmem:[%s7 + $0x298] sm:$0xff]
      %v776 = vld [vmem:[%s7 + $0x2a0] sm:$0xff]
      %v777 = vld [vmem:[%s7 + $0x2a8] sm:$0xff]
      %v778 = vld [vmem:[%s7 + $0x2b0] sm:$0xff]
      %v779 = vld [vmem:[%s7 + $0x2b8] sm:$0xff]
      %v780 = vld [vmem:[%s7 + $0x2c0] sm:$0xff]
      %v781 = vld [vmem:[%s7 + $0x2c8] sm:$0xff]
      %v782 = vld [vmem:[%s7 + $0x2d0] sm:$0xff]
      %v783 = vld [vmem:[%s7 + $0x2d8] sm:$0xff]
      %v784 = vld [vmem:[%s7 + $0x2e0] sm:$0xff]
      %v785 = vld [vmem:[%s7 + $0x2e8] sm:$0xff]
      %v786 = vld [vmem:[%s7 + $0x2f0] sm:$0xff]
      %v787 = vld [vmem:[%s7 + $0x2f8] sm:$0xff]
      %v788 = vld [vmem:[%s7 + $0x300] sm:$0xff]
      %v789 = vld [vmem:[%s7 + $0x308] sm:$0xff]
      %v790 = vld [vmem:[%s7 + $0x310] sm:$0xff]
      %v791 = vld [vmem:[%s7 + $0x318] sm:$0xff]
      %v792 = vld [vmem:[%s7 + $0x320] sm:$0xff]
      %v793 = vld [vmem:[%s7 + $0x328] sm:$0xff]
      %v794 = vld [vmem:[%s7 + $0x330] sm:$0xff]
      %v795 = vld [vmem:[%s7 + $0x338] sm:$0xff]
      %v796 = vld [vmem:[%s7 + $0x340] sm:$0xff]
      %v797 = vld [vmem:[%s7 + $0x348] sm:$0xff]
      %v798 = vld [vmem:[%s7 + $0x350] sm:$0xff]
      %v799 = vld [vmem:[%s7 + $0x358] sm:$0xff]
      %v800 = vld [vmem:[%s7 + $0x360] sm:$0xff]
      %v801 = vld [vmem:[%s7 + $0x368] sm:$0xff]
      %v802 = vld [vmem:[%s7 + $0x370] sm:$0xff]
      %v803 = vld [vmem:[%s7 + $0x378] sm:$0xff]
      %v804 = vld [vmem:[%s7 + $0x380] sm:$0xff]
      %v805 = vld [vmem:[%s7 + $0x388] sm:$0xff]
      %v806 = vld [vmem:[%s7 + $0x390] sm:$0xff]
      %v807 = vld [vmem:[%s7 + $0x398] sm:$0xff]
      %v808 = vld [vmem:[%s7 + $0x3a0] sm:$0xff]
      %v809 = vld [vmem:[%s7 + $0x3a8] sm:$0xff]
      %v810 = vld [vmem:[%s7 + $0x3b0] sm:$0xff]
      %v811 = vld [vmem:[%s7 + $0x3b8] sm:$0xff]
      %v812 = vld [vmem:[%s7 + $0x3c0] sm:$0xff]
      %v813 = vld [vmem:[%s7 + $0x3c8] sm:$0xff]
      %v814 = vld [vmem:[%s7 + $0x3d0] sm:$0xff]
      %v815 = vld [vmem:[%s7 + $0x3d8] sm:$0xff]
      %v816 = vld [vmem:[%s7 + $0x3e0] sm:$0xff]
      %v817 = vld [vmem:[%s7 + $0x3e8] sm:$0xff]
      %v818 = vld [vmem:[%s7 + $0x3f0] sm:$0xff]
      %v819 = vld [vmem:[%s7 + $0x3f8] sm:$0xff]
      %v820 = vld [vmem:[%s7 + $0x400] sm:$0xff]
      %v821 = vld [vmem:[%s7 + $0x408] sm:$0xff]
      %v822 = vld [vmem:[%s7 + $0x410] sm:$0xff]
      %v823 = vld [vmem:[%s7 + $0x418] sm:$0xff]
      %v824 = vld [vmem:[%s7 + $0x420] sm:$0xff]
      %v825 = vld [vmem:[%s7 + $0x428] sm:$0xff]
      %v826 = vld [vmem:[%s7 + $0x430] sm:$0xff]
      %v827 = vld [vmem:[%s7 + $0x438] sm:$0xff]
      %v828 = vld [vmem:[%s7 + $0x440] sm:$0xff]
      %v829 = vld [vmem:[%s7 + $0x448] sm:$0xff]
      %v830 = vld [vmem:[%s7 + $0x450] sm:$0xff]
      %v831 = vld [vmem:[%s7 + $0x458] sm:$0xff]
      %v832 = vld [vmem:[%s7 + $0x460] sm:$0xff]
      %v833 = vld [vmem:[%s7 + $0x468] sm:$0xff]
      %v834 = vld [vmem:[%s7 + $0x470] sm:$0xff]
      %v835 = vld [vmem:[%s7 + $0x478] sm:$0xff]
      %v836 = vld [vmem:[%s8] sm:$0x1]
      %v838 = vlaneseq
      %v839 = vshrl.u32 %v838, 7
      %v840 = vsub.s32 0, %v839
      %v841 = vrot.slane %v836, %v840
      %843 = vmatprep.subr.mxu0 0.0
      %844 = vmatpush1.msra.mxu0 %v692
      %845 = vmatprep.subr.mxu0 0.0
      %846 = vmatpush1.msra.mxu0 %v693
      %847 = vmatprep.subr.mxu0 0.0
      %848 = vmatpush1.msra.mxu0 %v694
      %849 = vmatprep.subr.mxu0 0.0
      %850 = vmatpush1.msra.mxu0 %v695
      %851 = vmatprep.subr.mxu0 0.0
      %852 = vmatpush1.msra.mxu0 %v696
      %853 = vmatprep.subr.mxu0 0.0
      %854 = vmatpush1.msra.mxu0 %v697
      %855 = vmatprep.subr.mxu0 0.0
      %856 = vmatpush1.msra.mxu0 %v698
      %857 = vmatprep.subr.mxu0 0.0
      %858 = vmatpush1.msra.mxu0 %v699
      %859 = vmatprep.subr.mxu0 0.0
      %860 = vmatpush1.msra.mxu0 %v700
      %861 = vmatprep.subr.mxu0 0.0
      %862 = vmatpush1.msra.mxu0 %v701
      %863 = vmatprep.subr.mxu0 0.0
      %864 = vmatpush1.msra.mxu0 %v702
      %865 = vmatprep.subr.mxu0 0.0
      %866 = vmatpush1.msra.mxu0 %v703
      %867 = vmatprep.subr.mxu0 0.0
      %868 = vmatpush1.msra.mxu0 %v704
      %869 = vmatprep.subr.mxu0 0.0
      %870 = vmatpush1.msra.mxu0 %v705
      %871 = vmatprep.subr.mxu0 0.0
      %872 = vmatpush1.msra.mxu0 %v706
      %873 = vmatprep.subr.mxu0 0.0
      %874 = vmatpush1.msra.mxu0 %v707
      %875 = vmatprep.subr.mxu0 0.0
      %876 = vmatpush1.msra.mxu0 %v708
      %877 = vmatprep.subr.mxu0 0.0
      %878 = vmatpush1.msra.mxu0 %v709
      %879 = vmatprep.subr.mxu0 0.0
      %880 = vmatpush1.msra.mxu0 %v710
      %881 = vmatprep.subr.mxu0 0.0
      %882 = vmatpush1.msra.mxu0 %v711
      %883 = vmatprep.subr.mxu0 0.0
      %884 = vmatpush1.msra.mxu0 %v712
      %885 = vmatprep.subr.mxu0 0.0
      %886 = vmatpush1.msra.mxu0 %v713
      %887 = vmatprep.subr.mxu0 0.0
      %888 = vmatpush1.msra.mxu0 %v714
      %889 = vmatprep.subr.mxu0 0.0
      %890 = vmatpush1.msra.mxu0 %v715
      %891 = vmatprep.subr.mxu0 0.0
      %892 = vmatpush1.msra.mxu0 %v716
      %893 = vmatprep.subr.mxu0 0.0
      %894 = vmatpush1.msra.mxu0 %v717
      %895 = vmatprep.subr.mxu0 0.0
      %896 = vmatpush1.msra.mxu0 %v718
      %897 = vmatprep.subr.mxu0 0.0
      %898 = vmatpush1.msra.mxu0 %v719
      %899 = vmatprep.subr.mxu0 0.0
      %900 = vmatpush1.msra.mxu0 %v720
      %901 = vmatprep.subr.mxu0 0.0
      %902 = vmatpush1.msra.mxu0 %v721
      %903 = vmatprep.subr.mxu0 0.0
      %904 = vmatpush1.msra.mxu0 %v722
      %905 = vmatprep.subr.mxu0 0.0
      %906 = vmatpush1.msra.mxu0 %v723
      %907 = vmatprep.mubr.f32.mxu0 %v645
      %908 = vmatmul.mubr.f32.gmra.mrb[0].mxu0 %v572
      %v909 = vpop.f32.mrb[0].mxu0
      %v910 = vadd.f32 %v841, %v909
      %v911 = vpop.f32.mrb[0].mxu0
      %912 = vmatprep.mubr.f32.mxu0 %v647
      %913 = vmatmul.mubr.f32.gmra.mrb[0].mxu0 %v573
      %v914 = vpop.f32.mrb[0].mxu0
      %v915 = vadd.f32 %v841, %v914
      %v916 = vpop.f32.mrb[0].mxu0
      %917 = vdwg.mxu0
      %918 = vmatprep.subr.mxu0 0.0
      %919 = vmatpush1.msra.mxu0 %v724
      %920 = vmatprep.subr.mxu0 0.0
      %921 = vmatpush1.msra.mxu0 %v725
      %922 = vmatprep.subr.mxu0 0.0
      %923 = vmatpush1.msra.mxu0 %v726
      %924 = vmatprep.subr.mxu0 0.0
      %925 = vmatpush1.msra.mxu0 %v727
      %926 = vmatprep.subr.mxu0 0.0
      %927 = vmatpush1.msra.mxu0 %v728
      %928 = vmatprep.subr.mxu0 0.0
      %929 = vmatpush1.msra.mxu0 %v729
      %930 = vmatprep.subr.mxu0 0.0
      %931 = vmatpush1.msra.mxu0 %v730
      %932 = vmatprep.subr.mxu0 0.0
      %933 = vmatpush1.msra.mxu0 %v731
      %934 = vmatprep.subr.mxu0 0.0
      %935 = vmatpush1.msra.mxu0 %v732
      %936 = vmatprep.subr.mxu0 0.0
      %937 = vmatpush1.msra.mxu0 %v733
      %938 = vmatprep.subr.mxu0 0.0
      %939 = vmatpush1.msra.mxu0 %v734
      %940 = vmatprep.subr.mxu0 0.0
      %941 = vmatpush1.msra.mxu0 %v735
      %942 = vmatprep.subr.mxu0 0.0
      %943 = vmatpush1.msra.mxu0 %v736
      %944 = vmatprep.subr.mxu0 0.0
      %945 = vmatpush1.msra.mxu0 %v737
      %946 = vmatprep.subr.mxu0 0.0
      %947 = vmatpush1.msra.mxu0 %v738
      %948 = vmatprep.subr.mxu0 0.0
      %949 = vmatpush1.msra.mxu0 %v739
      %950 = vmatprep.subr.mxu0 0.0
      %951 = vmatpush1.msra.mxu0 %v740
      %952 = vmatprep.subr.mxu0 0.0
      %953 = vmatpush1.msra.mxu0 %v741
      %954 = vmatprep.subr.mxu0 0.0
      %955 = vmatpush1.msra.mxu0 %v742
      %956 = vmatprep.subr.mxu0 0.0
      %957 = vmatpush1.msra.mxu0 %v743
      %958 = vmatprep.subr.mxu0 0.0
      %959 = vmatpush1.msra.mxu0 %v744
      %960 = vmatprep.subr.mxu0 0.0
      %961 = vmatpush1.msra.mxu0 %v745
      %962 = vmatprep.subr.mxu0 0.0
      %963 = vmatpush1.msra.mxu0 %v746
      %964 = vmatprep.subr.mxu0 0.0
      %965 = vmatpush1.msra.mxu0 %v747
      %966 = vmatprep.subr.mxu0 0.0
      %967 = vmatpush1.msra.mxu0 %v748
      %968 = vmatprep.subr.mxu0 0.0
      %969 = vmatpush1.msra.mxu0 %v749
      %970 = vmatprep.subr.mxu0 0.0
      %971 = vmatpush1.msra.mxu0 %v750
      %972 = vmatprep.subr.mxu0 0.0
      %973 = vmatpush1.msra.mxu0 %v751
      %974 = vmatprep.subr.mxu0 0.0
      %975 = vmatpush1.msra.mxu0 %v752
      %976 = vmatprep.subr.mxu0 0.0
      %977 = vmatpush1.msra.mxu0 %v753
      %978 = vmatprep.subr.mxu0 0.0
      %979 = vmatpush1.msra.mxu0 %v754
      %980 = vmatprep.subr.mxu0 0.0
      %981 = vmatpush1.msra.mxu0 %v755
      %982 = vmatprep.mubr.f32.mxu0 %v604
      %983 = vmatmul.mubr.f32.gmra.mrb[0].mxu0 %v653
      %v984 = vpop.f32.mrb[0].mxu0
      %v985 = vadd.f32 %v910, %v984
      %v986 = vpop.f32.mrb[0].mxu0
      %987 = vmatprep.mubr.f32.mxu0 %v605
      %988 = vmatmul.mubr.f32.gmra.mrb[0].mxu0 %v655
      %v989 = vpop.f32.mrb[0].mxu0
      %v990 = vadd.f32 %v915, %v989
      %v991 = vpop.f32.mrb[0].mxu0
      %992 = vdwg.mxu0
      %993 = vmatprep.subr.mxu0 0.0
      %994 = vmatpush1.msra.mxu0 %v756
      %995 = vmatprep.subr.mxu0 0.0
      %996 = vmatpush1.msra.mxu0 %v757
      %997 = vmatprep.subr.mxu0 0.0
      %998 = vmatpush1.msra.mxu0 %v758
      %999 = vmatprep.subr.mxu0 0.0
      %1000 = vmatpush1.msra.mxu0 %v759
      %1001 = vmatprep.subr.mxu0 0.0
      %1002 = vmatpush1.msra.mxu0 %v760
      %1003 = vmatprep.subr.mxu0 0.0
      %1004 = vmatpush1.msra.mxu0 %v761
      %1005 = vmatprep.subr.mxu0 0.0
      %1006 = vmatpush1.msra.mxu0 %v762
      %1007 = vmatprep.subr.mxu0 0.0
      %1008 = vmatpush1.msra.mxu0 %v763
      %1009 = vmatprep.subr.mxu0 0.0
      %1010 = vmatpush1.msra.mxu0 %v764
      %1011 = vmatprep.subr.mxu0 0.0
      %1012 = vmatpush1.msra.mxu0 %v765
      %1013 = vmatprep.subr.mxu0 0.0
      %1014 = vmatpush1.msra.mxu0 %v766
      %1015 = vmatprep.subr.mxu0 0.0
      %1016 = vmatpush1.msra.mxu0 %v767
      %1017 = vmatprep.subr.mxu0 0.0
      %1018 = vmatpush1.msra.mxu0 %v768
      %1019 = vmatprep.subr.mxu0 0.0
      %1020 = vmatpush1.msra.mxu0 %v769
      %1021 = vmatprep.subr.mxu0 0.0
      %1022 = vmatpush1.msra.mxu0 %v770
      %1023 = vmatprep.subr.mxu0 0.0
      %1024 = vmatpush1.msra.mxu0 %v771
      %1025 = vmatprep.subr.mxu0 0.0
      %1026 = vmatpush1.msra.mxu0 %v772
      %1027 = vmatprep.subr.mxu0 0.0
      %1028 = vmatpush1.msra.mxu0 %v773
      %1029 = vmatprep.subr.mxu0 0.0
      %1030 = vmatpush1.msra.mxu0 %v774
      %1031 = vmatprep.subr.mxu0 0.0
      %1032 = vmatpush1.msra.mxu0 %v775
      %1033 = vmatprep.subr.mxu0 0.0
      %1034 = vmatpush1.msra.mxu0 %v776
      %1035 = vmatprep.subr.mxu0 0.0
      %1036 = vmatpush1.msra.mxu0 %v777
      %1037 = vmatprep.subr.mxu0 0.0
      %1038 = vmatpush1.msra.mxu0 %v778
      %1039 = vmatprep.subr.mxu0 0.0
      %1040 = vmatpush1.msra.mxu0 %v779
      %1041 = vmatprep.subr.mxu0 0.0
      %1042 = vmatpush1.msra.mxu0 %v780
      %1043 = vmatprep.subr.mxu0 0.0
      %1044 = vmatpush1.msra.mxu0 %v781
      %1045 = vmatprep.subr.mxu0 0.0
      %1046 = vmatpush1.msra.mxu0 %v782
      %1047 = vmatprep.subr.mxu0 0.0
      %1048 = vmatpush1.msra.mxu0 %v783
      %1049 = vmatprep.subr.mxu0 0.0
      %1050 = vmatpush1.msra.mxu0 %v784
      %1051 = vmatprep.subr.mxu0 0.0
      %1052 = vmatpush1.msra.mxu0 %v785
      %1053 = vmatprep.subr.mxu0 0.0
      %1054 = vmatpush1.msra.mxu0 %v786
      %1055 = vmatprep.subr.mxu0 0.0
      %1056 = vmatpush1.msra.mxu0 %v787
      %1057 = vmatprep.mubr.f32.mxu0 %v670
      %1058 = vmatmul.mubr.f32.gmra.mrb[0].mxu0 %v663
      %v1059 = vpop.f32.mrb[0].mxu0
      %v1060 = vadd.f32 %v985, %v1059
      %v1061 = vpop.f32.mrb[0].mxu0
      %1062 = vmatprep.mubr.f32.mxu0 %v672
      %1063 = vmatmul.mubr.f32.gmra.mrb[0].mxu0 %v665
      %v1064 = vpop.f32.mrb[0].mxu0
      %v1065 = vadd.f32 %v990, %v1064
      %v1066 = vpop.f32.mrb[0].mxu0
      %1067 = vdwg.mxu0
      %1068 = vmatprep.subr.mxu0 0.0
      %1069 = vmatpush1.msra.mxu0 %v788
      %1070 = vmatprep.subr.mxu0 0.0
      %1071 = vmatpush1.msra.mxu0 %v789
      %1072 = vmatprep.subr.mxu0 0.0
      %1073 = vmatpush1.msra.mxu0 %v790
      %1074 = vmatprep.subr.mxu0 0.0
      %1075 = vmatpush1.msra.mxu0 %v791
      %1076 = vmatprep.subr.mxu0 0.0
      %1077 = vmatpush1.msra.mxu0 %v792
      %1078 = vmatprep.subr.mxu0 0.0
      %1079 = vmatpush1.msra.mxu0 %v793
      %1080 = vmatprep.subr.mxu0 0.0
      %1081 = vmatpush1.msra.mxu0 %v794
      %1082 = vmatprep.subr.mxu0 0.0
      %1083 = vmatpush1.msra.mxu0 %v795
      %1084 = vmatprep.subr.mxu0 0.0
      %1085 = vmatpush1.msra.mxu0 %v796
      %1086 = vmatprep.subr.mxu0 0.0
      %1087 = vmatpush1.msra.mxu0 %v797
      %1088 = vmatprep.subr.mxu0 0.0
      %1089 = vmatpush1.msra.mxu0 %v798
      %1090 = vmatprep.subr.mxu0 0.0
      %1091 = vmatpush1.msra.mxu0 %v799
      %1092 = vmatprep.subr.mxu0 0.0
      %1093 = vmatpush1.msra.mxu0 %v800
      %1094 = vmatprep.subr.mxu0 0.0
      %1095 = vmatpush1.msra.mxu0 %v801
      %1096 = vmatprep.subr.mxu0 0.0
      %1097 = vmatpush1.msra.mxu0 %v802
      %1098 = vmatprep.subr.mxu0 0.0
      %1099 = vmatpush1.msra.mxu0 %v803
      %1100 = vmatprep.subr.mxu0 0.0
      %1101 = vmatpush1.msra.mxu0 %v804
      %1102 = vmatprep.subr.mxu0 0.0
      %1103 = vmatpush1.msra.mxu0 %v805
      %1104 = vmatprep.subr.mxu0 0.0
      %1105 = vmatpush1.msra.mxu0 %v806
      %1106 = vmatprep.subr.mxu0 0.0
      %1107 = vmatpush1.msra.mxu0 %v807
      %1108 = vmatprep.subr.mxu0 0.0
      %1109 = vmatpush1.msra.mxu0 %v808
      %1110 = vmatprep.subr.mxu0 0.0
      %1111 = vmatpush1.msra.mxu0 %v809
      %1112 = vmatprep.subr.mxu0 0.0
      %1113 = vmatpush1.msra.mxu0 %v810
      %1114 = vmatprep.subr.mxu0 0.0
      %1115 = vmatpush1.msra.mxu0 %v811
      %1116 = vmatprep.subr.mxu0 0.0
      %1117 = vmatpush1.msra.mxu0 %v812
      %1118 = vmatprep.subr.mxu0 0.0
      %1119 = vmatpush1.msra.mxu0 %v813
      %1120 = vmatprep.subr.mxu0 0.0
      %1121 = vmatpush1.msra.mxu0 %v814
      %1122 = vmatprep.subr.mxu0 0.0
      %1123 = vmatpush1.msra.mxu0 %v815
      %1124 = vmatprep.subr.mxu0 0.0
      %1125 = vmatpush1.msra.mxu0 %v816
      %1126 = vmatprep.subr.mxu0 0.0
      %1127 = vmatpush1.msra.mxu0 %v817
      %1128 = vmatprep.subr.mxu0 0.0
      %1129 = vmatpush1.msra.mxu0 %v818
      %1130 = vmatprep.subr.mxu0 0.0
      %1131 = vmatpush1.msra.mxu0 %v819
      %1132 = vmatprep.mubr.f32.mxu0 %v680
      %1133 = vmatmul.mubr.f32.gmra.mrb[0].mxu0 %v636
      %v1134 = vpop.f32.mrb[0].mxu0
      %v1135 = vadd.f32 %v1060, %v1134
      %v1136 = vpop.f32.mrb[0].mxu0
      %1137 = vmatprep.mubr.f32.mxu0 %v682
      %1138 = vmatmul.mubr.f32.gmra.mrb[0].mxu0 %v637
      %v1139 = vpop.f32.mrb[0].mxu0
      %v1140 = vadd.f32 %v1065, %v1139
      %v1141 = vpop.f32.mrb[0].mxu0
      %1142 = vdwg.mxu0
      %1143 = vmatprep.subr.mxu0 0.0
      %1144 = vmatpush1.msra.mxu0 %v820
      %1145 = vmatprep.subr.mxu0 0.0
      %1146 = vmatpush1.msra.mxu0 %v821
      %1147 = vmatprep.subr.mxu0 0.0
      %1148 = vmatpush1.msra.mxu0 %v822
      %1149 = vmatprep.subr.mxu0 0.0
      %1150 = vmatpush1.msra.mxu0 %v823
      %1151 = vmatprep.subr.mxu0 0.0
      %1152 = vmatpush1.msra.mxu0 %v824
      %1153 = vmatprep.subr.mxu0 0.0
      %1154 = vmatpush1.msra.mxu0 %v825
      %1155 = vmatprep.subr.mxu0 0.0
      %1156 = vmatpush1.msra.mxu0 %v826
      %1157 = vmatprep.subr.mxu0 0.0
      %1158 = vmatpush1.msra.mxu0 %v827
      %1159 = vmatprep.subr.mxu0 0.0
      %1160 = vmatpush1.msra.mxu0 %v828
      %1161 = vmatprep.subr.mxu0 0.0
      %1162 = vmatpush1.msra.mxu0 %v829
      %1163 = vmatprep.subr.mxu0 0.0
      %1164 = vmatpush1.msra.mxu0 %v830
      %1165 = vmatprep.subr.mxu0 0.0
      %1166 = vmatpush1.msra.mxu0 %v831
      %1167 = vmatprep.subr.mxu0 0.0
      %1168 = vmatpush1.msra.mxu0 %v832
      %1169 = vmatprep.subr.mxu0 0.0
      %1170 = vmatpush1.msra.mxu0 %v833
      %1171 = vmatprep.subr.mxu0 0.0
      %1172 = vmatpush1.msra.mxu0 %v834
      %1173 = vmatprep.subr.mxu0 0.0
      %1174 = vmatpush1.msra.mxu0 %v835
      %1175 = vmatprep.subr.mxu0 0.0
      %1176 = vmatpush1.msra.mxu0 0.0
      %1177 = vmatprep.subr.mxu0 0.0
      %1178 = vmatpush1.msra.mxu0 0.0
      %1179 = vmatprep.subr.mxu0 0.0
      %1180 = vmatpush1.msra.mxu0 0.0
      %1181 = vmatprep.subr.mxu0 0.0
      %1182 = vmatpush1.msra.mxu0 0.0
      %1183 = vmatprep.subr.mxu0 0.0
      %1184 = vmatpush1.msra.mxu0 0.0
      %1185 = vmatprep.subr.mxu0 0.0
      %1186 = vmatpush1.msra.mxu0 0.0
      %1187 = vmatprep.subr.mxu0 0.0
      %1188 = vmatpush1.msra.mxu0 0.0
      %1189 = vmatprep.subr.mxu0 0.0
      %1190 = vmatpush1.msra.mxu0 0.0
      %1191 = vmatprep.subr.mxu0 0.0
      %1192 = vmatpush1.msra.mxu0 0.0
      %1193 = vmatprep.subr.mxu0 0.0
      %1194 = vmatpush1.msra.mxu0 0.0
      %1195 = vmatprep.subr.mxu0 0.0
      %1196 = vmatpush1.msra.mxu0 0.0
      %1197 = vmatprep.subr.mxu0 0.0
      %1198 = vmatpush1.msra.mxu0 0.0
      %1199 = vmatprep.subr.mxu0 0.0
      %1200 = vmatpush1.msra.mxu0 0.0
      %1201 = vmatprep.subr.mxu0 0.0
      %1202 = vmatpush1.msra.mxu0 0.0
      %1203 = vmatprep.subr.mxu0 0.0
      %1204 = vmatpush1.msra.mxu0 0.0
      %1205 = vmatprep.subr.mxu0 0.0
      %1206 = vmatpush1.msra.mxu0 0.0
      %1207 = vmatprep.mubr.f32.mxu0 0.0
      %1208 = vmatmul.mubr.f32.gmra.mrb[0].mxu0 %v687
      %v1209 = vpop.f32.mrb[0].mxu0
      %v1210 = vadd.f32 %v1135, %v1209
      %v1211 = vpop.f32.mrb[0].mxu0
      %1212 = vmatprep.mubr.f32.mxu0 0.0
      %1213 = vmatmul.mubr.f32.gmra.mrb[0].mxu0 %v689
      %v1214 = vpop.f32.mrb[0].mxu0
      %v1215 = vadd.f32 %v1140, %v1214
      %v1216 = vpop.f32.mrb[0].mxu0
      %1217 = vdwg.mxu0
      %v1218 = vld [vmem:[%s502] sm:$0xff]
      %v1219 = vld [vmem:[%s502 + $0x8] sm:$0xff]
      %v1220 = vadd.f32 %v1210, %v1218
      %v1221 = vadd.f32 %v1215, %v1219
      %1222 = vst [vmem:[%s511] sm:$0xff] %v1220
      %1223 = vst [vmem:[%s511 + $0x8] sm:$0xff] %v1221
      %p1224 = scmp.lt.s32.totalorder %s25, 1
      %s1225 = scalar_select %p1224, %s25, 1
      %p1226 = scmp.lt.s32.totalorder %s26, 15
      %s1227 = scalar_select %p1226, %s26, 15
      %s1228 = smul.addr %s1227, 2
      %s1229 = smul.addr %s1225, 32
      %s1230 = sadd.s32 %s1228, %s1229
      %s1231 = smul.addr %s1230, 8
      %s1232 = scalar_lea.vmem %s10, %s1231
      // Predicated region
      $region61: #{preact_bn_resblock4_forward.15} parent=59 // pred_check
        %p1233 = pneg %p295
      $region62: #{preact_bn_resblock4_forward.15} parent=59 // pred_check_branch
        %1235 = sbr.rel (%p1233) target = $region64
      $region63: #{preact_bn_resblock4_forward.15} parent=59 // pred_region
        _
      $region64: #{preact_bn_resblock4_forward.15} parent=59 // pred_fallthru
        _
    $region60: #{preact_bn_resblock4_forward.15} parent=5 // pred_fallthru
      _
    %p1236 = scmp.le.s32.totalorder 2, %s16
    // Predicated region
    $region65: #{preact_bn_resblock4_forward.15} parent=5 // pred_check
      %p1237 = pneg %p1236
    $region66: #{preact_bn_resblock4_forward.15} parent=5 // pred_check_branch
      %1239 = sbr.rel (%p1237) target = $region68
    $region67: #{preact_bn_resblock4_forward.15} parent=5 // pred_region
      %s1240 = ssub.s32 %s16, 2
      // Predicated region
      $region69: #{preact_bn_resblock4_forward.15} parent=67 // pred_check
        %p1241 = pneg %p301
      $region70: #{preact_bn_resblock4_forward.15} parent=67 // pred_check_branch
        %1243 = sbr.rel (%p1241) target = $region72
      $region71: #{preact_bn_resblock4_forward.15} parent=67 // pred_region
        %p1244 = scmp.lt.s32.totalorder %s27, 1
        %s1245 = scalar_select %p1244, %s27, 1
        %p1246 = scmp.lt.s32.totalorder %s28, 15
        %s1247 = scalar_select %p1246, %s28, 15
        %s1248 = smul.addr %s1247, 2
        %s1249 = smul.addr %s1245, 32
        %s1250 = sadd.s32 %s1248, %s1249
        %s1251 = smul.addr %s1250, 8
        %s1252 = scalar_lea.vmem %s10, %s1251
      $region72: #{preact_bn_resblock4_forward.15} parent=67 // pred_fallthru
        _
    $region68: #{preact_bn_resblock4_forward.15} parent=5 // pred_fallthru
      _
  $region6: #{preact_bn_resblock4_forward.15} parent=0 // loop_footer
    %s20 = sadd.s32 1, %s16
  $region7: #{preact_bn_resblock4_forward.15} parent=0 // loop_footer_branch
    %15 = sbr.rel target = $region3
  $region8: #{preact_bn_resblock4_forward.15} parent=0 // loop_exit
    _

</llo_original>
